<compile_context>
chip_gen: v7x
topology: tpu7x:2x2x1
jax: 0.10.0
libtpu: 0.0.40
codegen_flags: <defaults>
</compile_context>

<pallas_src>
import functools

import jax
import jax.numpy as jnp
from jax.experimental import pallas as pl
from jax.experimental.pallas import tpu as pltpu

BN_EPS = 1e-5
LRELU_SLOPE = 0.2
LANE = 128


def _round_up(x, m):
    return ((x + m - 1) // m) * m


@functools.lru_cache(maxsize=None)
def _vmem_limit_bytes():
    """Per-generation scoped-VMEM limit: ~3/4 of physical VMEM, capped at 100 MiB.
    v5e/v6e (128 MiB physical) -> 96 MiB; v7x (64 MiB physical) -> 48 MiB."""
    cap = 64 * 1024 * 1024
    try:
        cap = int(getattr(pltpu.get_tpu_info(), "vmem_capacity_bytes", cap))
    except Exception:
        pass
    return int(min(cap * 3 // 4, 100 * 1024 * 1024))


def _choose_tile_m(m, row_bytes, resident_bytes):
    """Largest M tile whose double-buffered working set fits the per-generation
    VMEM budget.  Tiles are multiples of 256 (native MXU cadence on v6e/v7x)
    when M allows, otherwise multiples of 16 (bf16 sublane pack).  When there is
    enough work the tile is halved so grid_m >= 2 and both v7x TensorCores get
    work through the "parallel" grid axis."""
    budget = int(_vmem_limit_bytes() * 0.8)
    gran = 256 if m >= 256 else 16
    tm = _round_up(m, gran)
    while tm > gran and resident_bytes + 2 * tm * row_bytes > budget:
        tm = max(gran, _round_up(tm // 2, gran))
    if m >= 512 and _round_up(m, tm) // tm < 2:
        tm = _round_up((m + 1) // 2, gran)
    return tm


def _cparams():
    return pltpu.CompilerParams(dimension_semantics=("parallel",),
                                vmem_limit_bytes=_vmem_limit_bytes())


# ----------------------------------------------------------------------------
# Pallas kernels
# ----------------------------------------------------------------------------
def _conv_bias_act_kernel(p_ref, w_ref, b_ref, o_ref, *, cout, co_pad, use_lrelu):
    """One M tile of: out = leaky_relu(patches @ w + bias), stored narrow (real Co)."""
    y = jnp.dot(p_ref[...], w_ref[...], preferred_element_type=jnp.float32)
    if cout != co_pad:
        y = y[:, :cout]
    y = y + b_ref[...]
    if use_lrelu:
        y = jnp.where(y >= 0, y, LRELU_SLOPE * y)
    o_ref[...] = y.astype(o_ref.dtype)


def _conv_stats_kernel(p_ref, w_ref, y_ref, stats_ref, *, cout, co_pad):
    """One M tile of: y = patches @ w (bias-free BatchNorm conv).
    Emits this tile's per-channel partial sum / sum-of-squares in f32 (computed
    before the narrow bf16 store).  Zero-padded patch rows contribute exactly
    zero, so no row masking is needed."""
    y = jnp.dot(p_ref[...], w_ref[...], preferred_element_type=jnp.float32)
    if cout != co_pad:
        y = y[:, :cout]
    y_ref[...] = y.astype(y_ref.dtype)
    s1 = jnp.sum(y, axis=0, keepdims=True)        # (1, Co)
    s2 = jnp.sum(y * y, axis=0, keepdims=True)    # (1, Co)
    stats_ref[...] = jnp.concatenate([s1, s2], axis=0)[None, :, :]


def _bn_act_kernel(y_ref, scale_ref, shift_ref, o_ref, *, use_lrelu):
    """One M tile of: out = leaky_relu(y * scale + shift) (folded BatchNorm).
    bf16 loads/stores, f32 elementwise math (v5e-friendly)."""
    y = y_ref[...].astype(jnp.float32)
    y = y * scale_ref[...] + shift_ref[...]
    if use_lrelu:
        y = jnp.where(y >= 0, y, LRELU_SLOPE * y)
    o_ref[...] = y.astype(o_ref.dtype)


# ----------------------------------------------------------------------------
# Layer wrappers (tiling, padding, pallas_call plumbing)
# ----------------------------------------------------------------------------
def _pad_rows(a, m_pad):
    m = a.shape[0]
    return a if m_pad == m else jnp.pad(a, ((0, m_pad - m), (0, 0)))


def conv_bias_act(patches, w2d, bias, *, cout, use_lrelu, out_dtype):
    """patches:(M,K) bf16, w2d:(K,Co_pad) bf16, bias:(Co,) -> (M, Co) out_dtype."""
    m, k = patches.shape
    co_pad = w2d.shape[1]
    out_bytes = jnp.dtype(out_dtype).itemsize
    row_bytes = k * 2 + cout * out_bytes
    resident = 2 * (k * co_pad * 2 + cout * 4)
    tm = _choose_tile_m(m, row_bytes, resident)
    m_pad = _round_up(m, tm)
    grid_m = m_pad // tm

    p = _pad_rows(patches, m_pad)
    b = bias.reshape(1, cout).astype(jnp.float32)

    kernel = functools.partial(_conv_bias_act_kernel, cout=cout, co_pad=co_pad,
                               use_lrelu=use_lrelu)
    out = pl.pallas_call(
        kernel,
        out_shape=jax.ShapeDtypeStruct((m_pad, cout), out_dtype),
        grid=(grid_m,),
        in_specs=[
            pl.BlockSpec((tm, k), lambda i: (i, 0)),
            pl.BlockSpec((k, co_pad), lambda i: (0, 0)),
            pl.BlockSpec((1, cout), lambda i: (0, 0)),
        ],
        out_specs=pl.BlockSpec((tm, cout), lambda i: (i, 0)),
        compiler_params=_cparams(),
        cost_estimate=pl.CostEstimate(
            flops=2 * m_pad * k * co_pad + 2 * m_pad * cout,
            transcendentals=0,
            bytes_accessed=m_pad * k * 2 + k * co_pad * 2
            + cout * 4 + m_pad * cout * out_bytes),
    )(p, w2d, b)
    return out[:m]


def conv_bn_act(patches, w2d, gamma, beta, *, cout, use_lrelu, out_dtype):
    """Bias-free conv + BatchNorm2d (training batch stats) + LeakyReLU as two
    tiled Pallas passes.  patches:(M,K) bf16, w2d:(K,Co_pad) bf16 -> (M, Co)."""
    m, k = patches.shape
    co_pad = w2d.shape[1]
    out_bytes = jnp.dtype(out_dtype).itemsize
    row_bytes = k * 2 + cout * 2                       # pass-1 dominates
    resident = 2 * (k * co_pad * 2)
    tm = _choose_tile_m(m, row_bytes, resident)
    m_pad = _round_up(m, tm)
    grid_m = m_pad // tm

    p = _pad_rows(patches, m_pad)

    # Pass 1: GEMM + per-tile partial sums (each tile writes its own partials,
    # so the M axis stays fully parallel across cores).  y is stored bf16, narrow.
    kernel1 = functools.partial(_conv_stats_kernel, cout=cout, co_pad=co_pad)
    y, stats = pl.pallas_call(
        kernel1,
        out_shape=(jax.ShapeDtypeStruct((m_pad, cout), jnp.bfloat16),
                   jax.ShapeDtypeStruct((grid_m, 2, cout), jnp.float32)),
        grid=(grid_m,),
        in_specs=[
            pl.BlockSpec((tm, k), lambda i: (i, 0)),
            pl.BlockSpec((k, co_pad), lambda i: (0, 0)),
        ],
        out_specs=(
            pl.BlockSpec((tm, cout), lambda i: (i, 0)),
            pl.BlockSpec((1, 2, cout), lambda i: (i, 0, 0)),
        ),
        compiler_params=_cparams(),
        cost_estimate=pl.CostEstimate(
            flops=2 * m_pad * k * co_pad + 3 * m_pad * cout,
            transcendentals=0,
            bytes_accessed=m_pad * k * 2 + k * co_pad * 2
            + m_pad * cout * 2 + grid_m * 2 * cout * 4),
    )(p, w2d)

    # Tiny (Co,) per-channel reduction + affine fold: done in XLA.
    # var = E[x^2] - E[x]^2 from f32 accumulators, clamped >= 0 for stability.
    # TODO(synk): a shifted / Welford accumulation would be safer for huge M.
    sums = jnp.sum(stats, axis=0)                      # (2, Co)
    mu = sums[0] / m
    var = jnp.maximum(sums[1] / m - mu * mu, 0.0)      # biased (training-mode) variance
    scale = (gamma * jax.lax.rsqrt(var + BN_EPS)).astype(jnp.float32)
    shift = (beta - mu * scale).astype(jnp.float32)

    # Pass 2: normalize + LeakyReLU; bf16 in, out_dtype out, f32 math.
    kernel2 = functools.partial(_bn_act_kernel, use_lrelu=use_lrelu)
    out = pl.pallas_call(
        kernel2,
        out_shape=jax.ShapeDtypeStruct((m_pad, cout), out_dtype),
        grid=(grid_m,),
        in_specs=[
            pl.BlockSpec((tm, cout), lambda i: (i, 0)),
            pl.BlockSpec((1, cout), lambda i: (0, 0)),
            pl.BlockSpec((1, cout), lambda i: (0, 0)),
        ],
        out_specs=pl.BlockSpec((tm, cout), lambda i: (i, 0)),
        compiler_params=_cparams(),
        cost_estimate=pl.CostEstimate(
            flops=3 * m_pad * cout,
            transcendentals=0,
            bytes_accessed=m_pad * cout * 2 + 2 * cout * 4
            + m_pad * cout * out_bytes),
    )(y, scale.reshape(1, cout), shift.reshape(1, cout))
    return out[:m]


# ----------------------------------------------------------------------------
# Glue: im2col (pure layout, XLA, on bf16 activations), parameters, forward
# ----------------------------------------------------------------------------
def im2col(x_nhwc, kh, kw, stride, pad):
    """(N,H,W,C) -> patches (N*OH*OW, KH*KW*C), kernel-position-major, channel-minor."""
    x = jnp.pad(x_nhwc, ((0, 0), (pad, pad), (pad, pad), (0, 0)))
    n, hp, wp, c = x.shape
    oh = (hp - kh) // stride + 1
    ow = (wp - kw) // stride + 1
    cols = []
    for i in range(kh):
        for j in range(kw):
            cols.append(x[:, i:i + stride * oh:stride, j:j + stride * ow:stride, :])
    patches = jnp.stack(cols, axis=3)                 # (N, OH, OW, KH*KW, C)
    return patches.reshape(n * oh * ow, kh * kw * c), oh, ow


def torch_weight_to_gemm(w_oihw, co_pad):
    """(Cout,Cin,KH,KW) -> (KH*KW*Cin, Co_pad) bf16, matching im2col column order;
    output channels zero-padded to a lane-dense multiple of 128 for the MXU."""
    cout, cin, kh, kw = w_oihw.shape
    w = jnp.transpose(w_oihw, (2, 3, 1, 0)).reshape(kh * kw * cin, cout)
    if co_pad != cout:
        w = jnp.pad(w, ((0, 0), (0, co_pad - cout)))
    return w.astype(jnp.bfloat16)


def make_discriminator_params(key, input_nc, ndf=8, n_layers=3):
    """Deterministic synthetic parameters mirroring the PyTorch __init__ shapes."""
    kw = 4
    layers = []
    # (cin, cout, stride, has_bias, has_bn, has_lrelu)
    cfg = [(input_nc, ndf, 2, True, False, True)]
    nf_mult = 1
    for n in range(1, n_layers):
        nf_prev, nf_mult = nf_mult, min(2 ** n, 8)
        cfg.append((ndf * nf_prev, ndf * nf_mult, 2, False, True, True))
    nf_prev, nf_mult = nf_mult, min(2 ** n_layers, 8)
    cfg.append((ndf * nf_prev, ndf * nf_mult, 1, False, True, True))
    cfg.append((ndf * nf_mult, 1, 1, True, False, False))

    for (cin, cout, stride, has_bias, has_bn, has_lrelu) in cfg:
        key, wk, bk = jax.random.split(key, 3)
        w = 0.05 * jax.random.normal(wk, (cout, cin, kw, kw), dtype=jnp.float32)
        b = (0.01 * jax.random.normal(bk, (cout,), dtype=jnp.float32)
             if has_bias else None)
        gamma = jnp.ones((cout,), jnp.float32) if has_bn else None
        beta = jnp.zeros((cout,), jnp.float32) if has_bn else None
        layers.append(dict(w=w, b=b, gamma=gamma, beta=beta, stride=stride,
                           use_bn=has_bn, use_lrelu=has_lrelu))
    return layers


def discriminator_forward(x_nchw, layers):
    """Full PatchGAN forward. Input NCHW (PyTorch convention), output NCHW f32."""
    # Cast once to bf16 BEFORE any im2col so the expanded patch matrices and all
    # intermediate activations live in HBM as bf16 (f32 MXU accumulation inside).
    x = jnp.transpose(x_nchw, (0, 2, 3, 1)).astype(jnp.bfloat16)   # -> NHWC
    n = x.shape[0]
    kh = kw = 4
    pad = 1
    num = len(layers)
    for li, lyr in enumerate(layers):
        cout = lyr["w"].shape[0]
        co_pad = _round_up(cout, LANE)
        patches, oh, ow = im2col(x, kh, kw, lyr["stride"], pad)
        w2d = torch_weight_to_gemm(lyr["w"], co_pad)
        out_dtype = jnp.float32 if li == num - 1 else jnp.bfloat16
        if lyr["use_bn"]:
            out2d = conv_bn_act(patches, w2d, lyr["gamma"], lyr["beta"],
                                cout=cout, use_lrelu=lyr["use_lrelu"],
                                out_dtype=out_dtype)
        else:
            out2d = conv_bias_act(patches, w2d, lyr["b"], cout=cout,
                                  use_lrelu=lyr["use_lrelu"], out_dtype=out_dtype)
        x = out2d.reshape(n, oh, ow, cout)             # NHWC for the next layer
    return jnp.transpose(x, (0, 3, 1, 2)).astype(jnp.float32)   # -> NCHW (N,1,OH,OW)


# ----------------------------------------------------------------------------
if __name__ == "__main__":
    key = jax.random.PRNGKey(0)
    pkey, xkey = jax.random.split(key)

    INPUT_NC, NDF, N_LAYERS = 3, 8, 3
    layers = make_discriminator_params(pkey, INPUT_NC, ndf=NDF, n_layers=N_LAYERS)

    # Small input consistent with the module: NCHW, 32x32 keeps every conv output >= 1.
    x = jax.random.normal(xkey, (2, INPUT_NC, 32, 32), dtype=jnp.float32)

    fwd = jax.jit(functools.partial(discriminator_forward, layers=layers))
    out = jax.block_until_ready(fwd(x))

    assert out.shape == (2, 1, 2, 2), out.shape
    assert bool(jnp.all(jnp.isfinite(out)))
    # TODO(synk): eval-mode BatchNorm (running statistics) is not implemented;
    # training-mode batch statistics (the PyTorch module's default state) are used.
    print("KERNEL_OK")
</pallas_src>

<mosaic_0001>
module attributes {stable_mosaic.version = 11 : i64} {
  func.func @_conv_bias_act_kernel(%arg0: i32, %arg1: memref<256x48xbf16, #tpu.memory_space<vmem>>, %arg2: memref<48x128xbf16, #tpu.memory_space<vmem>>, %arg3: memref<1x8xf32, #tpu.memory_space<vmem>>, %arg4: memref<256x8xbf16, #tpu.memory_space<vmem>>) attributes {dimension_semantics = [#tpu.dimension_semantics<parallel>], iteration_bounds = array<i64: 2>, scalar_prefetch = 0 : i64, scratch_operands = 0 : i64, tpu.core_type = #tpu.core_type<tc>, window_params = [{transform_indices = @transform_0, window_bounds = array<i64: 256, 48>}, {pipeline_mode = #tpu.pipeline_mode<synchronous>, transform_indices = @transform_1, window_bounds = array<i64: 48, 128>}, {pipeline_mode = #tpu.pipeline_mode<synchronous>, transform_indices = @transform_2, window_bounds = array<i64: 1, 8>}, {transform_indices = @transform_3, window_bounds = array<i64: 256, 8>}]} {
    %c0 = arith.constant 0 : index
    %c0_0 = arith.constant 0 : index
    %0 = vector.load %arg1[%c0, %c0_0] : memref<256x48xbf16, #tpu.memory_space<vmem>>, vector<256x48xbf16>
    %c0_1 = arith.constant 0 : index
    %c0_2 = arith.constant 0 : index
    %1 = vector.load %arg2[%c0_1, %c0_2] : memref<48x128xbf16, #tpu.memory_space<vmem>>, vector<48x128xbf16>
    %cst = arith.constant dense<0.000000e+00> : vector<256x128xf32>
    %2 = tpu.matmul %0, %1, %cst {dimension_numbers = #tpu.dot_dimension_numbers<[1], [0], [0], [1], [0, 0, 1, 1], [], []>} : vector<256x48xbf16>, vector<48x128xbf16>, vector<256x128xf32> -> vector<256x128xf32>
    %3 = vector.extract_strided_slice %2 {offsets = [0, 0], sizes = [256, 8], strides = [1, 1]} : vector<256x128xf32> to vector<256x8xf32>
    %c0_3 = arith.constant 0 : index
    %c0_4 = arith.constant 0 : index
    %4 = vector.load %arg3[%c0_3, %c0_4] : memref<1x8xf32, #tpu.memory_space<vmem>>, vector<1x8xf32>
    %5 = vector.broadcast %4 : vector<1x8xf32> to vector<256x8xf32>
    %6 = arith.addf %3, %5 : vector<256x8xf32>
    %cst_5 = arith.constant 0.000000e+00 : f32
    %7 = vector.broadcast %cst_5 : f32 to vector<256x8xf32>
    %8 = arith.cmpf oge, %6, %7 : vector<256x8xf32>
    %cst_6 = arith.constant 2.000000e-01 : f32
    %9 = vector.broadcast %cst_6 : f32 to vector<256x8xf32>
    %10 = arith.mulf %9, %6 : vector<256x8xf32>
    %11 = arith.select %8, %6, %10 : vector<256x8xi1>, vector<256x8xf32>
    %12 = arith.truncf %11 : vector<256x8xf32> to vector<256x8xbf16>
    %c0_7 = arith.constant 0 : index
    %c0_8 = arith.constant 0 : index
    %13 = vector.load %arg4[%c0_7, %c0_8] : memref<256x8xbf16, #tpu.memory_space<vmem>>, vector<256x8xbf16>
    tpu.vector_store %arg4[%c0_7, %c0_8], %12 {strides = array<i32>} : memref<256x8xbf16, #tpu.memory_space<vmem>>, vector<256x8xbf16>,
    return
  }
  func.func @transform_0(%arg0: i32) -> (i32, i32) {
    %c0_i32 = arith.constant 0 : i32
    %c0_i32_0 = arith.constant 0 : i32
    return %arg0, %c0_i32 : i32, i32
  }
  func.func @transform_1(%arg0: i32) -> (i32, i32) {
    %c0_i32 = arith.constant 0 : i32
    %c0_i32_0 = arith.constant 0 : i32
    %c0_i32_1 = arith.constant 0 : i32
    return %c0_i32, %c0_i32_0 : i32, i32
  }
  func.func @transform_2(%arg0: i32) -> (i32, i32) {
    %c0_i32 = arith.constant 0 : i32
    %c0_i32_0 = arith.constant 0 : i32
    %c0_i32_1 = arith.constant 0 : i32
    return %c0_i32, %c0_i32_0 : i32, i32
  }
  func.func @transform_3(%arg0: i32) -> (i32, i32) {
    %c0_i32 = arith.constant 0 : i32
    %c0_i32_0 = arith.constant 0 : i32
    return %arg0, %c0_i32 : i32, i32
  }
}

module attributes {stable_mosaic.version = 11 : i64} {
  func.func @_conv_stats_kernel(%arg0: i32, %arg1: memref<128x128xbf16, #tpu.memory_space<vmem>>, %arg2: memref<128x128xbf16, #tpu.memory_space<vmem>>, %arg3: memref<128x16xbf16, #tpu.memory_space<vmem>>, %arg4: memref<1x2x16xf32, #tpu.memory_space<vmem>>) attributes {dimension_semantics = [#tpu.dimension_semantics<parallel>], iteration_bounds = array<i64: 1>, scalar_prefetch = 0 : i64, scratch_operands = 0 : i64, tpu.core_type = #tpu.core_type<tc>, window_params = [{transform_indices = @transform_0, window_bounds = array<i64: 128, 128>}, {pipeline_mode = #tpu.pipeline_mode<synchronous>, transform_indices = @transform_1, window_bounds = array<i64: 128, 128>}, {transform_indices = @transform_2, window_bounds = array<i64: 128, 16>}, {transform_indices = @transform_3, window_bounds = array<i64: 1, 2, 16>}]} {
    %c0 = arith.constant 0 : index
    %c0_0 = arith.constant 0 : index
    %0 = vector.load %arg1[%c0, %c0_0] : memref<128x128xbf16, #tpu.memory_space<vmem>>, vector<128x128xbf16>
    %c0_1 = arith.constant 0 : index
    %c0_2 = arith.constant 0 : index
    %1 = vector.load %arg2[%c0_1, %c0_2] : memref<128x128xbf16, #tpu.memory_space<vmem>>, vector<128x128xbf16>
    %cst = arith.constant dense<0.000000e+00> : vector<128x128xf32>
    %2 = tpu.matmul %0, %1, %cst {dimension_numbers = #tpu.dot_dimension_numbers<[1], [0], [0], [1], [0, 0, 1, 1], [], []>} : vector<128x128xbf16>, vector<128x128xbf16>, vector<128x128xf32> -> vector<128x128xf32>
    %3 = vector.extract_strided_slice %2 {offsets = [0, 0], sizes = [128, 16], strides = [1, 1]} : vector<128x128xf32> to vector<128x16xf32>
    %4 = arith.truncf %3 : vector<128x16xf32> to vector<128x16xbf16>
    %c0_3 = arith.constant 0 : index
    %c0_4 = arith.constant 0 : index
    %5 = vector.load %arg3[%c0_3, %c0_4] : memref<128x16xbf16, #tpu.memory_space<vmem>>, vector<128x16xbf16>
    tpu.vector_store %arg3[%c0_3, %c0_4], %4 {strides = array<i32>} : memref<128x16xbf16, #tpu.memory_space<vmem>>, vector<128x16xbf16>,
    %cst_5 = arith.constant dense<0.000000e+00> : vector<16xf32>
    %6 = vector.multi_reduction <add>, %3, %cst_5 [0] : vector<128x16xf32> to vector<16xf32>
    %7 = vector.shape_cast %6 : vector<16xf32> to vector<1x16xf32>
    %8 = arith.mulf %3, %3 : vector<128x16xf32>
    %cst_6 = arith.constant dense<0.000000e+00> : vector<16xf32>
    %9 = vector.multi_reduction <add>, %8, %cst_6 [0] : vector<128x16xf32> to vector<16xf32>
    %10 = vector.shape_cast %9 : vector<16xf32> to vector<1x16xf32>
    %11 = tpu.concatenate %7, %10 in 0 : vector<1x16xf32>, vector<1x16xf32> -> vector<2x16xf32>
    %12 = vector.shape_cast %11 : vector<2x16xf32> to vector<1x2x16xf32>
    %c0_7 = arith.constant 0 : index
    %c0_8 = arith.constant 0 : index
    %c0_9 = arith.constant 0 : index
    %13 = vector.load %arg4[%c0_7, %c0_8, %c0_9] : memref<1x2x16xf32, #tpu.memory_space<vmem>>, vector<1x2x16xf32>
    tpu.vector_store %arg4[%c0_7, %c0_8, %c0_9], %12 {strides = array<i32>} : memref<1x2x16xf32, #tpu.memory_space<vmem>>, vector<1x2x16xf32>,
    return
  }
  func.func @transform_0(%arg0: i32) -> (i32, i32) {
    %c0_i32 = arith.constant 0 : i32
    %c0_i32_0 = arith.constant 0 : i32
    return %arg0, %c0_i32 : i32, i32
  }
  func.func @transform_1(%arg0: i32) -> (i32, i32) {
    %c0_i32 = arith.constant 0 : i32
    %c0_i32_0 = arith.constant 0 : i32
    %c0_i32_1 = arith.constant 0 : i32
    return %c0_i32, %c0_i32_0 : i32, i32
  }
  func.func @transform_2(%arg0: i32) -> (i32, i32) {
    %c0_i32 = arith.constant 0 : i32
    %c0_i32_0 = arith.constant 0 : i32
    return %arg0, %c0_i32 : i32, i32
  }
  func.func @transform_3(%arg0: i32) -> (i32, i32, i32) {
    %c0_i32 = arith.constant 0 : i32
    %c0_i32_0 = arith.constant 0 : i32
    %c0_i32_1 = arith.constant 0 : i32
    return %arg0, %c0_i32, %c0_i32_0 : i32, i32, i32
  }
}

module attributes {stable_mosaic.version = 11 : i64} {
  func.func @_bn_act_kernel(%arg0: i32, %arg1: memref<128x16xbf16, #tpu.memory_space<vmem>>, %arg2: memref<1x16xf32, #tpu.memory_space<vmem>>, %arg3: memref<1x16xf32, #tpu.memory_space<vmem>>, %arg4: memref<128x16xbf16, #tpu.memory_space<vmem>>) attributes {dimension_semantics = [#tpu.dimension_semantics<parallel>], iteration_bounds = array<i64: 1>, scalar_prefetch = 0 : i64, scratch_operands = 0 : i64, tpu.core_type = #tpu.core_type<tc>, window_params = [{transform_indices = @transform_0, window_bounds = array<i64: 128, 16>}, {pipeline_mode = #tpu.pipeline_mode<synchronous>, transform_indices = @transform_1, window_bounds = array<i64: 1, 16>}, {pipeline_mode = #tpu.pipeline_mode<synchronous>, transform_indices = @transform_2, window_bounds = array<i64: 1, 16>}, {transform_indices = @transform_3, window_bounds = array<i64: 128, 16>}]} {
    %c0 = arith.constant 0 : index
    %c0_0 = arith.constant 0 : index
    %0 = vector.load %arg1[%c0, %c0_0] : memref<128x16xbf16, #tpu.memory_space<vmem>>, vector<128x16xbf16>
    %1 = arith.extf %0 : vector<128x16xbf16> to vector<128x16xf32>
    %c0_1 = arith.constant 0 : index
    %c0_2 = arith.constant 0 : index
    %2 = vector.load %arg2[%c0_1, %c0_2] : memref<1x16xf32, #tpu.memory_space<vmem>>, vector<1x16xf32>
    %3 = vector.broadcast %2 : vector<1x16xf32> to vector<128x16xf32>
    %4 = arith.mulf %1, %3 : vector<128x16xf32>
    %c0_3 = arith.constant 0 : index
    %c0_4 = arith.constant 0 : index
    %5 = vector.load %arg3[%c0_3, %c0_4] : memref<1x16xf32, #tpu.memory_space<vmem>>, vector<1x16xf32>
    %6 = vector.broadcast %5 : vector<1x16xf32> to vector<128x16xf32>
    %7 = arith.addf %4, %6 : vector<128x16xf32>
    %cst = arith.constant 0.000000e+00 : f32
    %8 = vector.broadcast %cst : f32 to vector<128x16xf32>
    %9 = arith.cmpf oge, %7, %8 : vector<128x16xf32>
    %cst_5 = arith.constant 2.000000e-01 : f32
    %10 = vector.broadcast %cst_5 : f32 to vector<128x16xf32>
    %11 = arith.mulf %10, %7 : vector<128x16xf32>
    %12 = arith.select %9, %7, %11 : vector<128x16xi1>, vector<128x16xf32>
    %13 = arith.truncf %12 : vector<128x16xf32> to vector<128x16xbf16>
    %c0_6 = arith.constant 0 : index
    %c0_7 = arith.constant 0 : index
    %14 = vector.load %arg4[%c0_6, %c0_7] : memref<128x16xbf16, #tpu.memory_space<vmem>>, vector<128x16xbf16>
    tpu.vector_store %arg4[%c0_6, %c0_7], %13 {strides = array<i32>} : memref<128x16xbf16, #tpu.memory_space<vmem>>, vector<128x16xbf16>,
    return
  }
  func.func @transform_0(%arg0: i32) -> (i32, i32) {
    %c0_i32 = arith.constant 0 : i32
    %c0_i32_0 = arith.constant 0 : i32
    return %arg0, %c0_i32 : i32, i32
  }
  func.func @transform_1(%arg0: i32) -> (i32, i32) {
    %c0_i32 = arith.constant 0 : i32
    %c0_i32_0 = arith.constant 0 : i32
    %c0_i32_1 = arith.constant 0 : i32
    return %c0_i32, %c0_i32_0 : i32, i32
  }
  func.func @transform_2(%arg0: i32) -> (i32, i32) {
    %c0_i32 = arith.constant 0 : i32
    %c0_i32_0 = arith.constant 0 : i32
    %c0_i32_1 = arith.constant 0 : i32
    return %c0_i32, %c0_i32_0 : i32, i32
  }
  func.func @transform_3(%arg0: i32) -> (i32, i32) {
    %c0_i32 = arith.constant 0 : i32
    %c0_i32_0 = arith.constant 0 : i32
    return %arg0, %c0_i32 : i32, i32
  }
}

module attributes {stable_mosaic.version = 11 : i64} {
  func.func @_conv_stats_kernel(%arg0: i32, %arg1: memref<32x256xbf16, #tpu.memory_space<vmem>>, %arg2: memref<256x128xbf16, #tpu.memory_space<vmem>>, %arg3: memref<32x32xbf16, #tpu.memory_space<vmem>>, %arg4: memref<1x2x32xf32, #tpu.memory_space<vmem>>) attributes {dimension_semantics = [#tpu.dimension_semantics<parallel>], iteration_bounds = array<i64: 1>, scalar_prefetch = 0 : i64, scratch_operands = 0 : i64, tpu.core_type = #tpu.core_type<tc>, window_params = [{transform_indices = @transform_0, window_bounds = array<i64: 32, 256>}, {pipeline_mode = #tpu.pipeline_mode<synchronous>, transform_indices = @transform_1, window_bounds = array<i64: 256, 128>}, {transform_indices = @transform_2, window_bounds = array<i64: 32, 32>}, {transform_indices = @transform_3, window_bounds = array<i64: 1, 2, 32>}]} {
    %c0 = arith.constant 0 : index
    %c0_0 = arith.constant 0 : index
    %0 = vector.load %arg1[%c0, %c0_0] : memref<32x256xbf16, #tpu.memory_space<vmem>>, vector<32x256xbf16>
    %c0_1 = arith.constant 0 : index
    %c0_2 = arith.constant 0 : index
    %1 = vector.load %arg2[%c0_1, %c0_2] : memref<256x128xbf16, #tpu.memory_space<vmem>>, vector<256x128xbf16>
    %cst = arith.constant dense<0.000000e+00> : vector<32x128xf32>
    %2 = tpu.matmul %0, %1, %cst {dimension_numbers = #tpu.dot_dimension_numbers<[1], [0], [0], [1], [0, 0, 1, 1], [], []>} : vector<32x256xbf16>, vector<256x128xbf16>, vector<32x128xf32> -> vector<32x128xf32>
    %3 = vector.extract_strided_slice %2 {offsets = [0, 0], sizes = [32, 32], strides = [1, 1]} : vector<32x128xf32> to vector<32x32xf32>
    %4 = arith.truncf %3 : vector<32x32xf32> to vector<32x32xbf16>
    %c0_3 = arith.constant 0 : index
    %c0_4 = arith.constant 0 : index
    %5 = vector.load %arg3[%c0_3, %c0_4] : memref<32x32xbf16, #tpu.memory_space<vmem>>, vector<32x32xbf16>
    tpu.vector_store %arg3[%c0_3, %c0_4], %4 {strides = array<i32>} : memref<32x32xbf16, #tpu.memory_space<vmem>>, vector<32x32xbf16>,
    %cst_5 = arith.constant dense<0.000000e+00> : vector<32xf32>
    %6 = vector.multi_reduction <add>, %3, %cst_5 [0] : vector<32x32xf32> to vector<32xf32>
    %7 = vector.shape_cast %6 : vector<32xf32> to vector<1x32xf32>
    %8 = arith.mulf %3, %3 : vector<32x32xf32>
    %cst_6 = arith.constant dense<0.000000e+00> : vector<32xf32>
    %9 = vector.multi_reduction <add>, %8, %cst_6 [0] : vector<32x32xf32> to vector<32xf32>
    %10 = vector.shape_cast %9 : vector<32xf32> to vector<1x32xf32>
    %11 = tpu.concatenate %7, %10 in 0 : vector<1x32xf32>, vector<1x32xf32> -> vector<2x32xf32>
    %12 = vector.shape_cast %11 : vector<2x32xf32> to vector<1x2x32xf32>
    %c0_7 = arith.constant 0 : index
    %c0_8 = arith.constant 0 : index
    %c0_9 = arith.constant 0 : index
    %13 = vector.load %arg4[%c0_7, %c0_8, %c0_9] : memref<1x2x32xf32, #tpu.memory_space<vmem>>, vector<1x2x32xf32>
    tpu.vector_store %arg4[%c0_7, %c0_8, %c0_9], %12 {strides = array<i32>} : memref<1x2x32xf32, #tpu.memory_space<vmem>>, vector<1x2x32xf32>,
    return
  }
  func.func @transform_0(%arg0: i32) -> (i32, i32) {
    %c0_i32 = arith.constant 0 : i32
    %c0_i32_0 = arith.constant 0 : i32
    return %arg0, %c0_i32 : i32, i32
  }
  func.func @transform_1(%arg0: i32) -> (i32, i32) {
    %c0_i32 = arith.constant 0 : i32
    %c0_i32_0 = arith.constant 0 : i32
    %c0_i32_1 = arith.constant 0 : i32
    return %c0_i32, %c0_i32_0 : i32, i32
  }
  func.func @transform_2(%arg0: i32) -> (i32, i32) {
    %c0_i32 = arith.constant 0 : i32
    %c0_i32_0 = arith.constant 0 : i32
    return %arg0, %c0_i32 : i32, i32
  }
  func.func @transform_3(%arg0: i32) -> (i32, i32, i32) {
    %c0_i32 = arith.constant 0 : i32
    %c0_i32_0 = arith.constant 0 : i32
    %c0_i32_1 = arith.constant 0 : i32
    return %arg0, %c0_i32, %c0_i32_0 : i32, i32, i32
  }
}

module attributes {stable_mosaic.version = 11 : i64} {
  func.func @_bn_act_kernel(%arg0: i32, %arg1: memref<32x32xbf16, #tpu.memory_space<vmem>>, %arg2: memref<1x32xf32, #tpu.memory_space<vmem>>, %arg3: memref<1x32xf32, #tpu.memory_space<vmem>>, %arg4: memref<32x32xbf16, #tpu.memory_space<vmem>>) attributes {dimension_semantics = [#tpu.dimension_semantics<parallel>], iteration_bounds = array<i64: 1>, scalar_prefetch = 0 : i64, scratch_operands = 0 : i64, tpu.core_type = #tpu.core_type<tc>, window_params = [{transform_indices = @transform_0, window_bounds = array<i64: 32, 32>}, {pipeline_mode = #tpu.pipeline_mode<synchronous>, transform_indices = @transform_1, window_bounds = array<i64: 1, 32>}, {pipeline_mode = #tpu.pipeline_mode<synchronous>, transform_indices = @transform_2, window_bounds = array<i64: 1, 32>}, {transform_indices = @transform_3, window_bounds = array<i64: 32, 32>}]} {
    %c0 = arith.constant 0 : index
    %c0_0 = arith.constant 0 : index
    %0 = vector.load %arg1[%c0, %c0_0] : memref<32x32xbf16, #tpu.memory_space<vmem>>, vector<32x32xbf16>
    %1 = arith.extf %0 : vector<32x32xbf16> to vector<32x32xf32>
    %c0_1 = arith.constant 0 : index
    %c0_2 = arith.constant 0 : index
    %2 = vector.load %arg2[%c0_1, %c0_2] : memref<1x32xf32, #tpu.memory_space<vmem>>, vector<1x32xf32>
    %3 = vector.broadcast %2 : vector<1x32xf32> to vector<32x32xf32>
    %4 = arith.mulf %1, %3 : vector<32x32xf32>
    %c0_3 = arith.constant 0 : index
    %c0_4 = arith.constant 0 : index
    %5 = vector.load %arg3[%c0_3, %c0_4] : memref<1x32xf32, #tpu.memory_space<vmem>>, vector<1x32xf32>
    %6 = vector.broadcast %5 : vector<1x32xf32> to vector<32x32xf32>
    %7 = arith.addf %4, %6 : vector<32x32xf32>
    %cst = arith.constant 0.000000e+00 : f32
    %8 = vector.broadcast %cst : f32 to vector<32x32xf32>
    %9 = arith.cmpf oge, %7, %8 : vector<32x32xf32>
    %cst_5 = arith.constant 2.000000e-01 : f32
    %10 = vector.broadcast %cst_5 : f32 to vector<32x32xf32>
    %11 = arith.mulf %10, %7 : vector<32x32xf32>
    %12 = arith.select %9, %7, %11 : vector<32x32xi1>, vector<32x32xf32>
    %13 = arith.truncf %12 : vector<32x32xf32> to vector<32x32xbf16>
    %c0_6 = arith.constant 0 : index
    %c0_7 = arith.constant 0 : index
    %14 = vector.load %arg4[%c0_6, %c0_7] : memref<32x32xbf16, #tpu.memory_space<vmem>>, vector<32x32xbf16>
    tpu.vector_store %arg4[%c0_6, %c0_7], %13 {strides = array<i32>} : memref<32x32xbf16, #tpu.memory_space<vmem>>, vector<32x32xbf16>,
    return
  }
  func.func @transform_0(%arg0: i32) -> (i32, i32) {
    %c0_i32 = arith.constant 0 : i32
    %c0_i32_0 = arith.constant 0 : i32
    return %arg0, %c0_i32 : i32, i32
  }
  func.func @transform_1(%arg0: i32) -> (i32, i32) {
    %c0_i32 = arith.constant 0 : i32
    %c0_i32_0 = arith.constant 0 : i32
    %c0_i32_1 = arith.constant 0 : i32
    return %c0_i32, %c0_i32_0 : i32, i32
  }
  func.func @transform_2(%arg0: i32) -> (i32, i32) {
    %c0_i32 = arith.constant 0 : i32
    %c0_i32_0 = arith.constant 0 : i32
    %c0_i32_1 = arith.constant 0 : i32
    return %c0_i32, %c0_i32_0 : i32, i32
  }
  func.func @transform_3(%arg0: i32) -> (i32, i32) {
    %c0_i32 = arith.constant 0 : i32
    %c0_i32_0 = arith.constant 0 : i32
    return %arg0, %c0_i32 : i32, i32
  }
}

module attributes {stable_mosaic.version = 11 : i64} {
  func.func @_conv_stats_kernel(%arg0: i32, %arg1: memref<32x512xbf16, #tpu.memory_space<vmem>>, %arg2: memref<512x128xbf16, #tpu.memory_space<vmem>>, %arg3: memref<32x64xbf16, #tpu.memory_space<vmem>>, %arg4: memref<1x2x64xf32, #tpu.memory_space<vmem>>) attributes {dimension_semantics = [#tpu.dimension_semantics<parallel>], iteration_bounds = array<i64: 1>, scalar_prefetch = 0 : i64, scratch_operands = 0 : i64, tpu.core_type = #tpu.core_type<tc>, window_params = [{transform_indices = @transform_0, window_bounds = array<i64: 32, 512>}, {pipeline_mode = #tpu.pipeline_mode<synchronous>, transform_indices = @transform_1, window_bounds = array<i64: 512, 128>}, {transform_indices = @transform_2, window_bounds = array<i64: 32, 64>}, {transform_indices = @transform_3, window_bounds = array<i64: 1, 2, 64>}]} {
    %c0 = arith.constant 0 : index
    %c0_0 = arith.constant 0 : index
    %0 = vector.load %arg1[%c0, %c0_0] : memref<32x512xbf16, #tpu.memory_space<vmem>>, vector<32x512xbf16>
    %c0_1 = arith.constant 0 : index
    %c0_2 = arith.constant 0 : index
    %1 = vector.load %arg2[%c0_1, %c0_2] : memref<512x128xbf16, #tpu.memory_space<vmem>>, vector<512x128xbf16>
    %cst = arith.constant dense<0.000000e+00> : vector<32x128xf32>
    %2 = tpu.matmul %0, %1, %cst {dimension_numbers = #tpu.dot_dimension_numbers<[1], [0], [0], [1], [0, 0, 1, 1], [], []>} : vector<32x512xbf16>, vector<512x128xbf16>, vector<32x128xf32> -> vector<32x128xf32>
    %3 = vector.extract_strided_slice %2 {offsets = [0, 0], sizes = [32, 64], strides = [1, 1]} : vector<32x128xf32> to vector<32x64xf32>
    %4 = arith.truncf %3 : vector<32x64xf32> to vector<32x64xbf16>
    %c0_3 = arith.constant 0 : index
    %c0_4 = arith.constant 0 : index
    %5 = vector.load %arg3[%c0_3, %c0_4] : memref<32x64xbf16, #tpu.memory_space<vmem>>, vector<32x64xbf16>
    tpu.vector_store %arg3[%c0_3, %c0_4], %4 {strides = array<i32>} : memref<32x64xbf16, #tpu.memory_space<vmem>>, vector<32x64xbf16>,
    %cst_5 = arith.constant dense<0.000000e+00> : vector<64xf32>
    %6 = vector.multi_reduction <add>, %3, %cst_5 [0] : vector<32x64xf32> to vector<64xf32>
    %7 = vector.shape_cast %6 : vector<64xf32> to vector<1x64xf32>
    %8 = arith.mulf %3, %3 : vector<32x64xf32>
    %cst_6 = arith.constant dense<0.000000e+00> : vector<64xf32>
    %9 = vector.multi_reduction <add>, %8, %cst_6 [0] : vector<32x64xf32> to vector<64xf32>
    %10 = vector.shape_cast %9 : vector<64xf32> to vector<1x64xf32>
    %11 = tpu.concatenate %7, %10 in 0 : vector<1x64xf32>, vector<1x64xf32> -> vector<2x64xf32>
    %12 = vector.shape_cast %11 : vector<2x64xf32> to vector<1x2x64xf32>
    %c0_7 = arith.constant 0 : index
    %c0_8 = arith.constant 0 : index
    %c0_9 = arith.constant 0 : index
    %13 = vector.load %arg4[%c0_7, %c0_8, %c0_9] : memref<1x2x64xf32, #tpu.memory_space<vmem>>, vector<1x2x64xf32>
    tpu.vector_store %arg4[%c0_7, %c0_8, %c0_9], %12 {strides = array<i32>} : memref<1x2x64xf32, #tpu.memory_space<vmem>>, vector<1x2x64xf32>,
    return
  }
  func.func @transform_0(%arg0: i32) -> (i32, i32) {
    %c0_i32 = arith.constant 0 : i32
    %c0_i32_0 = arith.constant 0 : i32
    return %arg0, %c0_i32 : i32, i32
  }
  func.func @transform_1(%arg0: i32) -> (i32, i32) {
    %c0_i32 = arith.constant 0 : i32
    %c0_i32_0 = arith.constant 0 : i32
    %c0_i32_1 = arith.constant 0 : i32
    return %c0_i32, %c0_i32_0 : i32, i32
  }
  func.func @transform_2(%arg0: i32) -> (i32, i32) {
    %c0_i32 = arith.constant 0 : i32
    %c0_i32_0 = arith.constant 0 : i32
    return %arg0, %c0_i32 : i32, i32
  }
  func.func @transform_3(%arg0: i32) -> (i32, i32, i32) {
    %c0_i32 = arith.constant 0 : i32
    %c0_i32_0 = arith.constant 0 : i32
    %c0_i32_1 = arith.constant 0 : i32
    return %arg0, %c0_i32, %c0_i32_0 : i32, i32, i32
  }
}

module attributes {stable_mosaic.version = 11 : i64} {
  func.func @_bn_act_kernel(%arg0: i32, %arg1: memref<32x64xbf16, #tpu.memory_space<vmem>>, %arg2: memref<1x64xf32, #tpu.memory_space<vmem>>, %arg3: memref<1x64xf32, #tpu.memory_space<vmem>>, %arg4: memref<32x64xbf16, #tpu.memory_space<vmem>>) attributes {dimension_semantics = [#tpu.dimension_semantics<parallel>], iteration_bounds = array<i64: 1>, scalar_prefetch = 0 : i64, scratch_operands = 0 : i64, tpu.core_type = #tpu.core_type<tc>, window_params = [{transform_indices = @transform_0, window_bounds = array<i64: 32, 64>}, {pipeline_mode = #tpu.pipeline_mode<synchronous>, transform_indices = @transform_1, window_bounds = array<i64: 1, 64>}, {pipeline_mode = #tpu.pipeline_mode<synchronous>, transform_indices = @transform_2, window_bounds = array<i64: 1, 64>}, {transform_indices = @transform_3, window_bounds = array<i64: 32, 64>}]} {
    %c0 = arith.constant 0 : index
    %c0_0 = arith.constant 0 : index
    %0 = vector.load %arg1[%c0, %c0_0] : memref<32x64xbf16, #tpu.memory_space<vmem>>, vector<32x64xbf16>
    %1 = arith.extf %0 : vector<32x64xbf16> to vector<32x64xf32>
    %c0_1 = arith.constant 0 : index
    %c0_2 = arith.constant 0 : index
    %2 = vector.load %arg2[%c0_1, %c0_2] : memref<1x64xf32, #tpu.memory_space<vmem>>, vector<1x64xf32>
    %3 = vector.broadcast %2 : vector<1x64xf32> to vector<32x64xf32>
    %4 = arith.mulf %1, %3 : vector<32x64xf32>
    %c0_3 = arith.constant 0 : index
    %c0_4 = arith.constant 0 : index
    %5 = vector.load %arg3[%c0_3, %c0_4] : memref<1x64xf32, #tpu.memory_space<vmem>>, vector<1x64xf32>
    %6 = vector.broadcast %5 : vector<1x64xf32> to vector<32x64xf32>
    %7 = arith.addf %4, %6 : vector<32x64xf32>
    %cst = arith.constant 0.000000e+00 : f32
    %8 = vector.broadcast %cst : f32 to vector<32x64xf32>
    %9 = arith.cmpf oge, %7, %8 : vector<32x64xf32>
    %cst_5 = arith.constant 2.000000e-01 : f32
    %10 = vector.broadcast %cst_5 : f32 to vector<32x64xf32>
    %11 = arith.mulf %10, %7 : vector<32x64xf32>
    %12 = arith.select %9, %7, %11 : vector<32x64xi1>, vector<32x64xf32>
    %13 = arith.truncf %12 : vector<32x64xf32> to vector<32x64xbf16>
    %c0_6 = arith.constant 0 : index
    %c0_7 = arith.constant 0 : index
    %14 = vector.load %arg4[%c0_6, %c0_7] : memref<32x64xbf16, #tpu.memory_space<vmem>>, vector<32x64xbf16>
    tpu.vector_store %arg4[%c0_6, %c0_7], %13 {strides = array<i32>} : memref<32x64xbf16, #tpu.memory_space<vmem>>, vector<32x64xbf16>,
    return
  }
  func.func @transform_0(%arg0: i32) -> (i32, i32) {
    %c0_i32 = arith.constant 0 : i32
    %c0_i32_0 = arith.constant 0 : i32
    return %arg0, %c0_i32 : i32, i32
  }
  func.func @transform_1(%arg0: i32) -> (i32, i32) {
    %c0_i32 = arith.constant 0 : i32
    %c0_i32_0 = arith.constant 0 : i32
    %c0_i32_1 = arith.constant 0 : i32
    return %c0_i32, %c0_i32_0 : i32, i32
  }
  func.func @transform_2(%arg0: i32) -> (i32, i32) {
    %c0_i32 = arith.constant 0 : i32
    %c0_i32_0 = arith.constant 0 : i32
    %c0_i32_1 = arith.constant 0 : i32
    return %c0_i32, %c0_i32_0 : i32, i32
  }
  func.func @transform_3(%arg0: i32) -> (i32, i32) {
    %c0_i32 = arith.constant 0 : i32
    %c0_i32_0 = arith.constant 0 : i32
    return %arg0, %c0_i32 : i32, i32
  }
}

module attributes {stable_mosaic.version = 11 : i64} {
  func.func @_conv_bias_act_kernel(%arg0: i32, %arg1: memref<16x1024xbf16, #tpu.memory_space<vmem>>, %arg2: memref<1024x128xbf16, #tpu.memory_space<vmem>>, %arg3: memref<1x1xf32, #tpu.memory_space<vmem>>, %arg4: memref<16x1xf32, #tpu.memory_space<vmem>>) attributes {dimension_semantics = [#tpu.dimension_semantics<parallel>], iteration_bounds = array<i64: 1>, scalar_prefetch = 0 : i64, scratch_operands = 0 : i64, tpu.core_type = #tpu.core_type<tc>, window_params = [{transform_indices = @transform_0, window_bounds = array<i64: 16, 1024>}, {pipeline_mode = #tpu.pipeline_mode<synchronous>, transform_indices = @transform_1, window_bounds = array<i64: 1024, 128>}, {pipeline_mode = #tpu.pipeline_mode<synchronous>, transform_indices = @transform_2, window_bounds = array<i64: 1, 1>}, {transform_indices = @transform_3, window_bounds = array<i64: 16, 1>}]} {
    %c0 = arith.constant 0 : index
    %c0_0 = arith.constant 0 : index
    %0 = vector.load %arg1[%c0, %c0_0] : memref<16x1024xbf16, #tpu.memory_space<vmem>>, vector<16x1024xbf16>
    %c0_1 = arith.constant 0 : index
    %c0_2 = arith.constant 0 : index
    %1 = vector.load %arg2[%c0_1, %c0_2] : memref<1024x128xbf16, #tpu.memory_space<vmem>>, vector<1024x128xbf16>
    %cst = arith.constant dense<0.000000e+00> : vector<16x128xf32>
    %2 = tpu.matmul %0, %1, %cst {dimension_numbers = #tpu.dot_dimension_numbers<[1], [0], [0], [1], [0, 0, 1, 1], [], []>} : vector<16x1024xbf16>, vector<1024x128xbf16>, vector<16x128xf32> -> vector<16x128xf32>
    %3 = vector.extract_strided_slice %2 {offsets = [0, 0], sizes = [16, 1], strides = [1, 1]} : vector<16x128xf32> to vector<16x1xf32>
    %c0_3 = arith.constant 0 : index
    %c0_4 = arith.constant 0 : index
    %4 = vector.load %arg3[%c0_3, %c0_4] : memref<1x1xf32, #tpu.memory_space<vmem>>, vector<1x1xf32>
    %5 = vector.broadcast %4 : vector<1x1xf32> to vector<16x1xf32>
    %6 = arith.addf %3, %5 : vector<16x1xf32>
    %c0_5 = arith.constant 0 : index
    %c0_6 = arith.constant 0 : index
    %7 = vector.load %arg4[%c0_5, %c0_6] : memref<16x1xf32, #tpu.memory_space<vmem>>, vector<16x1xf32>
    tpu.vector_store %arg4[%c0_5, %c0_6], %6 {strides = array<i32>} : memref<16x1xf32, #tpu.memory_space<vmem>>, vector<16x1xf32>,
    return
  }
  func.func @transform_0(%arg0: i32) -> (i32, i32) {
    %c0_i32 = arith.constant 0 : i32
    %c0_i32_0 = arith.constant 0 : i32
    return %arg0, %c0_i32 : i32, i32
  }
  func.func @transform_1(%arg0: i32) -> (i32, i32) {
    %c0_i32 = arith.constant 0 : i32
    %c0_i32_0 = arith.constant 0 : i32
    %c0_i32_1 = arith.constant 0 : i32
    return %c0_i32, %c0_i32_0 : i32, i32
  }
  func.func @transform_2(%arg0: i32) -> (i32, i32) {
    %c0_i32 = arith.constant 0 : i32
    %c0_i32_0 = arith.constant 0 : i32
    %c0_i32_1 = arith.constant 0 : i32
    return %c0_i32, %c0_i32_0 : i32, i32
  }
  func.func @transform_3(%arg0: i32) -> (i32, i32) {
    %c0_i32 = arith.constant 0 : i32
    %c0_i32_0 = arith.constant 0 : i32
    return %arg0, %c0_i32 : i32, i32
  }
}

</mosaic_0001>

<llo_original>
// kernel: discriminator_forward.8
$region0: #{discriminator_forward.8}
  #allocation0 [shape = 'u32[]', space=smem, size = 0x4, offset = 0x4, fixed_abs, tag = 'smem constant byte address 0x4 - core index']
  #allocation1 [shape = 'u32[144,128]{1,0:T(1,128)}', space=vmem, size = 0x12000, scoped, tag = 'internal scratch']
  %s0 = inlined_call_operand.vmem [shape: bf16[512,48], index: 0, kind: input, shape index: {}]
  %s1 = inlined_call_operand.vmem [shape: bf16[48,128], index: 1, kind: input, shape index: {}]
  %s2 = inlined_call_operand.vmem [shape: f32[1,8], index: 2, kind: input, shape index: {}]
  %s3 = inlined_call_operand.vmem [shape: bf16[512,8], index: 3, kind: output, shape index: {}]
  %s4 = sld [smem:[#allocation0]]
  $region45: #{discriminator_forward.8} parent=0
    _
  %s6 = ssub.s32 1, %s4
  %s7 = scalar_select 0, %s6, %s4
  loop: start=0, step=1, limit=4
  $region2: #{discriminator_forward.8} parent=0 // loop_pre_header
    _
  $region3: #{discriminator_forward.8} parent=0 // loop_header
    %s9 = sphi 0, %s13
    %p10 = scmp.ge.s32.totalorder %s9, 4
    %s19 = sphi 0, %s21
    %s22 = sphi 0, %s19
    %s23 = sphi 0, %s22
    %s39 = sphi 0, %s23
    %s43 = sphi 0, %s43
    %s45 = sphi 0, %s43
    %s46 = sphi 0, %s45
    %s60 = sphi 0, %s46
    %s64 = sphi 0, %s64
    %s66 = sphi 0, %s64
    %s67 = sphi 0, %s66
    %s81 = sphi 0, %s67
    %s87 = sphi 0, %s89
    %s90 = sphi 0, %s87
    %s91 = sphi 0, %s90
    %s107 = sphi 0, %s91
  $region4: #{discriminator_forward.8} parent=0 // loop_header_branch
    %12 = sbr.rel (%p10) target = $region8
  $region5: #{discriminator_forward.8} parent=0 // loop_body
    %s14 = ssub.s32 %s9, 1
    %s15 = ssub.s32 %s9, 2
    %s16 = sadd.s32 %s9, 1
    %s17 = ssub.s32 %s9, %s16
    %p18 = scmp.eq.s32.totalorder %s17, 0
    %s20 = sadd.s32 %s19, 1
    %s21 = scalar_select %p18, %s19, %s20
    %p24 = pneg %p18
    %p25 = scmp.eq.s32.totalorder %s9, 1
    %p26 = por %p24, %p25
    %p27 = scmp.ne.s32.totalorder %s19, %s22
    %p28 = scmp.eq.s32.totalorder %s9, 0
    %p29 = por %p27, %p28
    %p30 = scmp.ne.s32.totalorder %s19, %s22
    %p31 = scmp.eq.s32.totalorder %s14, 1
    %p32 = por %p30, %p31
    %p33 = scmp.ne.s32.totalorder %s22, %s23
    %p34 = scmp.eq.s32.totalorder %s14, 0
    %p35 = por %p33, %p34
    %p36 = scmp.ne.s32.totalorder %s22, %s23
    %p37 = scmp.eq.s32.totalorder %s15, 1
    %p38 = por %p36, %p37
    %p40 = scmp.ne.s32.totalorder %s23, %s39
    %p41 = scmp.eq.s32.totalorder %s15, 0
    %p42 = por %p40, %p41
    %s44 = sadd.s32 %s43, 1
    %p47 = scmp.eq.s32.totalorder %s9, 1
    %p48 = scmp.ne.s32.totalorder %s43, %s45
    %p49 = scmp.eq.s32.totalorder %s9, 0
    %p50 = por %p48, %p49
    %p51 = scmp.ne.s32.totalorder %s43, %s45
    %p52 = scmp.eq.s32.totalorder %s14, 1
    %p53 = por %p51, %p52
    %p54 = scmp.ne.s32.totalorder %s45, %s46
    %p55 = scmp.eq.s32.totalorder %s14, 0
    %p56 = por %p54, %p55
    %p57 = scmp.ne.s32.totalorder %s45, %s46
    %p58 = scmp.eq.s32.totalorder %s15, 1
    %p59 = por %p57, %p58
    %p61 = scmp.ne.s32.totalorder %s46, %s60
    %p62 = scmp.eq.s32.totalorder %s15, 0
    %p63 = por %p61, %p62
    %s65 = sadd.s32 %s64, 1
    %p68 = scmp.eq.s32.totalorder %s9, 1
    %p69 = scmp.ne.s32.totalorder %s64, %s66
    %p70 = scmp.eq.s32.totalorder %s9, 0
    %p71 = por %p69, %p70
    %p72 = scmp.ne.s32.totalorder %s64, %s66
    %p73 = scmp.eq.s32.totalorder %s14, 1
    %p74 = por %p72, %p73
    %p75 = scmp.ne.s32.totalorder %s66, %s67
    %p76 = scmp.eq.s32.totalorder %s14, 0
    %p77 = por %p75, %p76
    %p78 = scmp.ne.s32.totalorder %s66, %s67
    %p79 = scmp.eq.s32.totalorder %s15, 1
    %p80 = por %p78, %p79
    %p82 = scmp.ne.s32.totalorder %s67, %s81
    %p83 = scmp.eq.s32.totalorder %s15, 0
    %p84 = por %p82, %p83
    %s85 = ssub.s32 %s9, %s16
    %p86 = scmp.eq.s32.totalorder %s85, 0
    %s88 = sadd.s32 %s87, 1
    %s89 = scalar_select %p86, %s87, %s88
    %p92 = pneg %p86
    %p93 = scmp.eq.s32.totalorder %s9, 1
    %p94 = por %p92, %p93
    %p95 = scmp.ne.s32.totalorder %s87, %s90
    %p96 = scmp.eq.s32.totalorder %s9, 0
    %p97 = por %p95, %p96
    %p98 = scmp.ne.s32.totalorder %s87, %s90
    %p99 = scmp.eq.s32.totalorder %s14, 1
    %p100 = por %p98, %p99
    %p101 = scmp.ne.s32.totalorder %s90, %s91
    %p102 = scmp.eq.s32.totalorder %s14, 0
    %p103 = por %p101, %p102
    %p104 = scmp.ne.s32.totalorder %s90, %s91
    %p105 = scmp.eq.s32.totalorder %s15, 1
    %p106 = por %p104, %p105
    %p108 = scmp.ne.s32.totalorder %s91, %s107
    %p109 = scmp.eq.s32.totalorder %s15, 0
    %p110 = por %p108, %p109
    %p111 = scmp.le.s32.totalorder 1, %s9
    %p112 = scmp.lt.s32.totalorder %s9, 3
    %p113 = pnand %p111, %p112
    %p114 = pneg %p113
    // Predicated region
    $region9: #{discriminator_forward.8} parent=5 // pred_check
      _
    $region10: #{discriminator_forward.8} parent=5 // pred_check_branch
      %116 = sbr.rel (%p113) target = $region12
    $region11: #{discriminator_forward.8} parent=5 // pred_region
      %s117 = ssub.s32 %s9, 1
      // Predicated region
      $region13: #{discriminator_forward.8} parent=11 // pred_check
        %p118 = pneg %p56
      $region14: #{discriminator_forward.8} parent=11 // pred_check_branch
        %120 = sbr.rel (%p118) target = $region16
      $region15: #{discriminator_forward.8} parent=11 // pred_region
        _
      $region16: #{discriminator_forward.8} parent=11 // pred_fallthru
        _
      // Predicated region
      $region17: #{discriminator_forward.8} parent=11 // pred_check
        %p121 = pneg %p77
      $region18: #{discriminator_forward.8} parent=11 // pred_check_branch
        %123 = sbr.rel (%p121) target = $region20
      $region19: #{discriminator_forward.8} parent=11 // pred_region
        _
      $region20: #{discriminator_forward.8} parent=11 // pred_fallthru
        _
    $region12: #{discriminator_forward.8} parent=5 // pred_fallthru
      _
    %p124 = scmp.lt.s32.totalorder %s9, 2
    // Predicated region
    $region21: #{discriminator_forward.8} parent=5 // pred_check
      %p125 = pneg %p124
    $region22: #{discriminator_forward.8} parent=5 // pred_check_branch
      %127 = sbr.rel (%p125) target = $region24
    $region23: #{discriminator_forward.8} parent=5 // pred_region
      // Predicated region
      $region25: #{discriminator_forward.8} parent=23 // pred_check
        %p128 = pneg %p29
      $region26: #{discriminator_forward.8} parent=23 // pred_check_branch
        %130 = sbr.rel (%p128) target = $region28
      $region27: #{discriminator_forward.8} parent=23 // pred_region
        %s131 = smul.u32 32, %s9
        %p132 = scmp.lt.s32.totalorder %s131, 63
        %s133 = scalar_select %p132, %s131, 63
        %s134 = smul.addr %s133, 4
        %s135 = scalar_lea.vmem %s0, %s134
        %s136 = smul.u32 32, %s9
      $region28: #{discriminator_forward.8} parent=23 // pred_fallthru
        _
    $region24: #{discriminator_forward.8} parent=5 // pred_fallthru
      _
    %p137 = scmp.le.s32.totalorder 1, %s9
    %p138 = scmp.lt.s32.totalorder %s9, 3
    %p139 = pnand %p137, %p138
    %p140 = pneg %p139
    // Predicated region
    $region29: #{discriminator_forward.8} parent=5 // pred_check
      _
    $region30: #{discriminator_forward.8} parent=5 // pred_check_branch
      %142 = sbr.rel (%p139) target = $region32
    $region31: #{discriminator_forward.8} parent=5 // pred_region
      %s143 = ssub.s32 %s9, 1
      %s144 = smul.u32 32, %s14
      %p145 = scmp.lt.s32.totalorder %s144, 63
      %s146 = scalar_select %p145, %s144, 63
      %s147 = smul.addr %s146, 4
      %s148 = scalar_lea.vmem %s0, %s147
      %p149 = pneg %p35
      %p150 = pneg %p32
      %p151 = pneg %p56
      %p152 = pneg %p53
      %p153 = pneg %p77
      %p154 = pneg %p74
      %p155 = pneg %p103
      %p156 = pneg %p100
      %s157 = smul.u32 32, %s14
      %p158 = scmp.lt.s32.totalorder %s157, 63
      %s159 = scalar_select %p158, %s157, 63
      %s160 = smul.addr %s159, 4
      %s161 = scalar_lea.vmem %s3, %s160
      %s162 = smul.u32 32, %s14
      %p163 = scmp.lt.s32.totalorder %s162, 63
      %s164 = scalar_select %p163, %s162, 63
      %s165 = smul.addr %s164, 4
      %s166 = scalar_lea.vmem %s0, %s165
      %s167 = smul.u32 32, %s14
      %s168 = smul.u32 32, %s14
      %p169 = scmp.lt.s32.totalorder %s168, 63
      %s170 = scalar_select %p169, %s168, 63
      %s171 = smul.addr %s170, 4
      %s172 = scalar_lea.vmem %s3, %s171
      %s173 = smul.u32 32, %s14
      %v175 = vld [vmem:[%s166] sm:$0xf]
      %v176 = vld [vmem:[%s166 + $0x4] sm:$0xf]
      %v177 = vld [vmem:[%s166 + $0x8] sm:$0xf]
      %v178 = vld [vmem:[%s166 + $0xc] sm:$0xf]
      %v179 = vld [vmem:[%s166 + $0x10] sm:$0xf]
      %v180 = vld [vmem:[%s166 + $0x14] sm:$0xf]
      %v181 = vld [vmem:[%s166 + $0x18] sm:$0xf]
      %v182 = vld [vmem:[%s166 + $0x1c] sm:$0xf]
      %v183 = vld [vmem:[%s166 + $0x20] sm:$0xf]
      %v184 = vld [vmem:[%s166 + $0x24] sm:$0xf]
      %v185 = vld [vmem:[%s166 + $0x28] sm:$0xf]
      %v186 = vld [vmem:[%s166 + $0x2c] sm:$0xf]
      %v187 = vld [vmem:[%s166 + $0x30] sm:$0xf]
      %v188 = vld [vmem:[%s166 + $0x34] sm:$0xf]
      %v189 = vld [vmem:[%s166 + $0x38] sm:$0xf]
      %v190 = vld [vmem:[%s166 + $0x3c] sm:$0xf]
      %v191 = vld [vmem:[%s166 + $0x40] sm:$0xf]
      %v192 = vld [vmem:[%s166 + $0x44] sm:$0xf]
      %v193 = vld [vmem:[%s166 + $0x48] sm:$0xf]
      %v194 = vld [vmem:[%s166 + $0x4c] sm:$0xf]
      %v195 = vld [vmem:[%s166 + $0x50] sm:$0xf]
      %v196 = vld [vmem:[%s166 + $0x54] sm:$0xf]
      %v197 = vld [vmem:[%s166 + $0x58] sm:$0xf]
      %v198 = vld [vmem:[%s166 + $0x5c] sm:$0xf]
      %v199 = vld [vmem:[%s166 + $0x60] sm:$0xf]
      %v200 = vld [vmem:[%s166 + $0x64] sm:$0xf]
      %v201 = vld [vmem:[%s166 + $0x68] sm:$0xf]
      %v202 = vld [vmem:[%s166 + $0x6c] sm:$0xf]
      %v203 = vld [vmem:[%s166 + $0x70] sm:$0xf]
      %v204 = vld [vmem:[%s166 + $0x74] sm:$0xf]
      %v205 = vld [vmem:[%s166 + $0x78] sm:$0xf]
      %v206 = vld [vmem:[%s166 + $0x7c] sm:$0xf]
      %v207 = vld [vmem:[%s1] sm:$0xf]
      %v208 = vld [vmem:[%s1 + $0x4] sm:$0xf]
      %v209 = vld [vmem:[%s1 + $0x8] sm:$0xf]
      %v210 = vld [vmem:[%s1 + $0xc] sm:$0xf]
      %v211 = vld [vmem:[%s1 + $0x10] sm:$0xf]
      %v212 = vld [vmem:[%s1 + $0x14] sm:$0xf]
      %v245 = vunpack.c.l.b16 %v175
      %v246 = vunpack.c.l.b16 %v176
      %v247 = vunpack.c.l.b16 %v177
      %v248 = vunpack.c.l.b16 %v178
      %v249 = vunpack.c.l.b16 %v179
      %v250 = vunpack.c.l.b16 %v180
      %v251 = vunpack.c.l.b16 %v181
      %v252 = vunpack.c.l.b16 %v182
      %v253 = vunpack.c.l.b16 %v183
      %v254 = vunpack.c.l.b16 %v184
      %v255 = vunpack.c.l.b16 %v185
      %v256 = vunpack.c.l.b16 %v186
      %v257 = vunpack.c.l.b16 %v187
      %v258 = vunpack.c.l.b16 %v188
      %v259 = vunpack.c.l.b16 %v189
      %v260 = vunpack.c.l.b16 %v190
      %v261 = vunpack.c.l.b16 %v191
      %v262 = vunpack.c.l.b16 %v192
      %v263 = vunpack.c.l.b16 %v193
      %v264 = vunpack.c.l.b16 %v194
      %v265 = vunpack.c.l.b16 %v195
      %v266 = vunpack.c.l.b16 %v196
      %v267 = vunpack.c.l.b16 %v197
      %v268 = vunpack.c.l.b16 %v198
      %v269 = vunpack.c.l.b16 %v199
      %v270 = vunpack.c.l.b16 %v200
      %v271 = vunpack.c.l.b16 %v201
      %v272 = vunpack.c.l.b16 %v202
      %v273 = vunpack.c.l.b16 %v203
      %v274 = vunpack.c.l.b16 %v204
      %v275 = vunpack.c.l.b16 %v205
      %v276 = vunpack.c.l.b16 %v206
      %v277 = vpack.c.b16 %v246, %v245
      %v278 = vpack.c.b16 %v248, %v247
      %v279 = vpack.c.b16 %v250, %v249
      %v280 = vpack.c.b16 %v252, %v251
      %v281 = vpack.c.b16 %v254, %v253
      %v282 = vpack.c.b16 %v256, %v255
      %v283 = vpack.c.b16 %v258, %v257
      %v284 = vpack.c.b16 %v260, %v259
      %v285 = vpack.c.b16 %v262, %v261
      %v286 = vpack.c.b16 %v264, %v263
      %v287 = vpack.c.b16 %v266, %v265
      %v288 = vpack.c.b16 %v268, %v267
      %v289 = vpack.c.b16 %v270, %v269
      %v290 = vpack.c.b16 %v272, %v271
      %v291 = vpack.c.b16 %v274, %v273
      %v292 = vpack.c.b16 %v276, %v275
      %v299 = vunpack.c.l.b16 %v207
      %v300 = vunpack.c.l.b16 %v208
      %v301 = vunpack.c.l.b16 %v209
      %v302 = vunpack.c.l.b16 %v210
      %v303 = vunpack.c.l.b16 %v211
      %v304 = vunpack.c.l.b16 %v212
      %v305 = vpack.c.b16 %v300, %v299
      %v306 = vpack.c.b16 %v302, %v301
      %v307 = vpack.c.b16 %v304, %v303
      %vm311 = vcmask 392192
      %v313 = vsel %vm311, %v277, 0
      %v316 = vsel %vm311, %v278, 0
      %v319 = vsel %vm311, %v279, 0
      %v322 = vsel %vm311, %v280, 0
      %v325 = vsel %vm311, %v281, 0
      %v328 = vsel %vm311, %v282, 0
      %v331 = vsel %vm311, %v283, 0
      %v334 = vsel %vm311, %v284, 0
      %v337 = vsel %vm311, %v285, 0
      %v340 = vsel %vm311, %v286, 0
      %v343 = vsel %vm311, %v287, 0
      %v346 = vsel %vm311, %v288, 0
      %v349 = vsel %vm311, %v289, 0
      %v352 = vsel %vm311, %v290, 0
      %v355 = vsel %vm311, %v291, 0
      %v358 = vsel %vm311, %v292, 0
      %360 = vmatprep.subr.bf16.mxu0 0
      %361 = vmatpush1.bf16.msra.mxu0 %v305
      %362 = vmatprep.subr.bf16.mxu0 0
      %363 = vmatpush1.bf16.msra.mxu0 %v306
      %364 = vmatprep.subr.bf16.mxu0 0
      %365 = vmatpush1.bf16.msra.mxu0 %v307
      %366 = vmatprep.subr.bf16.mxu0 0
      %367 = vmatpush1.bf16.msra.mxu0 0
      %368 = vmatprep.subr.bf16.mxu0 0
      %369 = vmatpush1.bf16.msra.mxu0 0
      %370 = vmatprep.subr.bf16.mxu0 0
      %371 = vmatpush1.bf16.msra.mxu0 0
      %372 = vmatprep.subr.bf16.mxu0 0
      %373 = vmatpush1.bf16.msra.mxu0 0
      %374 = vmatprep.subr.bf16.mxu0 0
      %375 = vmatpush1.bf16.msra.mxu0 0
      %376 = vmatprep.subr.bf16.mxu0 0
      %377 = vmatpush1.bf16.msra.mxu0 0
      %378 = vmatprep.subr.bf16.mxu0 0
      %379 = vmatpush1.bf16.msra.mxu0 0
      %380 = vmatprep.subr.bf16.mxu0 0
      %381 = vmatpush1.bf16.msra.mxu0 0
      %382 = vmatprep.subr.bf16.mxu0 0
      %383 = vmatpush1.bf16.msra.mxu0 0
      %384 = vmatprep.subr.bf16.mxu0 0
      %385 = vmatpush1.bf16.msra.mxu0 0
      %386 = vmatprep.subr.bf16.mxu0 0
      %387 = vmatpush1.bf16.msra.mxu0 0
      %388 = vmatprep.subr.bf16.mxu0 0
      %389 = vmatpush1.bf16.msra.mxu0 0
      %390 = vmatprep.subr.bf16.mxu0 0
      %391 = vmatpush1.bf16.msra.mxu0 0
      %392 = vmatprep.mubr.bf16.mxu0 0
      %393 = vmatmul.mubr.bf16.gmra.mrb[0].mxu0 %v313
      %v394 = vpop.f32.mrb[0].mxu0
      %v395 = vadd.f32 0.0, %v394
      %v396 = vpop.f32.mrb[0].mxu0
      %v397 = vpop.f32.mrb[0].mxu0
      %v398 = vadd.f32 0.0, %v397
      %v399 = vpop.f32.mrb[0].mxu0
      %400 = vmatprep.mubr.bf16.mxu0 0
      %401 = vmatmul.mubr.bf16.gmra.mrb[0].mxu0 %v316
      %v402 = vpop.f32.mrb[0].mxu0
      %v403 = vadd.f32 0.0, %v402
      %v404 = vpop.f32.mrb[0].mxu0
      %v405 = vpop.f32.mrb[0].mxu0
      %v406 = vadd.f32 0.0, %v405
      %v407 = vpop.f32.mrb[0].mxu0
      %408 = vmatprep.mubr.bf16.mxu0 0
      %409 = vmatmul.mubr.bf16.gmra.mrb[0].mxu0 %v319
      %v410 = vpop.f32.mrb[0].mxu0
      %v411 = vadd.f32 0.0, %v410
      %v412 = vpop.f32.mrb[0].mxu0
      %v413 = vpop.f32.mrb[0].mxu0
      %v414 = vadd.f32 0.0, %v413
      %v415 = vpop.f32.mrb[0].mxu0
      %416 = vmatprep.mubr.bf16.mxu0 0
      %417 = vmatmul.mubr.bf16.gmra.mrb[0].mxu0 %v322
      %v418 = vpop.f32.mrb[0].mxu0
      %v419 = vadd.f32 0.0, %v418
      %v420 = vpop.f32.mrb[0].mxu0
      %v421 = vpop.f32.mrb[0].mxu0
      %v422 = vadd.f32 0.0, %v421
      %v423 = vpop.f32.mrb[0].mxu0
      %424 = vmatprep.mubr.bf16.mxu0 0
      %425 = vmatmul.mubr.bf16.gmra.mrb[0].mxu0 %v325
      %v426 = vpop.f32.mrb[0].mxu0
      %v427 = vadd.f32 0.0, %v426
      %v428 = vpop.f32.mrb[0].mxu0
      %v429 = vpop.f32.mrb[0].mxu0
      %v430 = vadd.f32 0.0, %v429
      %v431 = vpop.f32.mrb[0].mxu0
      %432 = vmatprep.mubr.bf16.mxu0 0
      %433 = vmatmul.mubr.bf16.gmra.mrb[0].mxu0 %v328
      %v434 = vpop.f32.mrb[0].mxu0
      %v435 = vadd.f32 0.0, %v434
      %v436 = vpop.f32.mrb[0].mxu0
      %v437 = vpop.f32.mrb[0].mxu0
      %v438 = vadd.f32 0.0, %v437
      %v439 = vpop.f32.mrb[0].mxu0
      %440 = vmatprep.mubr.bf16.mxu0 0
      %441 = vmatmul.mubr.bf16.gmra.mrb[0].mxu0 %v331
      %v442 = vpop.f32.mrb[0].mxu0
      %v443 = vadd.f32 0.0, %v442
      %v444 = vpop.f32.mrb[0].mxu0
      %v445 = vpop.f32.mrb[0].mxu0
      %v446 = vadd.f32 0.0, %v445
      %v447 = vpop.f32.mrb[0].mxu0
      %448 = vmatprep.mubr.bf16.mxu0 0
      %449 = vmatmul.mubr.bf16.gmra.mrb[0].mxu0 %v334
      %v450 = vpop.f32.mrb[0].mxu0
      %v451 = vadd.f32 0.0, %v450
      %v452 = vpop.f32.mrb[0].mxu0
      %v453 = vpop.f32.mrb[0].mxu0
      %v454 = vadd.f32 0.0, %v453
      %v455 = vpop.f32.mrb[0].mxu0
      %456 = vmatprep.mubr.bf16.mxu0 0
      %457 = vmatmul.mubr.bf16.gmra.mrb[0].mxu0 %v337
      %v458 = vpop.f32.mrb[0].mxu0
      %v459 = vadd.f32 0.0, %v458
      %v460 = vpop.f32.mrb[0].mxu0
      %v461 = vpop.f32.mrb[0].mxu0
      %v462 = vadd.f32 0.0, %v461
      %v463 = vpop.f32.mrb[0].mxu0
      %464 = vmatprep.mubr.bf16.mxu0 0
      %465 = vmatmul.mubr.bf16.gmra.mrb[0].mxu0 %v340
      %v466 = vpop.f32.mrb[0].mxu0
      %v467 = vadd.f32 0.0, %v466
      %v468 = vpop.f32.mrb[0].mxu0
      %v469 = vpop.f32.mrb[0].mxu0
      %v470 = vadd.f32 0.0, %v469
      %v471 = vpop.f32.mrb[0].mxu0
      %472 = vmatprep.mubr.bf16.mxu0 0
      %473 = vmatmul.mubr.bf16.gmra.mrb[0].mxu0 %v343
      %v474 = vpop.f32.mrb[0].mxu0
      %v475 = vadd.f32 0.0, %v474
      %v476 = vpop.f32.mrb[0].mxu0
      %v477 = vpop.f32.mrb[0].mxu0
      %v478 = vadd.f32 0.0, %v477
      %v479 = vpop.f32.mrb[0].mxu0
      %480 = vmatprep.mubr.bf16.mxu0 0
      %481 = vmatmul.mubr.bf16.gmra.mrb[0].mxu0 %v346
      %v482 = vpop.f32.mrb[0].mxu0
      %v483 = vadd.f32 0.0, %v482
      %v484 = vpop.f32.mrb[0].mxu0
      %v485 = vpop.f32.mrb[0].mxu0
      %v486 = vadd.f32 0.0, %v485
      %v487 = vpop.f32.mrb[0].mxu0
      %488 = vmatprep.mubr.bf16.mxu0 0
      %489 = vmatmul.mubr.bf16.gmra.mrb[0].mxu0 %v349
      %v490 = vpop.f32.mrb[0].mxu0
      %v491 = vadd.f32 0.0, %v490
      %v492 = vpop.f32.mrb[0].mxu0
      %v493 = vpop.f32.mrb[0].mxu0
      %v494 = vadd.f32 0.0, %v493
      %v495 = vpop.f32.mrb[0].mxu0
      %496 = vmatprep.mubr.bf16.mxu0 0
      %497 = vmatmul.mubr.bf16.gmra.mrb[0].mxu0 %v352
      %v498 = vpop.f32.mrb[0].mxu0
      %v499 = vadd.f32 0.0, %v498
      %v500 = vpop.f32.mrb[0].mxu0
      %v501 = vpop.f32.mrb[0].mxu0
      %v502 = vadd.f32 0.0, %v501
      %v503 = vpop.f32.mrb[0].mxu0
      %504 = vmatprep.mubr.bf16.mxu0 0
      %505 = vmatmul.mubr.bf16.gmra.mrb[0].mxu0 %v355
      %v506 = vpop.f32.mrb[0].mxu0
      %v507 = vadd.f32 0.0, %v506
      %v508 = vpop.f32.mrb[0].mxu0
      %v509 = vpop.f32.mrb[0].mxu0
      %v510 = vadd.f32 0.0, %v509
      %v511 = vpop.f32.mrb[0].mxu0
      %512 = vmatprep.mubr.bf16.mxu0 0
      %513 = vmatmul.mubr.bf16.gmra.mrb[0].mxu0 %v358
      %v514 = vpop.f32.mrb[0].mxu0
      %v515 = vadd.f32 0.0, %v514
      %v516 = vpop.f32.mrb[0].mxu0
      %v517 = vpop.f32.mrb[0].mxu0
      %v518 = vadd.f32 0.0, %v517
      %v519 = vpop.f32.mrb[0].mxu0
      %520 = vdwg.mxu0
      %v521 = vld [vmem:[%s2] sm:$0x1]
      %v523 = vlaneseq
      %v524 = vshrl.u32 %v523, 7
      %v525 = vsub.s32 0, %v524
      %v526 = vrot.slane %v521, %v525
      %v528 = vadd.f32 %v395, %v526
      %v529 = vadd.f32 %v398, %v526
      %v530 = vadd.f32 %v403, %v526
      %v531 = vadd.f32 %v406, %v526
      %v532 = vadd.f32 %v411, %v526
      %v533 = vadd.f32 %v414, %v526
      %v534 = vadd.f32 %v419, %v526
      %v535 = vadd.f32 %v422, %v526
      %v536 = vadd.f32 %v427, %v526
      %v537 = vadd.f32 %v430, %v526
      %v538 = vadd.f32 %v435, %v526
      %v539 = vadd.f32 %v438, %v526
      %v540 = vadd.f32 %v443, %v526
      %v541 = vadd.f32 %v446, %v526
      %v542 = vadd.f32 %v451, %v526
      %v543 = vadd.f32 %v454, %v526
      %v544 = vadd.f32 %v459, %v526
      %v545 = vadd.f32 %v462, %v526
      %v546 = vadd.f32 %v467, %v526
      %v547 = vadd.f32 %v470, %v526
      %v548 = vadd.f32 %v475, %v526
      %v549 = vadd.f32 %v478, %v526
      %v550 = vadd.f32 %v483, %v526
      %v551 = vadd.f32 %v486, %v526
      %v552 = vadd.f32 %v491, %v526
      %v553 = vadd.f32 %v494, %v526
      %v554 = vadd.f32 %v499, %v526
      %v555 = vadd.f32 %v502, %v526
      %v556 = vadd.f32 %v507, %v526
      %v557 = vadd.f32 %v510, %v526
      %v558 = vadd.f32 %v515, %v526
      %v559 = vadd.f32 %v518, %v526
      %vm560 = vcmp.ge.f32.partialorder %v528, 0.0
      %vm561 = vcmp.ge.f32.partialorder %v529, 0.0
      %vm562 = vcmp.ge.f32.partialorder %v530, 0.0
      %vm563 = vcmp.ge.f32.partialorder %v531, 0.0
      %vm564 = vcmp.ge.f32.partialorder %v532, 0.0
      %vm565 = vcmp.ge.f32.partialorder %v533, 0.0
      %vm566 = vcmp.ge.f32.partialorder %v534, 0.0
      %vm567 = vcmp.ge.f32.partialorder %v535, 0.0
      %vm568 = vcmp.ge.f32.partialorder %v536, 0.0
      %vm569 = vcmp.ge.f32.partialorder %v537, 0.0
      %vm570 = vcmp.ge.f32.partialorder %v538, 0.0
      %vm571 = vcmp.ge.f32.partialorder %v539, 0.0
      %vm572 = vcmp.ge.f32.partialorder %v540, 0.0
      %vm573 = vcmp.ge.f32.partialorder %v541, 0.0
      %vm574 = vcmp.ge.f32.partialorder %v542, 0.0
      %vm575 = vcmp.ge.f32.partialorder %v543, 0.0
      %vm576 = vcmp.ge.f32.partialorder %v544, 0.0
      %vm577 = vcmp.ge.f32.partialorder %v545, 0.0
      %vm578 = vcmp.ge.f32.partialorder %v546, 0.0
      %vm579 = vcmp.ge.f32.partialorder %v547, 0.0
      %vm580 = vcmp.ge.f32.partialorder %v548, 0.0
      %vm581 = vcmp.ge.f32.partialorder %v549, 0.0
      %vm582 = vcmp.ge.f32.partialorder %v550, 0.0
      %vm583 = vcmp.ge.f32.partialorder %v551, 0.0
      %vm584 = vcmp.ge.f32.partialorder %v552, 0.0
      %vm585 = vcmp.ge.f32.partialorder %v553, 0.0
      %vm586 = vcmp.ge.f32.partialorder %v554, 0.0
      %vm587 = vcmp.ge.f32.partialorder %v555, 0.0
      %vm588 = vcmp.ge.f32.partialorder %v556, 0.0
      %vm589 = vcmp.ge.f32.partialorder %v557, 0.0
      %vm590 = vcmp.ge.f32.partialorder %v558, 0.0
      %vm591 = vcmp.ge.f32.partialorder %v559, 0.0
      %v592 = vmul.f32 %v528, 0.2
      %v593 = vmul.f32 %v529, 0.2
      %v594 = vmul.f32 %v530, 0.2
      %v595 = vmul.f32 %v531, 0.2
      %v596 = vmul.f32 %v532, 0.2
      %v597 = vmul.f32 %v533, 0.2
      %v598 = vmul.f32 %v534, 0.2
      %v599 = vmul.f32 %v535, 0.2
      %v600 = vmul.f32 %v536, 0.2
      %v601 = vmul.f32 %v537, 0.2
      %v602 = vmul.f32 %v538, 0.2
      %v603 = vmul.f32 %v539, 0.2
      %v604 = vmul.f32 %v540, 0.2
      %v605 = vmul.f32 %v541, 0.2
      %v606 = vmul.f32 %v542, 0.2
      %v607 = vmul.f32 %v543, 0.2
      %v608 = vmul.f32 %v544, 0.2
      %v609 = vmul.f32 %v545, 0.2
      %v610 = vmul.f32 %v546, 0.2
      %v611 = vmul.f32 %v547, 0.2
      %v612 = vmul.f32 %v548, 0.2
      %v613 = vmul.f32 %v549, 0.2
      %v614 = vmul.f32 %v550, 0.2
      %v615 = vmul.f32 %v551, 0.2
      %v616 = vmul.f32 %v552, 0.2
      %v617 = vmul.f32 %v553, 0.2
      %v618 = vmul.f32 %v554, 0.2
      %v619 = vmul.f32 %v555, 0.2
      %v620 = vmul.f32 %v556, 0.2
      %v621 = vmul.f32 %v557, 0.2
      %v622 = vmul.f32 %v558, 0.2
      %v623 = vmul.f32 %v559, 0.2
      %v624 = vsel %vm560, %v528, %v592
      %v625 = vsel %vm561, %v529, %v593
      %v626 = vsel %vm562, %v530, %v594
      %v627 = vsel %vm563, %v531, %v595
      %v628 = vsel %vm564, %v532, %v596
      %v629 = vsel %vm565, %v533, %v597
      %v630 = vsel %vm566, %v534, %v598
      %v631 = vsel %vm567, %v535, %v599
      %v632 = vsel %vm568, %v536, %v600
      %v633 = vsel %vm569, %v537, %v601
      %v634 = vsel %vm570, %v538, %v602
      %v635 = vsel %vm571, %v539, %v603
      %v636 = vsel %vm572, %v540, %v604
      %v637 = vsel %vm573, %v541, %v605
      %v638 = vsel %vm574, %v542, %v606
      %v639 = vsel %vm575, %v543, %v607
      %v640 = vsel %vm576, %v544, %v608
      %v641 = vsel %vm577, %v545, %v609
      %v642 = vsel %vm578, %v546, %v610
      %v643 = vsel %vm579, %v547, %v611
      %v644 = vsel %vm580, %v548, %v612
      %v645 = vsel %vm581, %v549, %v613
      %v646 = vsel %vm582, %v550, %v614
      %v647 = vsel %vm583, %v551, %v615
      %v648 = vsel %vm584, %v552, %v616
      %v649 = vsel %vm585, %v553, %v617
      %v650 = vsel %vm586, %v554, %v618
      %v651 = vsel %vm587, %v555, %v619
      %v652 = vsel %vm588, %v556, %v620
      %v653 = vsel %vm589, %v557, %v621
      %v654 = vsel %vm590, %v558, %v622
      %v655 = vsel %vm591, %v559, %v623
      %v656 = vpack.c.bf16 %v625, %v624
      %v657 = vpack.c.bf16 %v627, %v626
      %v658 = vpack.c.bf16 %v629, %v628
      %v659 = vpack.c.bf16 %v631, %v630
      %v660 = vpack.c.bf16 %v633, %v632
      %v661 = vpack.c.bf16 %v635, %v634
      %v662 = vpack.c.bf16 %v637, %v636
      %v663 = vpack.c.bf16 %v639, %v638
      %v664 = vpack.c.bf16 %v641, %v640
      %v665 = vpack.c.bf16 %v643, %v642
      %v666 = vpack.c.bf16 %v645, %v644
      %v667 = vpack.c.bf16 %v647, %v646
      %v668 = vpack.c.bf16 %v649, %v648
      %v669 = vpack.c.bf16 %v651, %v650
      %v670 = vpack.c.bf16 %v653, %v652
      %v671 = vpack.c.bf16 %v655, %v654
      %v688 = vunpack.c.l.b16 %v656
      %v689 = vunpack.c.h.b16 %v656
      %v690 = vunpack.c.l.b16 %v657
      %v691 = vunpack.c.h.b16 %v657
      %v692 = vunpack.c.l.b16 %v658
      %v693 = vunpack.c.h.b16 %v658
      %v694 = vunpack.c.l.b16 %v659
      %v695 = vunpack.c.h.b16 %v659
      %v696 = vunpack.c.l.b16 %v660
      %v697 = vunpack.c.h.b16 %v660
      %v698 = vunpack.c.l.b16 %v661
      %v699 = vunpack.c.h.b16 %v661
      %v700 = vunpack.c.l.b16 %v662
      %v701 = vunpack.c.h.b16 %v662
      %v702 = vunpack.c.l.b16 %v663
      %v703 = vunpack.c.h.b16 %v663
      %v704 = vunpack.c.l.b16 %v664
      %v705 = vunpack.c.h.b16 %v664
      %v706 = vunpack.c.l.b16 %v665
      %v707 = vunpack.c.h.b16 %v665
      %v708 = vunpack.c.l.b16 %v666
      %v709 = vunpack.c.h.b16 %v666
      %v710 = vunpack.c.l.b16 %v667
      %v711 = vunpack.c.h.b16 %v667
      %v712 = vunpack.c.l.b16 %v668
      %v713 = vunpack.c.h.b16 %v668
      %v714 = vunpack.c.l.b16 %v669
      %v715 = vunpack.c.h.b16 %v669
      %v716 = vunpack.c.l.b16 %v670
      %v717 = vunpack.c.h.b16 %v670
      %v718 = vunpack.c.l.b16 %v671
      %v719 = vunpack.c.h.b16 %v671
      %v720 = vpack.c.b16 %v688, %v688
      %v721 = vpack.c.b16 %v689, %v689
      %v722 = vpack.c.b16 %v690, %v690
      %v723 = vpack.c.b16 %v691, %v691
      %v724 = vpack.c.b16 %v692, %v692
      %v725 = vpack.c.b16 %v693, %v693
      %v726 = vpack.c.b16 %v694, %v694
      %v727 = vpack.c.b16 %v695, %v695
      %v728 = vpack.c.b16 %v696, %v696
      %v729 = vpack.c.b16 %v697, %v697
      %v730 = vpack.c.b16 %v698, %v698
      %v731 = vpack.c.b16 %v699, %v699
      %v732 = vpack.c.b16 %v700, %v700
      %v733 = vpack.c.b16 %v701, %v701
      %v734 = vpack.c.b16 %v702, %v702
      %v735 = vpack.c.b16 %v703, %v703
      %v736 = vpack.c.b16 %v704, %v704
      %v737 = vpack.c.b16 %v705, %v705
      %v738 = vpack.c.b16 %v706, %v706
      %v739 = vpack.c.b16 %v707, %v707
      %v740 = vpack.c.b16 %v708, %v708
      %v741 = vpack.c.b16 %v709, %v709
      %v742 = vpack.c.b16 %v710, %v710
      %v743 = vpack.c.b16 %v711, %v711
      %v744 = vpack.c.b16 %v712, %v712
      %v745 = vpack.c.b16 %v713, %v713
      %v746 = vpack.c.b16 %v714, %v714
      %v747 = vpack.c.b16 %v715, %v715
      %v748 = vpack.c.b16 %v716, %v716
      %v749 = vpack.c.b16 %v717, %v717
      %v750 = vpack.c.b16 %v718, %v718
      %v751 = vpack.c.b16 %v719, %v719
      %vm784 = vcmask 60416
      %785 = vst.msk [vmem:[%s172] sm:$0xf] %vm784, %v720
      %786 = vst.msk [vmem:[%s172 + $0x4] sm:$0xf] %vm784, %v721
      %787 = vst.msk [vmem:[%s172 + $0x8] sm:$0xf] %vm784, %v722
      %788 = vst.msk [vmem:[%s172 + $0xc] sm:$0xf] %vm784, %v723
      %789 = vst.msk [vmem:[%s172 + $0x10] sm:$0xf] %vm784, %v724
      %790 = vst.msk [vmem:[%s172 + $0x14] sm:$0xf] %vm784, %v725
      %791 = vst.msk [vmem:[%s172 + $0x18] sm:$0xf] %vm784, %v726
      %792 = vst.msk [vmem:[%s172 + $0x1c] sm:$0xf] %vm784, %v727
      %793 = vst.msk [vmem:[%s172 + $0x20] sm:$0xf] %vm784, %v728
      %794 = vst.msk [vmem:[%s172 + $0x24] sm:$0xf] %vm784, %v729
      %795 = vst.msk [vmem:[%s172 + $0x28] sm:$0xf] %vm784, %v730
      %796 = vst.msk [vmem:[%s172 + $0x2c] sm:$0xf] %vm784, %v731
      %797 = vst.msk [vmem:[%s172 + $0x30] sm:$0xf] %vm784, %v732
      %798 = vst.msk [vmem:[%s172 + $0x34] sm:$0xf] %vm784, %v733
      %799 = vst.msk [vmem:[%s172 + $0x38] sm:$0xf] %vm784, %v734
      %800 = vst.msk [vmem:[%s172 + $0x3c] sm:$0xf] %vm784, %v735
      %801 = vst.msk [vmem:[%s172 + $0x40] sm:$0xf] %vm784, %v736
      %802 = vst.msk [vmem:[%s172 + $0x44] sm:$0xf] %vm784, %v737
      %803 = vst.msk [vmem:[%s172 + $0x48] sm:$0xf] %vm784, %v738
      %804 = vst.msk [vmem:[%s172 + $0x4c] sm:$0xf] %vm784, %v739
      %805 = vst.msk [vmem:[%s172 + $0x50] sm:$0xf] %vm784, %v740
      %806 = vst.msk [vmem:[%s172 + $0x54] sm:$0xf] %vm784, %v741
      %807 = vst.msk [vmem:[%s172 + $0x58] sm:$0xf] %vm784, %v742
      %808 = vst.msk [vmem:[%s172 + $0x5c] sm:$0xf] %vm784, %v743
      %809 = vst.msk [vmem:[%s172 + $0x60] sm:$0xf] %vm784, %v744
      %810 = vst.msk [vmem:[%s172 + $0x64] sm:$0xf] %vm784, %v745
      %811 = vst.msk [vmem:[%s172 + $0x68] sm:$0xf] %vm784, %v746
      %812 = vst.msk [vmem:[%s172 + $0x6c] sm:$0xf] %vm784, %v747
      %813 = vst.msk [vmem:[%s172 + $0x70] sm:$0xf] %vm784, %v748
      %814 = vst.msk [vmem:[%s172 + $0x74] sm:$0xf] %vm784, %v749
      %815 = vst.msk [vmem:[%s172 + $0x78] sm:$0xf] %vm784, %v750
      %816 = vst.msk [vmem:[%s172 + $0x7c] sm:$0xf] %vm784, %v751
      %s817 = smul.u32 32, %s14
      %p818 = scmp.lt.s32.totalorder %s817, 63
      %s819 = scalar_select %p818, %s817, 63
      %s820 = smul.addr %s819, 4
      %s821 = scalar_lea.vmem %s3, %s820
      // Predicated region
      $region33: #{discriminator_forward.8} parent=31 // pred_check
        %p822 = pneg %p100
      $region34: #{discriminator_forward.8} parent=31 // pred_check_branch
        %824 = sbr.rel (%p822) target = $region36
      $region35: #{discriminator_forward.8} parent=31 // pred_region
        %s825 = smul.u32 32, %s14
      $region36: #{discriminator_forward.8} parent=31 // pred_fallthru
        _
    $region32: #{discriminator_forward.8} parent=5 // pred_fallthru
      _
    %p826 = scmp.le.s32.totalorder 2, %s9
    // Predicated region
    $region37: #{discriminator_forward.8} parent=5 // pred_check
      %p827 = pneg %p826
    $region38: #{discriminator_forward.8} parent=5 // pred_check_branch
      %829 = sbr.rel (%p827) target = $region40
    $region39: #{discriminator_forward.8} parent=5 // pred_region
      %s830 = ssub.s32 %s9, 2
      // Predicated region
      $region41: #{discriminator_forward.8} parent=39 // pred_check
        %p831 = pneg %p106
      $region42: #{discriminator_forward.8} parent=39 // pred_check_branch
        %833 = sbr.rel (%p831) target = $region44
      $region43: #{discriminator_forward.8} parent=39 // pred_region
        %s834 = smul.u32 32, %s15
        %p835 = scmp.lt.s32.totalorder %s834, 63
        %s836 = scalar_select %p835, %s834, 63
        %s837 = smul.addr %s836, 4
        %s838 = scalar_lea.vmem %s3, %s837
      $region44: #{discriminator_forward.8} parent=39 // pred_fallthru
        _
    $region40: #{discriminator_forward.8} parent=5 // pred_fallthru
      _
  $region6: #{discriminator_forward.8} parent=0 // loop_footer
    %s13 = sadd.s32 1, %s9
  $region7: #{discriminator_forward.8} parent=0 // loop_footer_branch
    %8 = sbr.rel target = $region3
  $region8: #{discriminator_forward.8} parent=0 // loop_exit
    _

// kernel: discriminator_forward.9
$region0: #{discriminator_forward.9}
  #allocation0 [shape = 'u32[]', space=smem, size = 0x4, offset = 0x4, fixed_abs, tag = 'smem constant byte address 0x4 - core index']
  #allocation1 [shape = 'u32[144,128]{1,0:T(1,128)}', space=vmem, size = 0x12000, scoped, tag = 'internal scratch']
  %s0 = inlined_call_operand.vmem [shape: bf16[128,128], index: 0, kind: input, shape index: {}]
  %s1 = inlined_call_operand.vmem [shape: bf16[128,128], index: 1, kind: input, shape index: {}]
  %s2 = inlined_call_operand.vmem [shape: bf16[128,16], index: 2, kind: output, shape index: {0}]
  %s3 = inlined_call_operand.vmem [shape: f32[1,2,16], index: 3, kind: output, shape index: {1}]
  %4 = xla_tuple %s2, %s3
  %s5 = sld [smem:[#allocation0]]
  $region26: #{discriminator_forward.9} parent=0
    _
  %s7 = ssub.s32 1, %s5
  %s8 = scalar_select 0, %s7, %s5
  // Predicated region
  $region2: #{discriminator_forward.9} parent=0 // pred_check
    _
  $region3: #{discriminator_forward.9} parent=0 // pred_check_branch
    %10 = sbr.rel (0) target = $region5
  $region4: #{discriminator_forward.9} parent=0 // pred_region
    _
  $region5: #{discriminator_forward.9} parent=0 // pred_fallthru
    _
  // Predicated region
  $region6: #{discriminator_forward.9} parent=0 // pred_check
    _
  $region7: #{discriminator_forward.9} parent=0 // pred_check_branch
    %12 = sbr.rel (0) target = $region9
  $region8: #{discriminator_forward.9} parent=0 // pred_region
    _
  $region9: #{discriminator_forward.9} parent=0 // pred_fallthru
    _
  %v14 = vld [vmem:[%s0] sm:$0xf]
  %v15 = vld [vmem:[%s0 + $0x4] sm:$0xf]
  %v16 = vld [vmem:[%s0 + $0x8] sm:$0xf]
  %v17 = vld [vmem:[%s0 + $0xc] sm:$0xf]
  %v18 = vld [vmem:[%s0 + $0x10] sm:$0xf]
  %v19 = vld [vmem:[%s0 + $0x14] sm:$0xf]
  %v20 = vld [vmem:[%s0 + $0x18] sm:$0xf]
  %v21 = vld [vmem:[%s0 + $0x1c] sm:$0xf]
  %v22 = vld [vmem:[%s0 + $0x20] sm:$0xf]
  %v23 = vld [vmem:[%s0 + $0x24] sm:$0xf]
  %v24 = vld [vmem:[%s0 + $0x28] sm:$0xf]
  %v25 = vld [vmem:[%s0 + $0x2c] sm:$0xf]
  %v26 = vld [vmem:[%s0 + $0x30] sm:$0xf]
  %v27 = vld [vmem:[%s0 + $0x34] sm:$0xf]
  %v28 = vld [vmem:[%s0 + $0x38] sm:$0xf]
  %v29 = vld [vmem:[%s0 + $0x3c] sm:$0xf]
  %v30 = vld [vmem:[%s1] sm:$0xf]
  %v31 = vld [vmem:[%s1 + $0x4] sm:$0xf]
  %v32 = vld [vmem:[%s1 + $0x8] sm:$0xf]
  %v33 = vld [vmem:[%s1 + $0xc] sm:$0xf]
  %v34 = vld [vmem:[%s1 + $0x10] sm:$0xf]
  %v35 = vld [vmem:[%s1 + $0x14] sm:$0xf]
  %v36 = vld [vmem:[%s1 + $0x18] sm:$0xf]
  %v37 = vld [vmem:[%s1 + $0x1c] sm:$0xf]
  %v38 = vld [vmem:[%s1 + $0x20] sm:$0xf]
  %v39 = vld [vmem:[%s1 + $0x24] sm:$0xf]
  %v40 = vld [vmem:[%s1 + $0x28] sm:$0xf]
  %v41 = vld [vmem:[%s1 + $0x2c] sm:$0xf]
  %v42 = vld [vmem:[%s1 + $0x30] sm:$0xf]
  %v43 = vld [vmem:[%s1 + $0x34] sm:$0xf]
  %v44 = vld [vmem:[%s1 + $0x38] sm:$0xf]
  %v45 = vld [vmem:[%s1 + $0x3c] sm:$0xf]
  %v62 = vunpack.c.l.b16 %v14
  %v63 = vunpack.c.l.b16 %v15
  %v64 = vunpack.c.l.b16 %v16
  %v65 = vunpack.c.l.b16 %v17
  %v66 = vunpack.c.l.b16 %v18
  %v67 = vunpack.c.l.b16 %v19
  %v68 = vunpack.c.l.b16 %v20
  %v69 = vunpack.c.l.b16 %v21
  %v70 = vunpack.c.l.b16 %v22
  %v71 = vunpack.c.l.b16 %v23
  %v72 = vunpack.c.l.b16 %v24
  %v73 = vunpack.c.l.b16 %v25
  %v74 = vunpack.c.l.b16 %v26
  %v75 = vunpack.c.l.b16 %v27
  %v76 = vunpack.c.l.b16 %v28
  %v77 = vunpack.c.l.b16 %v29
  %v78 = vpack.c.b16 %v63, %v62
  %v79 = vpack.c.b16 %v65, %v64
  %v80 = vpack.c.b16 %v67, %v66
  %v81 = vpack.c.b16 %v69, %v68
  %v82 = vpack.c.b16 %v71, %v70
  %v83 = vpack.c.b16 %v73, %v72
  %v84 = vpack.c.b16 %v75, %v74
  %v85 = vpack.c.b16 %v77, %v76
  %v110 = vunpack.c.l.b16 %v30
  %v111 = vunpack.c.l.b16 %v31
  %v112 = vunpack.c.l.b16 %v32
  %v113 = vunpack.c.l.b16 %v33
  %v114 = vunpack.c.l.b16 %v34
  %v115 = vunpack.c.l.b16 %v35
  %v116 = vunpack.c.l.b16 %v36
  %v117 = vunpack.c.l.b16 %v37
  %v118 = vunpack.c.l.b16 %v38
  %v119 = vunpack.c.l.b16 %v39
  %v120 = vunpack.c.l.b16 %v40
  %v121 = vunpack.c.l.b16 %v41
  %v122 = vunpack.c.l.b16 %v42
  %v123 = vunpack.c.l.b16 %v43
  %v124 = vunpack.c.l.b16 %v44
  %v125 = vunpack.c.l.b16 %v45
  %v126 = vpack.c.b16 %v111, %v110
  %v127 = vpack.c.b16 %v113, %v112
  %v128 = vpack.c.b16 %v115, %v114
  %v129 = vpack.c.b16 %v117, %v116
  %v130 = vpack.c.b16 %v119, %v118
  %v131 = vpack.c.b16 %v121, %v120
  %v132 = vpack.c.b16 %v123, %v122
  %v133 = vpack.c.b16 %v125, %v124
  %142 = vmatprep.subr.bf16.mxu0 0
  %143 = vmatpush1.bf16.msra.mxu0 %v126
  %144 = vmatprep.subr.bf16.mxu0 0
  %145 = vmatpush1.bf16.msra.mxu0 %v127
  %146 = vmatprep.subr.bf16.mxu0 0
  %147 = vmatpush1.bf16.msra.mxu0 %v128
  %148 = vmatprep.subr.bf16.mxu0 0
  %149 = vmatpush1.bf16.msra.mxu0 %v129
  %150 = vmatprep.subr.bf16.mxu0 0
  %151 = vmatpush1.bf16.msra.mxu0 %v130
  %152 = vmatprep.subr.bf16.mxu0 0
  %153 = vmatpush1.bf16.msra.mxu0 %v131
  %154 = vmatprep.subr.bf16.mxu0 0
  %155 = vmatpush1.bf16.msra.mxu0 %v132
  %156 = vmatprep.subr.bf16.mxu0 0
  %157 = vmatpush1.bf16.msra.mxu0 %v133
  %158 = vmatprep.subr.bf16.mxu0 0
  %159 = vmatpush1.bf16.msra.mxu0 0
  %160 = vmatprep.subr.bf16.mxu0 0
  %161 = vmatpush1.bf16.msra.mxu0 0
  %162 = vmatprep.subr.bf16.mxu0 0
  %163 = vmatpush1.bf16.msra.mxu0 0
  %164 = vmatprep.subr.bf16.mxu0 0
  %165 = vmatpush1.bf16.msra.mxu0 0
  %166 = vmatprep.subr.bf16.mxu0 0
  %167 = vmatpush1.bf16.msra.mxu0 0
  %168 = vmatprep.subr.bf16.mxu0 0
  %169 = vmatpush1.bf16.msra.mxu0 0
  %170 = vmatprep.subr.bf16.mxu0 0
  %171 = vmatpush1.bf16.msra.mxu0 0
  %172 = vmatprep.subr.bf16.mxu0 0
  %173 = vmatpush1.bf16.msra.mxu0 0
  %174 = vmatprep.mubr.bf16.mxu0 0
  %175 = vmatmul.mubr.bf16.gmra.mrb[0].mxu0 %v78
  %v176 = vpop.f32.mrb[0].mxu0
  %v177 = vadd.f32 0.0, %v176
  %v178 = vpop.f32.mrb[0].mxu0
  %v179 = vpop.f32.mrb[0].mxu0
  %v180 = vadd.f32 0.0, %v179
  %v181 = vpop.f32.mrb[0].mxu0
  %182 = vmatprep.mubr.bf16.mxu0 0
  %183 = vmatmul.mubr.bf16.gmra.mrb[0].mxu0 %v79
  %v184 = vpop.f32.mrb[0].mxu0
  %v185 = vadd.f32 0.0, %v184
  %v186 = vpop.f32.mrb[0].mxu0
  %v187 = vpop.f32.mrb[0].mxu0
  %v188 = vadd.f32 0.0, %v187
  %v189 = vpop.f32.mrb[0].mxu0
  %190 = vmatprep.mubr.bf16.mxu0 0
  %191 = vmatmul.mubr.bf16.gmra.mrb[0].mxu0 %v80
  %v192 = vpop.f32.mrb[0].mxu0
  %v193 = vadd.f32 0.0, %v192
  %v194 = vpop.f32.mrb[0].mxu0
  %v195 = vpop.f32.mrb[0].mxu0
  %v196 = vadd.f32 0.0, %v195
  %v197 = vpop.f32.mrb[0].mxu0
  %198 = vmatprep.mubr.bf16.mxu0 0
  %199 = vmatmul.mubr.bf16.gmra.mrb[0].mxu0 %v81
  %v200 = vpop.f32.mrb[0].mxu0
  %v201 = vadd.f32 0.0, %v200
  %v202 = vpop.f32.mrb[0].mxu0
  %v203 = vpop.f32.mrb[0].mxu0
  %v204 = vadd.f32 0.0, %v203
  %v205 = vpop.f32.mrb[0].mxu0
  %206 = vmatprep.mubr.bf16.mxu0 0
  %207 = vmatmul.mubr.bf16.gmra.mrb[0].mxu0 %v82
  %v208 = vpop.f32.mrb[0].mxu0
  %v209 = vadd.f32 0.0, %v208
  %v210 = vpop.f32.mrb[0].mxu0
  %v211 = vpop.f32.mrb[0].mxu0
  %v212 = vadd.f32 0.0, %v211
  %v213 = vpop.f32.mrb[0].mxu0
  %214 = vmatprep.mubr.bf16.mxu0 0
  %215 = vmatmul.mubr.bf16.gmra.mrb[0].mxu0 %v83
  %v216 = vpop.f32.mrb[0].mxu0
  %v217 = vadd.f32 0.0, %v216
  %v218 = vpop.f32.mrb[0].mxu0
  %v219 = vpop.f32.mrb[0].mxu0
  %v220 = vadd.f32 0.0, %v219
  %v221 = vpop.f32.mrb[0].mxu0
  %222 = vmatprep.mubr.bf16.mxu0 0
  %223 = vmatmul.mubr.bf16.gmra.mrb[0].mxu0 %v84
  %v224 = vpop.f32.mrb[0].mxu0
  %v225 = vadd.f32 0.0, %v224
  %v226 = vpop.f32.mrb[0].mxu0
  %v227 = vpop.f32.mrb[0].mxu0
  %v228 = vadd.f32 0.0, %v227
  %v229 = vpop.f32.mrb[0].mxu0
  %230 = vmatprep.mubr.bf16.mxu0 0
  %231 = vmatmul.mubr.bf16.gmra.mrb[0].mxu0 %v85
  %v232 = vpop.f32.mrb[0].mxu0
  %v233 = vadd.f32 0.0, %v232
  %v234 = vpop.f32.mrb[0].mxu0
  %v235 = vpop.f32.mrb[0].mxu0
  %v236 = vadd.f32 0.0, %v235
  %v237 = vpop.f32.mrb[0].mxu0
  %238 = vdwg.mxu0
  %v239 = vpack.c.bf16 %v180, %v177
  %v240 = vpack.c.bf16 %v188, %v185
  %v241 = vpack.c.bf16 %v196, %v193
  %v242 = vpack.c.bf16 %v204, %v201
  %v243 = vpack.c.bf16 %v212, %v209
  %v244 = vpack.c.bf16 %v220, %v217
  %v245 = vpack.c.bf16 %v228, %v225
  %v246 = vpack.c.bf16 %v236, %v233
  %v255 = vunpack.c.l.b16 %v239
  %v256 = vunpack.c.h.b16 %v239
  %v257 = vunpack.c.l.b16 %v240
  %v258 = vunpack.c.h.b16 %v240
  %v259 = vunpack.c.l.b16 %v241
  %v260 = vunpack.c.h.b16 %v241
  %v261 = vunpack.c.l.b16 %v242
  %v262 = vunpack.c.h.b16 %v242
  %v263 = vunpack.c.l.b16 %v243
  %v264 = vunpack.c.h.b16 %v243
  %v265 = vunpack.c.l.b16 %v244
  %v266 = vunpack.c.h.b16 %v244
  %v267 = vunpack.c.l.b16 %v245
  %v268 = vunpack.c.h.b16 %v245
  %v269 = vunpack.c.l.b16 %v246
  %v270 = vunpack.c.h.b16 %v246
  %v271 = vpack.c.b16 %v255, %v255
  %v272 = vpack.c.b16 %v256, %v256
  %v273 = vpack.c.b16 %v257, %v257
  %v274 = vpack.c.b16 %v258, %v258
  %v275 = vpack.c.b16 %v259, %v259
  %v276 = vpack.c.b16 %v260, %v260
  %v277 = vpack.c.b16 %v261, %v261
  %v278 = vpack.c.b16 %v262, %v262
  %v279 = vpack.c.b16 %v263, %v263
  %v280 = vpack.c.b16 %v264, %v264
  %v281 = vpack.c.b16 %v265, %v265
  %v282 = vpack.c.b16 %v266, %v266
  %v283 = vpack.c.b16 %v267, %v267
  %v284 = vpack.c.b16 %v268, %v268
  %v285 = vpack.c.b16 %v269, %v269
  %v286 = vpack.c.b16 %v270, %v270
  %vm303 = vcmask 125952
  %304 = vst.msk [vmem:[%s2] sm:$0xf] %vm303, %v271
  %305 = vst.msk [vmem:[%s2 + $0x4] sm:$0xf] %vm303, %v272
  %306 = vst.msk [vmem:[%s2 + $0x8] sm:$0xf] %vm303, %v273
  %307 = vst.msk [vmem:[%s2 + $0xc] sm:$0xf] %vm303, %v274
  %308 = vst.msk [vmem:[%s2 + $0x10] sm:$0xf] %vm303, %v275
  %309 = vst.msk [vmem:[%s2 + $0x14] sm:$0xf] %vm303, %v276
  %310 = vst.msk [vmem:[%s2 + $0x18] sm:$0xf] %vm303, %v277
  %311 = vst.msk [vmem:[%s2 + $0x1c] sm:$0xf] %vm303, %v278
  %312 = vst.msk [vmem:[%s2 + $0x20] sm:$0xf] %vm303, %v279
  %313 = vst.msk [vmem:[%s2 + $0x24] sm:$0xf] %vm303, %v280
  %314 = vst.msk [vmem:[%s2 + $0x28] sm:$0xf] %vm303, %v281
  %315 = vst.msk [vmem:[%s2 + $0x2c] sm:$0xf] %vm303, %v282
  %316 = vst.msk [vmem:[%s2 + $0x30] sm:$0xf] %vm303, %v283
  %317 = vst.msk [vmem:[%s2 + $0x34] sm:$0xf] %vm303, %v284
  %318 = vst.msk [vmem:[%s2 + $0x38] sm:$0xf] %vm303, %v285
  %319 = vst.msk [vmem:[%s2 + $0x3c] sm:$0xf] %vm303, %v286
  %vm320 = vcmask 130048
  %v321 = vsel %vm320, %v177, 0.0
  %v322 = vsel %vm320, %v180, 0.0
  %v323 = vadd.f32 %v321, %v322
  %v324 = vsel %vm320, %v185, 0.0
  %v325 = vadd.f32 %v323, %v324
  %v326 = vsel %vm320, %v188, 0.0
  %v327 = vadd.f32 %v325, %v326
  %v328 = vsel %vm320, %v193, 0.0
  %v329 = vadd.f32 %v327, %v328
  %v330 = vsel %vm320, %v196, 0.0
  %v331 = vadd.f32 %v329, %v330
  %v332 = vsel %vm320, %v201, 0.0
  %v333 = vadd.f32 %v331, %v332
  %v334 = vsel %vm320, %v204, 0.0
  %v335 = vadd.f32 %v333, %v334
  %v336 = vsel %vm320, %v209, 0.0
  %v337 = vadd.f32 %v335, %v336
  %v338 = vsel %vm320, %v212, 0.0
  %v339 = vadd.f32 %v337, %v338
  %v340 = vsel %vm320, %v217, 0.0
  %v341 = vadd.f32 %v339, %v340
  %v342 = vsel %vm320, %v220, 0.0
  %v343 = vadd.f32 %v341, %v342
  %v344 = vsel %vm320, %v225, 0.0
  %v345 = vadd.f32 %v343, %v344
  %v346 = vsel %vm320, %v228, 0.0
  %v347 = vadd.f32 %v345, %v346
  %v348 = vsel %vm320, %v233, 0.0
  %v349 = vadd.f32 %v347, %v348
  %v350 = vsel %vm320, %v236, 0.0
  %v351 = vadd.f32 %v349, %v350
  %v352 = vrot.slane %v351, 4
  %v353 = vadd.f32 %v351, %v352
  %v354 = vrot.slane %v353, 2
  %v355 = vadd.f32 %v353, %v354
  %v356 = vrot.slane %v355, 1
  %v357 = vadd.f32 %v355, %v356
  %v358 = vmul.f32 %v177, %v177
  %v359 = vmul.f32 %v180, %v180
  %v360 = vmul.f32 %v185, %v185
  %v361 = vmul.f32 %v188, %v188
  %v362 = vmul.f32 %v193, %v193
  %v363 = vmul.f32 %v196, %v196
  %v364 = vmul.f32 %v201, %v201
  %v365 = vmul.f32 %v204, %v204
  %v366 = vmul.f32 %v209, %v209
  %v367 = vmul.f32 %v212, %v212
  %v368 = vmul.f32 %v217, %v217
  %v369 = vmul.f32 %v220, %v220
  %v370 = vmul.f32 %v225, %v225
  %v371 = vmul.f32 %v228, %v228
  %v372 = vmul.f32 %v233, %v233
  %v373 = vmul.f32 %v236, %v236
  %v374 = vsel %vm320, %v358, 0.0
  %v375 = vsel %vm320, %v359, 0.0
  %v376 = vadd.f32 %v374, %v375
  %v377 = vsel %vm320, %v360, 0.0
  %v378 = vadd.f32 %v376, %v377
  %v379 = vsel %vm320, %v361, 0.0
  %v380 = vadd.f32 %v378, %v379
  %v381 = vsel %vm320, %v362, 0.0
  %v382 = vadd.f32 %v380, %v381
  %v383 = vsel %vm320, %v363, 0.0
  %v384 = vadd.f32 %v382, %v383
  %v385 = vsel %vm320, %v364, 0.0
  %v386 = vadd.f32 %v384, %v385
  %v387 = vsel %vm320, %v365, 0.0
  %v388 = vadd.f32 %v386, %v387
  %v389 = vsel %vm320, %v366, 0.0
  %v390 = vadd.f32 %v388, %v389
  %v391 = vsel %vm320, %v367, 0.0
  %v392 = vadd.f32 %v390, %v391
  %v393 = vsel %vm320, %v368, 0.0
  %v394 = vadd.f32 %v392, %v393
  %v395 = vsel %vm320, %v369, 0.0
  %v396 = vadd.f32 %v394, %v395
  %v397 = vsel %vm320, %v370, 0.0
  %v398 = vadd.f32 %v396, %v397
  %v399 = vsel %vm320, %v371, 0.0
  %v400 = vadd.f32 %v398, %v399
  %v401 = vsel %vm320, %v372, 0.0
  %v402 = vadd.f32 %v400, %v401
  %v403 = vsel %vm320, %v373, 0.0
  %v404 = vadd.f32 %v402, %v403
  %v405 = vrot.slane %v404, 4
  %v406 = vadd.f32 %v404, %v405
  %v407 = vrot.slane %v406, 2
  %v408 = vadd.f32 %v406, %v407
  %v409 = vrot.slane %v408, 1
  %v410 = vadd.f32 %v408, %v409
  %vm411 = vcmask 1040384
  %v412 = vsel %vm411, %v357, %v410
  %vm413 = vcmask 123904
  %414 = vst.msk [vmem:[%s3] sm:$0x3] %vm413, %v412
  // Predicated region
  $region10: #{discriminator_forward.9} parent=0 // pred_check
    _
  $region11: #{discriminator_forward.9} parent=0 // pred_check_branch
    %416 = sbr.rel (0) target = $region13
  $region12: #{discriminator_forward.9} parent=0 // pred_region
    _
  $region13: #{discriminator_forward.9} parent=0 // pred_fallthru
    _
  // Predicated region
  $region14: #{discriminator_forward.9} parent=0 // pred_check
    _
  $region15: #{discriminator_forward.9} parent=0 // pred_check_branch
    %418 = sbr.rel (0) target = $region17
  $region16: #{discriminator_forward.9} parent=0 // pred_region
    _
  $region17: #{discriminator_forward.9} parent=0 // pred_fallthru
    _
  // Predicated region
  $region18: #{discriminator_forward.9} parent=0 // pred_check
    _
  $region19: #{discriminator_forward.9} parent=0 // pred_check_branch
    %420 = sbr.rel (0) target = $region21
  $region20: #{discriminator_forward.9} parent=0 // pred_region
    _
  $region21: #{discriminator_forward.9} parent=0 // pred_fallthru
    _
  // Predicated region
  $region22: #{discriminator_forward.9} parent=0 // pred_check
    _
  $region23: #{discriminator_forward.9} parent=0 // pred_check_branch
    %422 = sbr.rel (0) target = $region25
  $region24: #{discriminator_forward.9} parent=0 // pred_region
    _
  $region25: #{discriminator_forward.9} parent=0 // pred_fallthru
    _

// kernel: discriminator_forward.10
$region0: #{discriminator_forward.10}
  #allocation0 [shape = 'u32[]', space=smem, size = 0x4, offset = 0x4, fixed_abs, tag = 'smem constant byte address 0x4 - core index']
  #allocation1 [shape = 'u32[144,128]{1,0:T(1,128)}', space=vmem, size = 0x12000, scoped, tag = 'internal scratch']
  %s0 = inlined_call_operand.vmem [shape: bf16[128,16], index: 0, kind: input, shape index: {}]
  %s1 = inlined_call_operand.vmem [shape: f32[1,16], index: 1, kind: input, shape index: {}]
  %s2 = inlined_call_operand.vmem [shape: f32[1,16], index: 2, kind: input, shape index: {}]
  %s3 = inlined_call_operand.vmem [shape: bf16[128,16], index: 3, kind: output, shape index: {}]
  %s4 = sld [smem:[#allocation0]]
  $region22: #{discriminator_forward.10} parent=0
    _
  %s6 = ssub.s32 1, %s4
  %s7 = scalar_select 0, %s6, %s4
  // Predicated region
  $region2: #{discriminator_forward.10} parent=0 // pred_check
    _
  $region3: #{discriminator_forward.10} parent=0 // pred_check_branch
    %9 = sbr.rel (0) target = $region5
  $region4: #{discriminator_forward.10} parent=0 // pred_region
    _
  $region5: #{discriminator_forward.10} parent=0 // pred_fallthru
    _
  // Predicated region
  $region6: #{discriminator_forward.10} parent=0 // pred_check
    _
  $region7: #{discriminator_forward.10} parent=0 // pred_check_branch
    %11 = sbr.rel (0) target = $region9
  $region8: #{discriminator_forward.10} parent=0 // pred_region
    _
  $region9: #{discriminator_forward.10} parent=0 // pred_fallthru
    _
  // Predicated region
  $region10: #{discriminator_forward.10} parent=0 // pred_check
    _
  $region11: #{discriminator_forward.10} parent=0 // pred_check_branch
    %13 = sbr.rel (0) target = $region13
  $region12: #{discriminator_forward.10} parent=0 // pred_region
    _
  $region13: #{discriminator_forward.10} parent=0 // pred_fallthru
    _
  %v14 = vld [vmem:[%s0] sm:$0xf]
  %v15 = vld [vmem:[%s0 + $0x4] sm:$0xf]
  %v16 = vld [vmem:[%s0 + $0x8] sm:$0xf]
  %v17 = vld [vmem:[%s0 + $0xc] sm:$0xf]
  %v18 = vld [vmem:[%s0 + $0x10] sm:$0xf]
  %v19 = vld [vmem:[%s0 + $0x14] sm:$0xf]
  %v20 = vld [vmem:[%s0 + $0x18] sm:$0xf]
  %v21 = vld [vmem:[%s0 + $0x1c] sm:$0xf]
  %v22 = vld [vmem:[%s0 + $0x20] sm:$0xf]
  %v23 = vld [vmem:[%s0 + $0x24] sm:$0xf]
  %v24 = vld [vmem:[%s0 + $0x28] sm:$0xf]
  %v25 = vld [vmem:[%s0 + $0x2c] sm:$0xf]
  %v26 = vld [vmem:[%s0 + $0x30] sm:$0xf]
  %v27 = vld [vmem:[%s0 + $0x34] sm:$0xf]
  %v28 = vld [vmem:[%s0 + $0x38] sm:$0xf]
  %v29 = vld [vmem:[%s0 + $0x3c] sm:$0xf]
  %v30 = vunpack.c.l.bf16 %v14
  %v31 = vunpack.c.l.bf16 %v15
  %v32 = vunpack.c.l.bf16 %v16
  %v33 = vunpack.c.l.bf16 %v17
  %v34 = vunpack.c.l.bf16 %v18
  %v35 = vunpack.c.l.bf16 %v19
  %v36 = vunpack.c.l.bf16 %v20
  %v37 = vunpack.c.l.bf16 %v21
  %v38 = vunpack.c.l.bf16 %v22
  %v39 = vunpack.c.l.bf16 %v23
  %v40 = vunpack.c.l.bf16 %v24
  %v41 = vunpack.c.l.bf16 %v25
  %v42 = vunpack.c.l.bf16 %v26
  %v43 = vunpack.c.l.bf16 %v27
  %v44 = vunpack.c.l.bf16 %v28
  %v45 = vunpack.c.l.bf16 %v29
  %v46 = vld [vmem:[%s1] sm:$0x1]
  %v48 = vlaneseq
  %v49 = vshrl.u32 %v48, 7
  %v50 = vsub.s32 0, %v49
  %v51 = vrot.slane %v46, %v50
  %v53 = vmul.f32 %v30, %v51
  %v54 = vmul.f32 %v31, %v51
  %v55 = vmul.f32 %v32, %v51
  %v56 = vmul.f32 %v33, %v51
  %v57 = vmul.f32 %v34, %v51
  %v58 = vmul.f32 %v35, %v51
  %v59 = vmul.f32 %v36, %v51
  %v60 = vmul.f32 %v37, %v51
  %v61 = vmul.f32 %v38, %v51
  %v62 = vmul.f32 %v39, %v51
  %v63 = vmul.f32 %v40, %v51
  %v64 = vmul.f32 %v41, %v51
  %v65 = vmul.f32 %v42, %v51
  %v66 = vmul.f32 %v43, %v51
  %v67 = vmul.f32 %v44, %v51
  %v68 = vmul.f32 %v45, %v51
  %v69 = vld [vmem:[%s2] sm:$0x1]
  %v71 = vlaneseq
  %v72 = vshrl.u32 %v71, 7
  %v73 = vsub.s32 0, %v72
  %v74 = vrot.slane %v69, %v73
  %v76 = vadd.f32 %v53, %v74
  %v77 = vadd.f32 %v54, %v74
  %v78 = vadd.f32 %v55, %v74
  %v79 = vadd.f32 %v56, %v74
  %v80 = vadd.f32 %v57, %v74
  %v81 = vadd.f32 %v58, %v74
  %v82 = vadd.f32 %v59, %v74
  %v83 = vadd.f32 %v60, %v74
  %v84 = vadd.f32 %v61, %v74
  %v85 = vadd.f32 %v62, %v74
  %v86 = vadd.f32 %v63, %v74
  %v87 = vadd.f32 %v64, %v74
  %v88 = vadd.f32 %v65, %v74
  %v89 = vadd.f32 %v66, %v74
  %v90 = vadd.f32 %v67, %v74
  %v91 = vadd.f32 %v68, %v74
  %vm92 = vcmp.ge.f32.partialorder %v76, 0.0
  %vm93 = vcmp.ge.f32.partialorder %v77, 0.0
  %vm94 = vcmp.ge.f32.partialorder %v78, 0.0
  %vm95 = vcmp.ge.f32.partialorder %v79, 0.0
  %vm96 = vcmp.ge.f32.partialorder %v80, 0.0
  %vm97 = vcmp.ge.f32.partialorder %v81, 0.0
  %vm98 = vcmp.ge.f32.partialorder %v82, 0.0
  %vm99 = vcmp.ge.f32.partialorder %v83, 0.0
  %vm100 = vcmp.ge.f32.partialorder %v84, 0.0
  %vm101 = vcmp.ge.f32.partialorder %v85, 0.0
  %vm102 = vcmp.ge.f32.partialorder %v86, 0.0
  %vm103 = vcmp.ge.f32.partialorder %v87, 0.0
  %vm104 = vcmp.ge.f32.partialorder %v88, 0.0
  %vm105 = vcmp.ge.f32.partialorder %v89, 0.0
  %vm106 = vcmp.ge.f32.partialorder %v90, 0.0
  %vm107 = vcmp.ge.f32.partialorder %v91, 0.0
  %v108 = vmul.f32 %v76, 0.2
  %v109 = vmul.f32 %v77, 0.2
  %v110 = vmul.f32 %v78, 0.2
  %v111 = vmul.f32 %v79, 0.2
  %v112 = vmul.f32 %v80, 0.2
  %v113 = vmul.f32 %v81, 0.2
  %v114 = vmul.f32 %v82, 0.2
  %v115 = vmul.f32 %v83, 0.2
  %v116 = vmul.f32 %v84, 0.2
  %v117 = vmul.f32 %v85, 0.2
  %v118 = vmul.f32 %v86, 0.2
  %v119 = vmul.f32 %v87, 0.2
  %v120 = vmul.f32 %v88, 0.2
  %v121 = vmul.f32 %v89, 0.2
  %v122 = vmul.f32 %v90, 0.2
  %v123 = vmul.f32 %v91, 0.2
  %v124 = vsel %vm92, %v76, %v108
  %v125 = vsel %vm93, %v77, %v109
  %v126 = vsel %vm94, %v78, %v110
  %v127 = vsel %vm95, %v79, %v111
  %v128 = vsel %vm96, %v80, %v112
  %v129 = vsel %vm97, %v81, %v113
  %v130 = vsel %vm98, %v82, %v114
  %v131 = vsel %vm99, %v83, %v115
  %v132 = vsel %vm100, %v84, %v116
  %v133 = vsel %vm101, %v85, %v117
  %v134 = vsel %vm102, %v86, %v118
  %v135 = vsel %vm103, %v87, %v119
  %v136 = vsel %vm104, %v88, %v120
  %v137 = vsel %vm105, %v89, %v121
  %v138 = vsel %vm106, %v90, %v122
  %v139 = vsel %vm107, %v91, %v123
  %v140 = vpack.c.bf16 %v125, %v124
  %v141 = vpack.c.bf16 %v127, %v126
  %v142 = vpack.c.bf16 %v129, %v128
  %v143 = vpack.c.bf16 %v131, %v130
  %v144 = vpack.c.bf16 %v133, %v132
  %v145 = vpack.c.bf16 %v135, %v134
  %v146 = vpack.c.bf16 %v137, %v136
  %v147 = vpack.c.bf16 %v139, %v138
  %v156 = vunpack.c.l.b16 %v140
  %v157 = vunpack.c.h.b16 %v140
  %v158 = vunpack.c.l.b16 %v141
  %v159 = vunpack.c.h.b16 %v141
  %v160 = vunpack.c.l.b16 %v142
  %v161 = vunpack.c.h.b16 %v142
  %v162 = vunpack.c.l.b16 %v143
  %v163 = vunpack.c.h.b16 %v143
  %v164 = vunpack.c.l.b16 %v144
  %v165 = vunpack.c.h.b16 %v144
  %v166 = vunpack.c.l.b16 %v145
  %v167 = vunpack.c.h.b16 %v145
  %v168 = vunpack.c.l.b16 %v146
  %v169 = vunpack.c.h.b16 %v146
  %v170 = vunpack.c.l.b16 %v147
  %v171 = vunpack.c.h.b16 %v147
  %v172 = vpack.c.b16 %v156, %v156
  %v173 = vpack.c.b16 %v157, %v157
  %v174 = vpack.c.b16 %v158, %v158
  %v175 = vpack.c.b16 %v159, %v159
  %v176 = vpack.c.b16 %v160, %v160
  %v177 = vpack.c.b16 %v161, %v161
  %v178 = vpack.c.b16 %v162, %v162
  %v179 = vpack.c.b16 %v163, %v163
  %v180 = vpack.c.b16 %v164, %v164
  %v181 = vpack.c.b16 %v165, %v165
  %v182 = vpack.c.b16 %v166, %v166
  %v183 = vpack.c.b16 %v167, %v167
  %v184 = vpack.c.b16 %v168, %v168
  %v185 = vpack.c.b16 %v169, %v169
  %v186 = vpack.c.b16 %v170, %v170
  %v187 = vpack.c.b16 %v171, %v171
  %vm204 = vcmask 125952
  %205 = vst.msk [vmem:[%s3] sm:$0xf] %vm204, %v172
  %206 = vst.msk [vmem:[%s3 + $0x4] sm:$0xf] %vm204, %v173
  %207 = vst.msk [vmem:[%s3 + $0x8] sm:$0xf] %vm204, %v174
  %208 = vst.msk [vmem:[%s3 + $0xc] sm:$0xf] %vm204, %v175
  %209 = vst.msk [vmem:[%s3 + $0x10] sm:$0xf] %vm204, %v176
  %210 = vst.msk [vmem:[%s3 + $0x14] sm:$0xf] %vm204, %v177
  %211 = vst.msk [vmem:[%s3 + $0x18] sm:$0xf] %vm204, %v178
  %212 = vst.msk [vmem:[%s3 + $0x1c] sm:$0xf] %vm204, %v179
  %213 = vst.msk [vmem:[%s3 + $0x20] sm:$0xf] %vm204, %v180
  %214 = vst.msk [vmem:[%s3 + $0x24] sm:$0xf] %vm204, %v181
  %215 = vst.msk [vmem:[%s3 + $0x28] sm:$0xf] %vm204, %v182
  %216 = vst.msk [vmem:[%s3 + $0x2c] sm:$0xf] %vm204, %v183
  %217 = vst.msk [vmem:[%s3 + $0x30] sm:$0xf] %vm204, %v184
  %218 = vst.msk [vmem:[%s3 + $0x34] sm:$0xf] %vm204, %v185
  %219 = vst.msk [vmem:[%s3 + $0x38] sm:$0xf] %vm204, %v186
  %220 = vst.msk [vmem:[%s3 + $0x3c] sm:$0xf] %vm204, %v187
  // Predicated region
  $region14: #{discriminator_forward.10} parent=0 // pred_check
    _
  $region15: #{discriminator_forward.10} parent=0 // pred_check_branch
    %222 = sbr.rel (0) target = $region17
  $region16: #{discriminator_forward.10} parent=0 // pred_region
    _
  $region17: #{discriminator_forward.10} parent=0 // pred_fallthru
    _
  // Predicated region
  $region18: #{discriminator_forward.10} parent=0 // pred_check
    _
  $region19: #{discriminator_forward.10} parent=0 // pred_check_branch
    %224 = sbr.rel (0) target = $region21
  $region20: #{discriminator_forward.10} parent=0 // pred_region
    _
  $region21: #{discriminator_forward.10} parent=0 // pred_fallthru
    _

// kernel: discriminator_forward.11
$region0: #{discriminator_forward.11}
  #allocation0 [shape = 'u32[]', space=smem, size = 0x4, offset = 0x4, fixed_abs, tag = 'smem constant byte address 0x4 - core index']
  #allocation1 [shape = 'u32[144,128]{1,0:T(1,128)}', space=vmem, size = 0x12000, scoped, tag = 'internal scratch']
  %s0 = inlined_call_operand.vmem [shape: bf16[32,256], index: 0, kind: input, shape index: {}]
  %s1 = inlined_call_operand.vmem [shape: bf16[256,128], index: 1, kind: input, shape index: {}]
  %s2 = inlined_call_operand.vmem [shape: bf16[32,32], index: 2, kind: output, shape index: {0}]
  %s3 = inlined_call_operand.vmem [shape: f32[1,2,32], index: 3, kind: output, shape index: {1}]
  %4 = xla_tuple %s2, %s3
  %s5 = sld [smem:[#allocation0]]
  $region26: #{discriminator_forward.11} parent=0
    _
  %s7 = ssub.s32 1, %s5
  %s8 = scalar_select 0, %s7, %s5
  // Predicated region
  $region2: #{discriminator_forward.11} parent=0 // pred_check
    _
  $region3: #{discriminator_forward.11} parent=0 // pred_check_branch
    %10 = sbr.rel (0) target = $region5
  $region4: #{discriminator_forward.11} parent=0 // pred_region
    _
  $region5: #{discriminator_forward.11} parent=0 // pred_fallthru
    _
  // Predicated region
  $region6: #{discriminator_forward.11} parent=0 // pred_check
    _
  $region7: #{discriminator_forward.11} parent=0 // pred_check_branch
    %12 = sbr.rel (0) target = $region9
  $region8: #{discriminator_forward.11} parent=0 // pred_region
    _
  $region9: #{discriminator_forward.11} parent=0 // pred_fallthru
    _
  %v14 = vld [vmem:[%s0] sm:$0xff]
  %v15 = vld [vmem:[%s0 + $0x8] sm:$0xff]
  %v16 = vld [vmem:[%s0 + $0x10] sm:$0xff]
  %v17 = vld [vmem:[%s0 + $0x18] sm:$0xff]
  %v18 = vld [vmem:[%s1] sm:$0xf]
  %v19 = vld [vmem:[%s1 + $0x4] sm:$0xf]
  %v20 = vld [vmem:[%s1 + $0x8] sm:$0xf]
  %v21 = vld [vmem:[%s1 + $0xc] sm:$0xf]
  %v22 = vld [vmem:[%s1 + $0x10] sm:$0xf]
  %v23 = vld [vmem:[%s1 + $0x14] sm:$0xf]
  %v24 = vld [vmem:[%s1 + $0x18] sm:$0xf]
  %v25 = vld [vmem:[%s1 + $0x1c] sm:$0xf]
  %v26 = vld [vmem:[%s1 + $0x20] sm:$0xf]
  %v27 = vld [vmem:[%s1 + $0x24] sm:$0xf]
  %v28 = vld [vmem:[%s1 + $0x28] sm:$0xf]
  %v29 = vld [vmem:[%s1 + $0x2c] sm:$0xf]
  %v30 = vld [vmem:[%s1 + $0x30] sm:$0xf]
  %v31 = vld [vmem:[%s1 + $0x34] sm:$0xf]
  %v32 = vld [vmem:[%s1 + $0x38] sm:$0xf]
  %v33 = vld [vmem:[%s1 + $0x3c] sm:$0xf]
  %v34 = vld [vmem:[%s1 + $0x40] sm:$0xf]
  %v35 = vld [vmem:[%s1 + $0x44] sm:$0xf]
  %v36 = vld [vmem:[%s1 + $0x48] sm:$0xf]
  %v37 = vld [vmem:[%s1 + $0x4c] sm:$0xf]
  %v38 = vld [vmem:[%s1 + $0x50] sm:$0xf]
  %v39 = vld [vmem:[%s1 + $0x54] sm:$0xf]
  %v40 = vld [vmem:[%s1 + $0x58] sm:$0xf]
  %v41 = vld [vmem:[%s1 + $0x5c] sm:$0xf]
  %v42 = vld [vmem:[%s1 + $0x60] sm:$0xf]
  %v43 = vld [vmem:[%s1 + $0x64] sm:$0xf]
  %v44 = vld [vmem:[%s1 + $0x68] sm:$0xf]
  %v45 = vld [vmem:[%s1 + $0x6c] sm:$0xf]
  %v46 = vld [vmem:[%s1 + $0x70] sm:$0xf]
  %v47 = vld [vmem:[%s1 + $0x74] sm:$0xf]
  %v48 = vld [vmem:[%s1 + $0x78] sm:$0xf]
  %v49 = vld [vmem:[%s1 + $0x7c] sm:$0xf]
  %v54 = vunpack.c.l.b16 %v14
  %v55 = vunpack.c.h.b16 %v14
  %v56 = vunpack.c.l.b16 %v15
  %v57 = vunpack.c.h.b16 %v15
  %v58 = vunpack.c.l.b16 %v16
  %v59 = vunpack.c.h.b16 %v16
  %v60 = vunpack.c.l.b16 %v17
  %v61 = vunpack.c.h.b16 %v17
  %v62 = vpack.c.b16 %v56, %v54
  %v63 = vpack.c.b16 %v57, %v55
  %v64 = vpack.c.b16 %v60, %v58
  %v65 = vpack.c.b16 %v61, %v59
  %v102 = vunpack.c.l.b16 %v18
  %v103 = vunpack.c.l.b16 %v19
  %v104 = vunpack.c.l.b16 %v20
  %v105 = vunpack.c.l.b16 %v21
  %v106 = vunpack.c.l.b16 %v22
  %v107 = vunpack.c.l.b16 %v23
  %v108 = vunpack.c.l.b16 %v24
  %v109 = vunpack.c.l.b16 %v25
  %v110 = vunpack.c.l.b16 %v26
  %v111 = vunpack.c.l.b16 %v27
  %v112 = vunpack.c.l.b16 %v28
  %v113 = vunpack.c.l.b16 %v29
  %v114 = vunpack.c.l.b16 %v30
  %v115 = vunpack.c.l.b16 %v31
  %v116 = vunpack.c.l.b16 %v32
  %v117 = vunpack.c.l.b16 %v33
  %v118 = vunpack.c.l.b16 %v34
  %v119 = vunpack.c.l.b16 %v35
  %v120 = vunpack.c.l.b16 %v36
  %v121 = vunpack.c.l.b16 %v37
  %v122 = vunpack.c.l.b16 %v38
  %v123 = vunpack.c.l.b16 %v39
  %v124 = vunpack.c.l.b16 %v40
  %v125 = vunpack.c.l.b16 %v41
  %v126 = vunpack.c.l.b16 %v42
  %v127 = vunpack.c.l.b16 %v43
  %v128 = vunpack.c.l.b16 %v44
  %v129 = vunpack.c.l.b16 %v45
  %v130 = vunpack.c.l.b16 %v46
  %v131 = vunpack.c.l.b16 %v47
  %v132 = vunpack.c.l.b16 %v48
  %v133 = vunpack.c.l.b16 %v49
  %v134 = vpack.c.b16 %v103, %v102
  %v135 = vpack.c.b16 %v105, %v104
  %v136 = vpack.c.b16 %v107, %v106
  %v137 = vpack.c.b16 %v109, %v108
  %v138 = vpack.c.b16 %v111, %v110
  %v139 = vpack.c.b16 %v113, %v112
  %v140 = vpack.c.b16 %v115, %v114
  %v141 = vpack.c.b16 %v117, %v116
  %v142 = vpack.c.b16 %v119, %v118
  %v143 = vpack.c.b16 %v121, %v120
  %v144 = vpack.c.b16 %v123, %v122
  %v145 = vpack.c.b16 %v125, %v124
  %v146 = vpack.c.b16 %v127, %v126
  %v147 = vpack.c.b16 %v129, %v128
  %v148 = vpack.c.b16 %v131, %v130
  %v149 = vpack.c.b16 %v133, %v132
  %166 = vmatprep.subr.bf16.mxu0 0
  %167 = vmatpush1.bf16.msra.mxu0 %v134
  %168 = vmatprep.subr.bf16.mxu0 0
  %169 = vmatpush1.bf16.msra.mxu0 %v135
  %170 = vmatprep.subr.bf16.mxu0 0
  %171 = vmatpush1.bf16.msra.mxu0 %v136
  %172 = vmatprep.subr.bf16.mxu0 0
  %173 = vmatpush1.bf16.msra.mxu0 %v137
  %174 = vmatprep.subr.bf16.mxu0 0
  %175 = vmatpush1.bf16.msra.mxu0 %v138
  %176 = vmatprep.subr.bf16.mxu0 0
  %177 = vmatpush1.bf16.msra.mxu0 %v139
  %178 = vmatprep.subr.bf16.mxu0 0
  %179 = vmatpush1.bf16.msra.mxu0 %v140
  %180 = vmatprep.subr.bf16.mxu0 0
  %181 = vmatpush1.bf16.msra.mxu0 %v141
  %182 = vmatprep.subr.bf16.mxu0 0
  %183 = vmatpush1.bf16.msra.mxu0 %v142
  %184 = vmatprep.subr.bf16.mxu0 0
  %185 = vmatpush1.bf16.msra.mxu0 %v143
  %186 = vmatprep.subr.bf16.mxu0 0
  %187 = vmatpush1.bf16.msra.mxu0 %v144
  %188 = vmatprep.subr.bf16.mxu0 0
  %189 = vmatpush1.bf16.msra.mxu0 %v145
  %190 = vmatprep.subr.bf16.mxu0 0
  %191 = vmatpush1.bf16.msra.mxu0 %v146
  %192 = vmatprep.subr.bf16.mxu0 0
  %193 = vmatpush1.bf16.msra.mxu0 %v147
  %194 = vmatprep.subr.bf16.mxu0 0
  %195 = vmatpush1.bf16.msra.mxu0 %v148
  %196 = vmatprep.subr.bf16.mxu0 0
  %197 = vmatpush1.bf16.msra.mxu0 %v149
  %198 = vmatprep.mubr.bf16.mxu0 %v63
  %199 = vmatmul.mubr.bf16.gmra.mrb[0].mxu0 %v62
  %v200 = vpop.f32.mrb[0].mxu0
  %v201 = vadd.f32 0.0, %v200
  %v202 = vpop.f32.mrb[0].mxu0
  %v203 = vpop.f32.mrb[0].mxu0
  %v204 = vadd.f32 0.0, %v203
  %v205 = vpop.f32.mrb[0].mxu0
  %206 = vmatprep.mubr.bf16.mxu0 %v65
  %207 = vmatmul.mubr.bf16.gmra.mrb[0].mxu0 %v64
  %v208 = vpop.f32.mrb[0].mxu0
  %v209 = vadd.f32 0.0, %v208
  %v210 = vpop.f32.mrb[0].mxu0
  %v211 = vpop.f32.mrb[0].mxu0
  %v212 = vadd.f32 0.0, %v211
  %v213 = vpop.f32.mrb[0].mxu0
  %214 = vdwg.mxu0
  %v215 = vpack.c.bf16 %v204, %v201
  %v216 = vpack.c.bf16 %v212, %v209
  %v219 = vunpack.c.l.b16 %v215
  %v220 = vunpack.c.h.b16 %v215
  %v221 = vunpack.c.l.b16 %v216
  %v222 = vunpack.c.h.b16 %v216
  %v223 = vpack.c.b16 %v219, %v219
  %v224 = vpack.c.b16 %v220, %v220
  %v225 = vpack.c.b16 %v221, %v221
  %v226 = vpack.c.b16 %v222, %v222
  %vm231 = vcmask 257024
  %232 = vst.msk [vmem:[%s2] sm:$0xf] %vm231, %v223
  %233 = vst.msk [vmem:[%s2 + $0x4] sm:$0xf] %vm231, %v224
  %234 = vst.msk [vmem:[%s2 + $0x8] sm:$0xf] %vm231, %v225
  %235 = vst.msk [vmem:[%s2 + $0xc] sm:$0xf] %vm231, %v226
  %vm236 = vcmask 261120
  %v237 = vsel %vm236, %v201, 0.0
  %v238 = vsel %vm236, %v204, 0.0
  %v239 = vadd.f32 %v237, %v238
  %v240 = vsel %vm236, %v209, 0.0
  %v241 = vadd.f32 %v239, %v240
  %v242 = vsel %vm236, %v212, 0.0
  %v243 = vadd.f32 %v241, %v242
  %v244 = vrot.slane %v243, 4
  %v245 = vadd.f32 %v243, %v244
  %v246 = vrot.slane %v245, 2
  %v247 = vadd.f32 %v245, %v246
  %v248 = vrot.slane %v247, 1
  %v249 = vadd.f32 %v247, %v248
  %v250 = vmul.f32 %v201, %v201
  %v251 = vmul.f32 %v204, %v204
  %v252 = vmul.f32 %v209, %v209
  %v253 = vmul.f32 %v212, %v212
  %v254 = vsel %vm236, %v250, 0.0
  %v255 = vsel %vm236, %v251, 0.0
  %v256 = vadd.f32 %v254, %v255
  %v257 = vsel %vm236, %v252, 0.0
  %v258 = vadd.f32 %v256, %v257
  %v259 = vsel %vm236, %v253, 0.0
  %v260 = vadd.f32 %v258, %v259
  %v261 = vrot.slane %v260, 4
  %v262 = vadd.f32 %v260, %v261
  %v263 = vrot.slane %v262, 2
  %v264 = vadd.f32 %v262, %v263
  %v265 = vrot.slane %v264, 1
  %v266 = vadd.f32 %v264, %v265
  %vm267 = vcmask 1040384
  %v268 = vsel %vm267, %v249, %v266
  %vm269 = vcmask 254976
  %270 = vst.msk [vmem:[%s3] sm:$0x3] %vm269, %v268
  // Predicated region
  $region10: #{discriminator_forward.11} parent=0 // pred_check
    _
  $region11: #{discriminator_forward.11} parent=0 // pred_check_branch
    %272 = sbr.rel (0) target = $region13
  $region12: #{discriminator_forward.11} parent=0 // pred_region
    _
  $region13: #{discriminator_forward.11} parent=0 // pred_fallthru
    _
  // Predicated region
  $region14: #{discriminator_forward.11} parent=0 // pred_check
    _
  $region15: #{discriminator_forward.11} parent=0 // pred_check_branch
    %274 = sbr.rel (0) target = $region17
  $region16: #{discriminator_forward.11} parent=0 // pred_region
    _
  $region17: #{discriminator_forward.11} parent=0 // pred_fallthru
    _
  // Predicated region
  $region18: #{discriminator_forward.11} parent=0 // pred_check
    _
  $region19: #{discriminator_forward.11} parent=0 // pred_check_branch
    %276 = sbr.rel (0) target = $region21
  $region20: #{discriminator_forward.11} parent=0 // pred_region
    _
  $region21: #{discriminator_forward.11} parent=0 // pred_fallthru
    _
  // Predicated region
  $region22: #{discriminator_forward.11} parent=0 // pred_check
    _
  $region23: #{discriminator_forward.11} parent=0 // pred_check_branch
    %278 = sbr.rel (0) target = $region25
  $region24: #{discriminator_forward.11} parent=0 // pred_region
    _
  $region25: #{discriminator_forward.11} parent=0 // pred_fallthru
    _

// kernel: discriminator_forward.12
$region0: #{discriminator_forward.12}
  #allocation0 [shape = 'u32[]', space=smem, size = 0x4, offset = 0x4, fixed_abs, tag = 'smem constant byte address 0x4 - core index']
  #allocation1 [shape = 'u32[144,128]{1,0:T(1,128)}', space=vmem, size = 0x12000, scoped, tag = 'internal scratch']
  %s0 = inlined_call_operand.vmem [shape: bf16[32,32], index: 0, kind: input, shape index: {}]
  %s1 = inlined_call_operand.vmem [shape: f32[1,32], index: 1, kind: input, shape index: {}]
  %s2 = inlined_call_operand.vmem [shape: f32[1,32], index: 2, kind: input, shape index: {}]
  %s3 = inlined_call_operand.vmem [shape: bf16[32,32], index: 3, kind: output, shape index: {}]
  %s4 = sld [smem:[#allocation0]]
  $region22: #{discriminator_forward.12} parent=0
    _
  %s6 = ssub.s32 1, %s4
  %s7 = scalar_select 0, %s6, %s4
  // Predicated region
  $region2: #{discriminator_forward.12} parent=0 // pred_check
    _
  $region3: #{discriminator_forward.12} parent=0 // pred_check_branch
    %9 = sbr.rel (0) target = $region5
  $region4: #{discriminator_forward.12} parent=0 // pred_region
    _
  $region5: #{discriminator_forward.12} parent=0 // pred_fallthru
    _
  // Predicated region
  $region6: #{discriminator_forward.12} parent=0 // pred_check
    _
  $region7: #{discriminator_forward.12} parent=0 // pred_check_branch
    %11 = sbr.rel (0) target = $region9
  $region8: #{discriminator_forward.12} parent=0 // pred_region
    _
  $region9: #{discriminator_forward.12} parent=0 // pred_fallthru
    _
  // Predicated region
  $region10: #{discriminator_forward.12} parent=0 // pred_check
    _
  $region11: #{discriminator_forward.12} parent=0 // pred_check_branch
    %13 = sbr.rel (0) target = $region13
  $region12: #{discriminator_forward.12} parent=0 // pred_region
    _
  $region13: #{discriminator_forward.12} parent=0 // pred_fallthru
    _
  %v14 = vld [vmem:[%s0] sm:$0xf]
  %v15 = vld [vmem:[%s0 + $0x4] sm:$0xf]
  %v16 = vld [vmem:[%s0 + $0x8] sm:$0xf]
  %v17 = vld [vmem:[%s0 + $0xc] sm:$0xf]
  %v18 = vunpack.c.l.bf16 %v14
  %v19 = vunpack.c.l.bf16 %v15
  %v20 = vunpack.c.l.bf16 %v16
  %v21 = vunpack.c.l.bf16 %v17
  %v22 = vld [vmem:[%s1] sm:$0x1]
  %v24 = vlaneseq
  %v25 = vshrl.u32 %v24, 7
  %v26 = vsub.s32 0, %v25
  %v27 = vrot.slane %v22, %v26
  %v29 = vmul.f32 %v18, %v27
  %v30 = vmul.f32 %v19, %v27
  %v31 = vmul.f32 %v20, %v27
  %v32 = vmul.f32 %v21, %v27
  %v33 = vld [vmem:[%s2] sm:$0x1]
  %v35 = vlaneseq
  %v36 = vshrl.u32 %v35, 7
  %v37 = vsub.s32 0, %v36
  %v38 = vrot.slane %v33, %v37
  %v40 = vadd.f32 %v29, %v38
  %v41 = vadd.f32 %v30, %v38
  %v42 = vadd.f32 %v31, %v38
  %v43 = vadd.f32 %v32, %v38
  %vm44 = vcmp.ge.f32.partialorder %v40, 0.0
  %vm45 = vcmp.ge.f32.partialorder %v41, 0.0
  %vm46 = vcmp.ge.f32.partialorder %v42, 0.0
  %vm47 = vcmp.ge.f32.partialorder %v43, 0.0
  %v48 = vmul.f32 %v40, 0.2
  %v49 = vmul.f32 %v41, 0.2
  %v50 = vmul.f32 %v42, 0.2
  %v51 = vmul.f32 %v43, 0.2
  %v52 = vsel %vm44, %v40, %v48
  %v53 = vsel %vm45, %v41, %v49
  %v54 = vsel %vm46, %v42, %v50
  %v55 = vsel %vm47, %v43, %v51
  %v56 = vpack.c.bf16 %v53, %v52
  %v57 = vpack.c.bf16 %v55, %v54
  %v60 = vunpack.c.l.b16 %v56
  %v61 = vunpack.c.h.b16 %v56
  %v62 = vunpack.c.l.b16 %v57
  %v63 = vunpack.c.h.b16 %v57
  %v64 = vpack.c.b16 %v60, %v60
  %v65 = vpack.c.b16 %v61, %v61
  %v66 = vpack.c.b16 %v62, %v62
  %v67 = vpack.c.b16 %v63, %v63
  %vm72 = vcmask 257024
  %73 = vst.msk [vmem:[%s3] sm:$0xf] %vm72, %v64
  %74 = vst.msk [vmem:[%s3 + $0x4] sm:$0xf] %vm72, %v65
  %75 = vst.msk [vmem:[%s3 + $0x8] sm:$0xf] %vm72, %v66
  %76 = vst.msk [vmem:[%s3 + $0xc] sm:$0xf] %vm72, %v67
  // Predicated region
  $region14: #{discriminator_forward.12} parent=0 // pred_check
    _
  $region15: #{discriminator_forward.12} parent=0 // pred_check_branch
    %78 = sbr.rel (0) target = $region17
  $region16: #{discriminator_forward.12} parent=0 // pred_region
    _
  $region17: #{discriminator_forward.12} parent=0 // pred_fallthru
    _
  // Predicated region
  $region18: #{discriminator_forward.12} parent=0 // pred_check
    _
  $region19: #{discriminator_forward.12} parent=0 // pred_check_branch
    %80 = sbr.rel (0) target = $region21
  $region20: #{discriminator_forward.12} parent=0 // pred_region
    _
  $region21: #{discriminator_forward.12} parent=0 // pred_fallthru
    _

// kernel: discriminator_forward.14
$region0: #{discriminator_forward.14}
  #allocation0 [shape = 'u32[]', space=smem, size = 0x4, offset = 0x4, fixed_abs, tag = 'smem constant byte address 0x4 - core index']
  #allocation1 [shape = 'u32[144,128]{1,0:T(1,128)}', space=vmem, size = 0x12000, scoped, tag = 'internal scratch']
  %s0 = inlined_call_operand.vmem [shape: bf16[32,64], index: 0, kind: input, shape index: {}]
  %s1 = inlined_call_operand.vmem [shape: f32[1,64], index: 1, kind: input, shape index: {}]
  %s2 = inlined_call_operand.vmem [shape: f32[1,64], index: 2, kind: input, shape index: {}]
  %s3 = inlined_call_operand.vmem [shape: bf16[32,64], index: 3, kind: output, shape index: {}]
  %s4 = sld [smem:[#allocation0]]
  $region22: #{discriminator_forward.14} parent=0
    _
  %s6 = ssub.s32 1, %s4
  %s7 = scalar_select 0, %s6, %s4
  // Predicated region
  $region2: #{discriminator_forward.14} parent=0 // pred_check
    _
  $region3: #{discriminator_forward.14} parent=0 // pred_check_branch
    %9 = sbr.rel (0) target = $region5
  $region4: #{discriminator_forward.14} parent=0 // pred_region
    _
  $region5: #{discriminator_forward.14} parent=0 // pred_fallthru
    _
  // Predicated region
  $region6: #{discriminator_forward.14} parent=0 // pred_check
    _
  $region7: #{discriminator_forward.14} parent=0 // pred_check_branch
    %11 = sbr.rel (0) target = $region9
  $region8: #{discriminator_forward.14} parent=0 // pred_region
    _
  $region9: #{discriminator_forward.14} parent=0 // pred_fallthru
    _
  // Predicated region
  $region10: #{discriminator_forward.14} parent=0 // pred_check
    _
  $region11: #{discriminator_forward.14} parent=0 // pred_check_branch
    %13 = sbr.rel (0) target = $region13
  $region12: #{discriminator_forward.14} parent=0 // pred_region
    _
  $region13: #{discriminator_forward.14} parent=0 // pred_fallthru
    _
  %v14 = vld [vmem:[%s0] sm:$0xf]
  %v15 = vld [vmem:[%s0 + $0x4] sm:$0xf]
  %v16 = vld [vmem:[%s0 + $0x8] sm:$0xf]
  %v17 = vld [vmem:[%s0 + $0xc] sm:$0xf]
  %v18 = vunpack.c.l.bf16 %v14
  %v19 = vunpack.c.l.bf16 %v15
  %v20 = vunpack.c.l.bf16 %v16
  %v21 = vunpack.c.l.bf16 %v17
  %v22 = vld [vmem:[%s1] sm:$0x1]
  %v24 = vlaneseq
  %v25 = vshrl.u32 %v24, 7
  %v26 = vsub.s32 0, %v25
  %v27 = vrot.slane %v22, %v26
  %v29 = vmul.f32 %v18, %v27
  %v30 = vmul.f32 %v19, %v27
  %v31 = vmul.f32 %v20, %v27
  %v32 = vmul.f32 %v21, %v27
  %v33 = vld [vmem:[%s2] sm:$0x1]
  %v35 = vlaneseq
  %v36 = vshrl.u32 %v35, 7
  %v37 = vsub.s32 0, %v36
  %v38 = vrot.slane %v33, %v37
  %v40 = vadd.f32 %v29, %v38
  %v41 = vadd.f32 %v30, %v38
  %v42 = vadd.f32 %v31, %v38
  %v43 = vadd.f32 %v32, %v38
  %vm44 = vcmp.ge.f32.partialorder %v40, 0.0
  %vm45 = vcmp.ge.f32.partialorder %v41, 0.0
  %vm46 = vcmp.ge.f32.partialorder %v42, 0.0
  %vm47 = vcmp.ge.f32.partialorder %v43, 0.0
  %v48 = vmul.f32 %v40, 0.2
  %v49 = vmul.f32 %v41, 0.2
  %v50 = vmul.f32 %v42, 0.2
  %v51 = vmul.f32 %v43, 0.2
  %v52 = vsel %vm44, %v40, %v48
  %v53 = vsel %vm45, %v41, %v49
  %v54 = vsel %vm46, %v42, %v50
  %v55 = vsel %vm47, %v43, %v51
  %v56 = vpack.c.bf16 %v53, %v52
  %v57 = vpack.c.bf16 %v55, %v54
  %v60 = vunpack.c.l.b16 %v56
  %v61 = vunpack.c.h.b16 %v56
  %v62 = vunpack.c.l.b16 %v57
  %v63 = vunpack.c.h.b16 %v57
  %v64 = vpack.c.b16 %v60, %v60
  %v65 = vpack.c.b16 %v61, %v61
  %v66 = vpack.c.b16 %v62, %v62
  %v67 = vpack.c.b16 %v63, %v63
  %vm72 = vcmask 519168
  %73 = vst.msk [vmem:[%s3] sm:$0xf] %vm72, %v64
  %74 = vst.msk [vmem:[%s3 + $0x4] sm:$0xf] %vm72, %v65
  %75 = vst.msk [vmem:[%s3 + $0x8] sm:$0xf] %vm72, %v66
  %76 = vst.msk [vmem:[%s3 + $0xc] sm:$0xf] %vm72, %v67
  // Predicated region
  $region14: #{discriminator_forward.14} parent=0 // pred_check
    _
  $region15: #{discriminator_forward.14} parent=0 // pred_check_branch
    %78 = sbr.rel (0) target = $region17
  $region16: #{discriminator_forward.14} parent=0 // pred_region
    _
  $region17: #{discriminator_forward.14} parent=0 // pred_fallthru
    _
  // Predicated region
  $region18: #{discriminator_forward.14} parent=0 // pred_check
    _
  $region19: #{discriminator_forward.14} parent=0 // pred_check_branch
    %80 = sbr.rel (0) target = $region21
  $region20: #{discriminator_forward.14} parent=0 // pred_region
    _
  $region21: #{discriminator_forward.14} parent=0 // pred_fallthru
    _

// kernel: discriminator_forward.13
$region0: #{discriminator_forward.13}
  #allocation0 [shape = 'u32[]', space=smem, size = 0x4, offset = 0x4, fixed_abs, tag = 'smem constant byte address 0x4 - core index']
  #allocation1 [shape = 'u32[144,128]{1,0:T(1,128)}', space=vmem, size = 0x12000, scoped, tag = 'internal scratch']
  %s0 = inlined_call_operand.vmem [shape: bf16[32,512], index: 0, kind: input, shape index: {}]
  %s1 = inlined_call_operand.vmem [shape: bf16[512,128], index: 1, kind: input, shape index: {}]
  %s2 = inlined_call_operand.vmem [shape: bf16[32,64], index: 2, kind: output, shape index: {0}]
  %s3 = inlined_call_operand.vmem [shape: f32[1,2,64], index: 3, kind: output, shape index: {1}]
  %4 = xla_tuple %s2, %s3
  %s5 = sld [smem:[#allocation0]]
  $region26: #{discriminator_forward.13} parent=0
    _
  %s7 = ssub.s32 1, %s5
  %s8 = scalar_select 0, %s7, %s5
  // Predicated region
  $region2: #{discriminator_forward.13} parent=0 // pred_check
    _
  $region3: #{discriminator_forward.13} parent=0 // pred_check_branch
    %10 = sbr.rel (0) target = $region5
  $region4: #{discriminator_forward.13} parent=0 // pred_region
    _
  $region5: #{discriminator_forward.13} parent=0 // pred_fallthru
    _
  // Predicated region
  $region6: #{discriminator_forward.13} parent=0 // pred_check
    _
  $region7: #{discriminator_forward.13} parent=0 // pred_check_branch
    %12 = sbr.rel (0) target = $region9
  $region8: #{discriminator_forward.13} parent=0 // pred_region
    _
  $region9: #{discriminator_forward.13} parent=0 // pred_fallthru
    _
  %v14 = vld [vmem:[%s0] sm:$0xff]
  %v15 = vld [vmem:[%s0 + $0x8] sm:$0xff]
  %v16 = vld [vmem:[%s0 + $0x10] sm:$0xff]
  %v17 = vld [vmem:[%s0 + $0x18] sm:$0xff]
  %v18 = vld [vmem:[%s0 + $0x20] sm:$0xff]
  %v19 = vld [vmem:[%s0 + $0x28] sm:$0xff]
  %v20 = vld [vmem:[%s0 + $0x30] sm:$0xff]
  %v21 = vld [vmem:[%s0 + $0x38] sm:$0xff]
  %v22 = vld [vmem:[%s1] sm:$0xf]
  %v23 = vld [vmem:[%s1 + $0x4] sm:$0xf]
  %v24 = vld [vmem:[%s1 + $0x8] sm:$0xf]
  %v25 = vld [vmem:[%s1 + $0xc] sm:$0xf]
  %v26 = vld [vmem:[%s1 + $0x10] sm:$0xf]
  %v27 = vld [vmem:[%s1 + $0x14] sm:$0xf]
  %v28 = vld [vmem:[%s1 + $0x18] sm:$0xf]
  %v29 = vld [vmem:[%s1 + $0x1c] sm:$0xf]
  %v30 = vld [vmem:[%s1 + $0x20] sm:$0xf]
  %v31 = vld [vmem:[%s1 + $0x24] sm:$0xf]
  %v32 = vld [vmem:[%s1 + $0x28] sm:$0xf]
  %v33 = vld [vmem:[%s1 + $0x2c] sm:$0xf]
  %v34 = vld [vmem:[%s1 + $0x30] sm:$0xf]
  %v35 = vld [vmem:[%s1 + $0x34] sm:$0xf]
  %v36 = vld [vmem:[%s1 + $0x38] sm:$0xf]
  %v37 = vld [vmem:[%s1 + $0x3c] sm:$0xf]
  %v38 = vld [vmem:[%s1 + $0x40] sm:$0xf]
  %v39 = vld [vmem:[%s1 + $0x44] sm:$0xf]
  %v40 = vld [vmem:[%s1 + $0x48] sm:$0xf]
  %v41 = vld [vmem:[%s1 + $0x4c] sm:$0xf]
  %v42 = vld [vmem:[%s1 + $0x50] sm:$0xf]
  %v43 = vld [vmem:[%s1 + $0x54] sm:$0xf]
  %v44 = vld [vmem:[%s1 + $0x58] sm:$0xf]
  %v45 = vld [vmem:[%s1 + $0x5c] sm:$0xf]
  %v46 = vld [vmem:[%s1 + $0x60] sm:$0xf]
  %v47 = vld [vmem:[%s1 + $0x64] sm:$0xf]
  %v48 = vld [vmem:[%s1 + $0x68] sm:$0xf]
  %v49 = vld [vmem:[%s1 + $0x6c] sm:$0xf]
  %v50 = vld [vmem:[%s1 + $0x70] sm:$0xf]
  %v51 = vld [vmem:[%s1 + $0x74] sm:$0xf]
  %v52 = vld [vmem:[%s1 + $0x78] sm:$0xf]
  %v53 = vld [vmem:[%s1 + $0x7c] sm:$0xf]
  %v54 = vld [vmem:[%s1 + $0x80] sm:$0xf]
  %v55 = vld [vmem:[%s1 + $0x84] sm:$0xf]
  %v56 = vld [vmem:[%s1 + $0x88] sm:$0xf]
  %v57 = vld [vmem:[%s1 + $0x8c] sm:$0xf]
  %v58 = vld [vmem:[%s1 + $0x90] sm:$0xf]
  %v59 = vld [vmem:[%s1 + $0x94] sm:$0xf]
  %v60 = vld [vmem:[%s1 + $0x98] sm:$0xf]
  %v61 = vld [vmem:[%s1 + $0x9c] sm:$0xf]
  %v62 = vld [vmem:[%s1 + $0xa0] sm:$0xf]
  %v63 = vld [vmem:[%s1 + $0xa4] sm:$0xf]
  %v64 = vld [vmem:[%s1 + $0xa8] sm:$0xf]
  %v65 = vld [vmem:[%s1 + $0xac] sm:$0xf]
  %v66 = vld [vmem:[%s1 + $0xb0] sm:$0xf]
  %v67 = vld [vmem:[%s1 + $0xb4] sm:$0xf]
  %v68 = vld [vmem:[%s1 + $0xb8] sm:$0xf]
  %v69 = vld [vmem:[%s1 + $0xbc] sm:$0xf]
  %v70 = vld [vmem:[%s1 + $0xc0] sm:$0xf]
  %v71 = vld [vmem:[%s1 + $0xc4] sm:$0xf]
  %v72 = vld [vmem:[%s1 + $0xc8] sm:$0xf]
  %v73 = vld [vmem:[%s1 + $0xcc] sm:$0xf]
  %v74 = vld [vmem:[%s1 + $0xd0] sm:$0xf]
  %v75 = vld [vmem:[%s1 + $0xd4] sm:$0xf]
  %v76 = vld [vmem:[%s1 + $0xd8] sm:$0xf]
  %v77 = vld [vmem:[%s1 + $0xdc] sm:$0xf]
  %v78 = vld [vmem:[%s1 + $0xe0] sm:$0xf]
  %v79 = vld [vmem:[%s1 + $0xe4] sm:$0xf]
  %v80 = vld [vmem:[%s1 + $0xe8] sm:$0xf]
  %v81 = vld [vmem:[%s1 + $0xec] sm:$0xf]
  %v82 = vld [vmem:[%s1 + $0xf0] sm:$0xf]
  %v83 = vld [vmem:[%s1 + $0xf4] sm:$0xf]
  %v84 = vld [vmem:[%s1 + $0xf8] sm:$0xf]
  %v85 = vld [vmem:[%s1 + $0xfc] sm:$0xf]
  %v94 = vunpack.c.l.b16 %v14
  %v95 = vunpack.c.h.b16 %v14
  %v96 = vunpack.c.l.b16 %v15
  %v97 = vunpack.c.h.b16 %v15
  %v98 = vunpack.c.l.b16 %v16
  %v99 = vunpack.c.h.b16 %v16
  %v100 = vunpack.c.l.b16 %v17
  %v101 = vunpack.c.h.b16 %v17
  %v102 = vunpack.c.l.b16 %v18
  %v103 = vunpack.c.h.b16 %v18
  %v104 = vunpack.c.l.b16 %v19
  %v105 = vunpack.c.h.b16 %v19
  %v106 = vunpack.c.l.b16 %v20
  %v107 = vunpack.c.h.b16 %v20
  %v108 = vunpack.c.l.b16 %v21
  %v109 = vunpack.c.h.b16 %v21
  %v110 = vpack.c.b16 %v98, %v94
  %v111 = vpack.c.b16 %v99, %v95
  %v112 = vpack.c.b16 %v100, %v96
  %v113 = vpack.c.b16 %v101, %v97
  %v114 = vpack.c.b16 %v106, %v102
  %v115 = vpack.c.b16 %v107, %v103
  %v116 = vpack.c.b16 %v108, %v104
  %v117 = vpack.c.b16 %v109, %v105
  %v190 = vunpack.c.l.b16 %v22
  %v191 = vunpack.c.l.b16 %v23
  %v192 = vunpack.c.l.b16 %v24
  %v193 = vunpack.c.l.b16 %v25
  %v194 = vunpack.c.l.b16 %v26
  %v195 = vunpack.c.l.b16 %v27
  %v196 = vunpack.c.l.b16 %v28
  %v197 = vunpack.c.l.b16 %v29
  %v198 = vunpack.c.l.b16 %v30
  %v199 = vunpack.c.l.b16 %v31
  %v200 = vunpack.c.l.b16 %v32
  %v201 = vunpack.c.l.b16 %v33
  %v202 = vunpack.c.l.b16 %v34
  %v203 = vunpack.c.l.b16 %v35
  %v204 = vunpack.c.l.b16 %v36
  %v205 = vunpack.c.l.b16 %v37
  %v206 = vunpack.c.l.b16 %v38
  %v207 = vunpack.c.l.b16 %v39
  %v208 = vunpack.c.l.b16 %v40
  %v209 = vunpack.c.l.b16 %v41
  %v210 = vunpack.c.l.b16 %v42
  %v211 = vunpack.c.l.b16 %v43
  %v212 = vunpack.c.l.b16 %v44
  %v213 = vunpack.c.l.b16 %v45
  %v214 = vunpack.c.l.b16 %v46
  %v215 = vunpack.c.l.b16 %v47
  %v216 = vunpack.c.l.b16 %v48
  %v217 = vunpack.c.l.b16 %v49
  %v218 = vunpack.c.l.b16 %v50
  %v219 = vunpack.c.l.b16 %v51
  %v220 = vunpack.c.l.b16 %v52
  %v221 = vunpack.c.l.b16 %v53
  %v222 = vunpack.c.l.b16 %v54
  %v223 = vunpack.c.l.b16 %v55
  %v224 = vunpack.c.l.b16 %v56
  %v225 = vunpack.c.l.b16 %v57
  %v226 = vunpack.c.l.b16 %v58
  %v227 = vunpack.c.l.b16 %v59
  %v228 = vunpack.c.l.b16 %v60
  %v229 = vunpack.c.l.b16 %v61
  %v230 = vunpack.c.l.b16 %v62
  %v231 = vunpack.c.l.b16 %v63
  %v232 = vunpack.c.l.b16 %v64
  %v233 = vunpack.c.l.b16 %v65
  %v234 = vunpack.c.l.b16 %v66
  %v235 = vunpack.c.l.b16 %v67
  %v236 = vunpack.c.l.b16 %v68
  %v237 = vunpack.c.l.b16 %v69
  %v238 = vunpack.c.l.b16 %v70
  %v239 = vunpack.c.l.b16 %v71
  %v240 = vunpack.c.l.b16 %v72
  %v241 = vunpack.c.l.b16 %v73
  %v242 = vunpack.c.l.b16 %v74
  %v243 = vunpack.c.l.b16 %v75
  %v244 = vunpack.c.l.b16 %v76
  %v245 = vunpack.c.l.b16 %v77
  %v246 = vunpack.c.l.b16 %v78
  %v247 = vunpack.c.l.b16 %v79
  %v248 = vunpack.c.l.b16 %v80
  %v249 = vunpack.c.l.b16 %v81
  %v250 = vunpack.c.l.b16 %v82
  %v251 = vunpack.c.l.b16 %v83
  %v252 = vunpack.c.l.b16 %v84
  %v253 = vunpack.c.l.b16 %v85
  %v254 = vpack.c.b16 %v191, %v190
  %v255 = vpack.c.b16 %v193, %v192
  %v256 = vpack.c.b16 %v195, %v194
  %v257 = vpack.c.b16 %v197, %v196
  %v258 = vpack.c.b16 %v199, %v198
  %v259 = vpack.c.b16 %v201, %v200
  %v260 = vpack.c.b16 %v203, %v202
  %v261 = vpack.c.b16 %v205, %v204
  %v262 = vpack.c.b16 %v207, %v206
  %v263 = vpack.c.b16 %v209, %v208
  %v264 = vpack.c.b16 %v211, %v210
  %v265 = vpack.c.b16 %v213, %v212
  %v266 = vpack.c.b16 %v215, %v214
  %v267 = vpack.c.b16 %v217, %v216
  %v268 = vpack.c.b16 %v219, %v218
  %v269 = vpack.c.b16 %v221, %v220
  %v270 = vpack.c.b16 %v223, %v222
  %v271 = vpack.c.b16 %v225, %v224
  %v272 = vpack.c.b16 %v227, %v226
  %v273 = vpack.c.b16 %v229, %v228
  %v274 = vpack.c.b16 %v231, %v230
  %v275 = vpack.c.b16 %v233, %v232
  %v276 = vpack.c.b16 %v235, %v234
  %v277 = vpack.c.b16 %v237, %v236
  %v278 = vpack.c.b16 %v239, %v238
  %v279 = vpack.c.b16 %v241, %v240
  %v280 = vpack.c.b16 %v243, %v242
  %v281 = vpack.c.b16 %v245, %v244
  %v282 = vpack.c.b16 %v247, %v246
  %v283 = vpack.c.b16 %v249, %v248
  %v284 = vpack.c.b16 %v251, %v250
  %v285 = vpack.c.b16 %v253, %v252
  %318 = vmatprep.subr.bf16.mxu0 0
  %319 = vmatpush1.bf16.msra.mxu0 %v254
  %320 = vmatprep.subr.bf16.mxu0 0
  %321 = vmatpush1.bf16.msra.mxu0 %v255
  %322 = vmatprep.subr.bf16.mxu0 0
  %323 = vmatpush1.bf16.msra.mxu0 %v256
  %324 = vmatprep.subr.bf16.mxu0 0
  %325 = vmatpush1.bf16.msra.mxu0 %v257
  %326 = vmatprep.subr.bf16.mxu0 0
  %327 = vmatpush1.bf16.msra.mxu0 %v258
  %328 = vmatprep.subr.bf16.mxu0 0
  %329 = vmatpush1.bf16.msra.mxu0 %v259
  %330 = vmatprep.subr.bf16.mxu0 0
  %331 = vmatpush1.bf16.msra.mxu0 %v260
  %332 = vmatprep.subr.bf16.mxu0 0
  %333 = vmatpush1.bf16.msra.mxu0 %v261
  %334 = vmatprep.subr.bf16.mxu0 0
  %335 = vmatpush1.bf16.msra.mxu0 %v262
  %336 = vmatprep.subr.bf16.mxu0 0
  %337 = vmatpush1.bf16.msra.mxu0 %v263
  %338 = vmatprep.subr.bf16.mxu0 0
  %339 = vmatpush1.bf16.msra.mxu0 %v264
  %340 = vmatprep.subr.bf16.mxu0 0
  %341 = vmatpush1.bf16.msra.mxu0 %v265
  %342 = vmatprep.subr.bf16.mxu0 0
  %343 = vmatpush1.bf16.msra.mxu0 %v266
  %344 = vmatprep.subr.bf16.mxu0 0
  %345 = vmatpush1.bf16.msra.mxu0 %v267
  %346 = vmatprep.subr.bf16.mxu0 0
  %347 = vmatpush1.bf16.msra.mxu0 %v268
  %348 = vmatprep.subr.bf16.mxu0 0
  %349 = vmatpush1.bf16.msra.mxu0 %v269
  %350 = vmatprep.mubr.bf16.mxu0 %v111
  %351 = vmatmul.mubr.bf16.gmra.mrb[0].mxu0 %v110
  %v352 = vpop.f32.mrb[0].mxu0
  %v353 = vadd.f32 0.0, %v352
  %v354 = vpop.f32.mrb[0].mxu0
  %v355 = vpop.f32.mrb[0].mxu0
  %v356 = vadd.f32 0.0, %v355
  %v357 = vpop.f32.mrb[0].mxu0
  %358 = vmatprep.mubr.bf16.mxu0 %v115
  %359 = vmatmul.mubr.bf16.gmra.mrb[0].mxu0 %v114
  %v360 = vpop.f32.mrb[0].mxu0
  %v361 = vadd.f32 0.0, %v360
  %v362 = vpop.f32.mrb[0].mxu0
  %v363 = vpop.f32.mrb[0].mxu0
  %v364 = vadd.f32 0.0, %v363
  %v365 = vpop.f32.mrb[0].mxu0
  %366 = vdwg.mxu0
  %367 = vmatprep.subr.bf16.mxu0 0
  %368 = vmatpush1.bf16.msra.mxu0 %v270
  %369 = vmatprep.subr.bf16.mxu0 0
  %370 = vmatpush1.bf16.msra.mxu0 %v271
  %371 = vmatprep.subr.bf16.mxu0 0
  %372 = vmatpush1.bf16.msra.mxu0 %v272
  %373 = vmatprep.subr.bf16.mxu0 0
  %374 = vmatpush1.bf16.msra.mxu0 %v273
  %375 = vmatprep.subr.bf16.mxu0 0
  %376 = vmatpush1.bf16.msra.mxu0 %v274
  %377 = vmatprep.subr.bf16.mxu0 0
  %378 = vmatpush1.bf16.msra.mxu0 %v275
  %379 = vmatprep.subr.bf16.mxu0 0
  %380 = vmatpush1.bf16.msra.mxu0 %v276
  %381 = vmatprep.subr.bf16.mxu0 0
  %382 = vmatpush1.bf16.msra.mxu0 %v277
  %383 = vmatprep.subr.bf16.mxu0 0
  %384 = vmatpush1.bf16.msra.mxu0 %v278
  %385 = vmatprep.subr.bf16.mxu0 0
  %386 = vmatpush1.bf16.msra.mxu0 %v279
  %387 = vmatprep.subr.bf16.mxu0 0
  %388 = vmatpush1.bf16.msra.mxu0 %v280
  %389 = vmatprep.subr.bf16.mxu0 0
  %390 = vmatpush1.bf16.msra.mxu0 %v281
  %391 = vmatprep.subr.bf16.mxu0 0
  %392 = vmatpush1.bf16.msra.mxu0 %v282
  %393 = vmatprep.subr.bf16.mxu0 0
  %394 = vmatpush1.bf16.msra.mxu0 %v283
  %395 = vmatprep.subr.bf16.mxu0 0
  %396 = vmatpush1.bf16.msra.mxu0 %v284
  %397 = vmatprep.subr.bf16.mxu0 0
  %398 = vmatpush1.bf16.msra.mxu0 %v285
  %399 = vmatprep.mubr.bf16.mxu0 %v113
  %400 = vmatmul.mubr.bf16.gmra.mrb[0].mxu0 %v112
  %v401 = vpop.f32.mrb[0].mxu0
  %v402 = vadd.f32 %v353, %v401
  %v403 = vpop.f32.mrb[0].mxu0
  %v404 = vpop.f32.mrb[0].mxu0
  %v405 = vadd.f32 %v356, %v404
  %v406 = vpop.f32.mrb[0].mxu0
  %407 = vmatprep.mubr.bf16.mxu0 %v117
  %408 = vmatmul.mubr.bf16.gmra.mrb[0].mxu0 %v116
  %v409 = vpop.f32.mrb[0].mxu0
  %v410 = vadd.f32 %v361, %v409
  %v411 = vpop.f32.mrb[0].mxu0
  %v412 = vpop.f32.mrb[0].mxu0
  %v413 = vadd.f32 %v364, %v412
  %v414 = vpop.f32.mrb[0].mxu0
  %415 = vdwg.mxu0
  %v416 = vpack.c.bf16 %v405, %v402
  %v417 = vpack.c.bf16 %v413, %v410
  %v420 = vunpack.c.l.b16 %v416
  %v421 = vunpack.c.h.b16 %v416
  %v422 = vunpack.c.l.b16 %v417
  %v423 = vunpack.c.h.b16 %v417
  %v424 = vpack.c.b16 %v420, %v420
  %v425 = vpack.c.b16 %v421, %v421
  %v426 = vpack.c.b16 %v422, %v422
  %v427 = vpack.c.b16 %v423, %v423
  %vm432 = vcmask 519168
  %433 = vst.msk [vmem:[%s2] sm:$0xf] %vm432, %v424
  %434 = vst.msk [vmem:[%s2 + $0x4] sm:$0xf] %vm432, %v425
  %435 = vst.msk [vmem:[%s2 + $0x8] sm:$0xf] %vm432, %v426
  %436 = vst.msk [vmem:[%s2 + $0xc] sm:$0xf] %vm432, %v427
  %vm437 = vcmask 523264
  %v438 = vsel %vm437, %v402, 0.0
  %v439 = vsel %vm437, %v405, 0.0
  %v440 = vadd.f32 %v438, %v439
  %v441 = vsel %vm437, %v410, 0.0
  %v442 = vadd.f32 %v440, %v441
  %v443 = vsel %vm437, %v413, 0.0
  %v444 = vadd.f32 %v442, %v443
  %v445 = vrot.slane %v444, 4
  %v446 = vadd.f32 %v444, %v445
  %v447 = vrot.slane %v446, 2
  %v448 = vadd.f32 %v446, %v447
  %v449 = vrot.slane %v448, 1
  %v450 = vadd.f32 %v448, %v449
  %v451 = vmul.f32 %v402, %v402
  %v452 = vmul.f32 %v405, %v405
  %v453 = vmul.f32 %v410, %v410
  %v454 = vmul.f32 %v413, %v413
  %v455 = vsel %vm437, %v451, 0.0
  %v456 = vsel %vm437, %v452, 0.0
  %v457 = vadd.f32 %v455, %v456
  %v458 = vsel %vm437, %v453, 0.0
  %v459 = vadd.f32 %v457, %v458
  %v460 = vsel %vm437, %v454, 0.0
  %v461 = vadd.f32 %v459, %v460
  %v462 = vrot.slane %v461, 4
  %v463 = vadd.f32 %v461, %v462
  %v464 = vrot.slane %v463, 2
  %v465 = vadd.f32 %v463, %v464
  %v466 = vrot.slane %v465, 1
  %v467 = vadd.f32 %v465, %v466
  %vm468 = vcmask 1040384
  %v469 = vsel %vm468, %v450, %v467
  %vm470 = vcmask 517120
  %471 = vst.msk [vmem:[%s3] sm:$0x3] %vm470, %v469
  // Predicated region
  $region10: #{discriminator_forward.13} parent=0 // pred_check
    _
  $region11: #{discriminator_forward.13} parent=0 // pred_check_branch
    %473 = sbr.rel (0) target = $region13
  $region12: #{discriminator_forward.13} parent=0 // pred_region
    _
  $region13: #{discriminator_forward.13} parent=0 // pred_fallthru
    _
  // Predicated region
  $region14: #{discriminator_forward.13} parent=0 // pred_check
    _
  $region15: #{discriminator_forward.13} parent=0 // pred_check_branch
    %475 = sbr.rel (0) target = $region17
  $region16: #{discriminator_forward.13} parent=0 // pred_region
    _
  $region17: #{discriminator_forward.13} parent=0 // pred_fallthru
    _
  // Predicated region
  $region18: #{discriminator_forward.13} parent=0 // pred_check
    _
  $region19: #{discriminator_forward.13} parent=0 // pred_check_branch
    %477 = sbr.rel (0) target = $region21
  $region20: #{discriminator_forward.13} parent=0 // pred_region
    _
  $region21: #{discriminator_forward.13} parent=0 // pred_fallthru
    _
  // Predicated region
  $region22: #{discriminator_forward.13} parent=0 // pred_check
    _
  $region23: #{discriminator_forward.13} parent=0 // pred_check_branch
    %479 = sbr.rel (0) target = $region25
  $region24: #{discriminator_forward.13} parent=0 // pred_region
    _
  $region25: #{discriminator_forward.13} parent=0 // pred_fallthru
    _

// kernel: discriminator_forward.15
$region0: #{discriminator_forward.15}
  #allocation0 [shape = 'u32[]', space=smem, size = 0x4, offset = 0x4, fixed_abs, tag = 'smem constant byte address 0x4 - core index']
  #allocation1 [shape = 'u32[144,128]{1,0:T(1,128)}', space=vmem, size = 0x12000, scoped, tag = 'internal scratch']
  #allocation2 [shape = 'f32[1,1]{1,0:T(1,128)S(1)}', space=vmem, size = 0x200, scoped, tag = 'scoped memory for discriminator_forward.15']
  %s0 = inlined_call_operand.vmem [shape: bf16[16,1024], index: 0, kind: input, shape index: {}]
  %s1 = inlined_call_operand.vmem [shape: bf16[1024,128], index: 1, kind: input, shape index: {}]
  %s2 = inlined_call_operand.<no memory space> [shape: f32[1,1], index: 2, kind: input, shape index: {}]
  %s3 = inlined_call_operand.vmem [shape: f32[16,1], index: 3, kind: output, shape index: {}]
  %s4 = sld [smem:[#allocation0]]
  $region22: #{discriminator_forward.15} parent=0
    _
  %s6 = ssub.s32 1, %s4
  %s7 = scalar_select 0, %s6, %s4
  %v8 = vstv %s2
  %9 = vst [vmem:[#allocation2] sm:$0x1] %v8
  // Predicated region
  $region2: #{discriminator_forward.15} parent=0 // pred_check
    _
  $region3: #{discriminator_forward.15} parent=0 // pred_check_branch
    %11 = sbr.rel (0) target = $region5
  $region4: #{discriminator_forward.15} parent=0 // pred_region
    _
  $region5: #{discriminator_forward.15} parent=0 // pred_fallthru
    _
  // Predicated region
  $region6: #{discriminator_forward.15} parent=0 // pred_check
    _
  $region7: #{discriminator_forward.15} parent=0 // pred_check_branch
    %13 = sbr.rel (0) target = $region9
  $region8: #{discriminator_forward.15} parent=0 // pred_region
    _
  $region9: #{discriminator_forward.15} parent=0 // pred_fallthru
    _
  // Predicated region
  $region10: #{discriminator_forward.15} parent=0 // pred_check
    _
  $region11: #{discriminator_forward.15} parent=0 // pred_check_branch
    %15 = sbr.rel (0) target = $region13
  $region12: #{discriminator_forward.15} parent=0 // pred_region
    _
  $region13: #{discriminator_forward.15} parent=0 // pred_fallthru
    _
  %v17 = vld [vmem:[%s0] sm:$0xff]
  %v18 = vld [vmem:[%s0 + $0x8] sm:$0xff]
  %v19 = vld [vmem:[%s0 + $0x10] sm:$0xff]
  %v20 = vld [vmem:[%s0 + $0x18] sm:$0xff]
  %v21 = vld [vmem:[%s0 + $0x20] sm:$0xff]
  %v22 = vld [vmem:[%s0 + $0x28] sm:$0xff]
  %v23 = vld [vmem:[%s0 + $0x30] sm:$0xff]
  %v24 = vld [vmem:[%s0 + $0x38] sm:$0xff]
  %v25 = vld [vmem:[%s1] sm:$0xf]
  %v26 = vld [vmem:[%s1 + $0x4] sm:$0xf]
  %v27 = vld [vmem:[%s1 + $0x8] sm:$0xf]
  %v28 = vld [vmem:[%s1 + $0xc] sm:$0xf]
  %v29 = vld [vmem:[%s1 + $0x10] sm:$0xf]
  %v30 = vld [vmem:[%s1 + $0x14] sm:$0xf]
  %v31 = vld [vmem:[%s1 + $0x18] sm:$0xf]
  %v32 = vld [vmem:[%s1 + $0x1c] sm:$0xf]
  %v33 = vld [vmem:[%s1 + $0x20] sm:$0xf]
  %v34 = vld [vmem:[%s1 + $0x24] sm:$0xf]
  %v35 = vld [vmem:[%s1 + $0x28] sm:$0xf]
  %v36 = vld [vmem:[%s1 + $0x2c] sm:$0xf]
  %v37 = vld [vmem:[%s1 + $0x30] sm:$0xf]
  %v38 = vld [vmem:[%s1 + $0x34] sm:$0xf]
  %v39 = vld [vmem:[%s1 + $0x38] sm:$0xf]
  %v40 = vld [vmem:[%s1 + $0x3c] sm:$0xf]
  %v41 = vld [vmem:[%s1 + $0x40] sm:$0xf]
  %v42 = vld [vmem:[%s1 + $0x44] sm:$0xf]
  %v43 = vld [vmem:[%s1 + $0x48] sm:$0xf]
  %v44 = vld [vmem:[%s1 + $0x4c] sm:$0xf]
  %v45 = vld [vmem:[%s1 + $0x50] sm:$0xf]
  %v46 = vld [vmem:[%s1 + $0x54] sm:$0xf]
  %v47 = vld [vmem:[%s1 + $0x58] sm:$0xf]
  %v48 = vld [vmem:[%s1 + $0x5c] sm:$0xf]
  %v49 = vld [vmem:[%s1 + $0x60] sm:$0xf]
  %v50 = vld [vmem:[%s1 + $0x64] sm:$0xf]
  %v51 = vld [vmem:[%s1 + $0x68] sm:$0xf]
  %v52 = vld [vmem:[%s1 + $0x6c] sm:$0xf]
  %v53 = vld [vmem:[%s1 + $0x70] sm:$0xf]
  %v54 = vld [vmem:[%s1 + $0x74] sm:$0xf]
  %v55 = vld [vmem:[%s1 + $0x78] sm:$0xf]
  %v56 = vld [vmem:[%s1 + $0x7c] sm:$0xf]
  %v57 = vld [vmem:[%s1 + $0x80] sm:$0xf]
  %v58 = vld [vmem:[%s1 + $0x84] sm:$0xf]
  %v59 = vld [vmem:[%s1 + $0x88] sm:$0xf]
  %v60 = vld [vmem:[%s1 + $0x8c] sm:$0xf]
  %v61 = vld [vmem:[%s1 + $0x90] sm:$0xf]
  %v62 = vld [vmem:[%s1 + $0x94] sm:$0xf]
  %v63 = vld [vmem:[%s1 + $0x98] sm:$0xf]
  %v64 = vld [vmem:[%s1 + $0x9c] sm:$0xf]
  %v65 = vld [vmem:[%s1 + $0xa0] sm:$0xf]
  %v66 = vld [vmem:[%s1 + $0xa4] sm:$0xf]
  %v67 = vld [vmem:[%s1 + $0xa8] sm:$0xf]
  %v68 = vld [vmem:[%s1 + $0xac] sm:$0xf]
  %v69 = vld [vmem:[%s1 + $0xb0] sm:$0xf]
  %v70 = vld [vmem:[%s1 + $0xb4] sm:$0xf]
  %v71 = vld [vmem:[%s1 + $0xb8] sm:$0xf]
  %v72 = vld [vmem:[%s1 + $0xbc] sm:$0xf]
  %v73 = vld [vmem:[%s1 + $0xc0] sm:$0xf]
  %v74 = vld [vmem:[%s1 + $0xc4] sm:$0xf]
  %v75 = vld [vmem:[%s1 + $0xc8] sm:$0xf]
  %v76 = vld [vmem:[%s1 + $0xcc] sm:$0xf]
  %v77 = vld [vmem:[%s1 + $0xd0] sm:$0xf]
  %v78 = vld [vmem:[%s1 + $0xd4] sm:$0xf]
  %v79 = vld [vmem:[%s1 + $0xd8] sm:$0xf]
  %v80 = vld [vmem:[%s1 + $0xdc] sm:$0xf]
  %v81 = vld [vmem:[%s1 + $0xe0] sm:$0xf]
  %v82 = vld [vmem:[%s1 + $0xe4] sm:$0xf]
  %v83 = vld [vmem:[%s1 + $0xe8] sm:$0xf]
  %v84 = vld [vmem:[%s1 + $0xec] sm:$0xf]
  %v85 = vld [vmem:[%s1 + $0xf0] sm:$0xf]
  %v86 = vld [vmem:[%s1 + $0xf4] sm:$0xf]
  %v87 = vld [vmem:[%s1 + $0xf8] sm:$0xf]
  %v88 = vld [vmem:[%s1 + $0xfc] sm:$0xf]
  %v89 = vld [vmem:[%s1 + $0x100] sm:$0xf]
  %v90 = vld [vmem:[%s1 + $0x104] sm:$0xf]
  %v91 = vld [vmem:[%s1 + $0x108] sm:$0xf]
  %v92 = vld [vmem:[%s1 + $0x10c] sm:$0xf]
  %v93 = vld [vmem:[%s1 + $0x110] sm:$0xf]
  %v94 = vld [vmem:[%s1 + $0x114] sm:$0xf]
  %v95 = vld [vmem:[%s1 + $0x118] sm:$0xf]
  %v96 = vld [vmem:[%s1 + $0x11c] sm:$0xf]
  %v97 = vld [vmem:[%s1 + $0x120] sm:$0xf]
  %v98 = vld [vmem:[%s1 + $0x124] sm:$0xf]
  %v99 = vld [vmem:[%s1 + $0x128] sm:$0xf]
  %v100 = vld [vmem:[%s1 + $0x12c] sm:$0xf]
  %v101 = vld [vmem:[%s1 + $0x130] sm:$0xf]
  %v102 = vld [vmem:[%s1 + $0x134] sm:$0xf]
  %v103 = vld [vmem:[%s1 + $0x138] sm:$0xf]
  %v104 = vld [vmem:[%s1 + $0x13c] sm:$0xf]
  %v105 = vld [vmem:[%s1 + $0x140] sm:$0xf]
  %v106 = vld [vmem:[%s1 + $0x144] sm:$0xf]
  %v107 = vld [vmem:[%s1 + $0x148] sm:$0xf]
  %v108 = vld [vmem:[%s1 + $0x14c] sm:$0xf]
  %v109 = vld [vmem:[%s1 + $0x150] sm:$0xf]
  %v110 = vld [vmem:[%s1 + $0x154] sm:$0xf]
  %v111 = vld [vmem:[%s1 + $0x158] sm:$0xf]
  %v112 = vld [vmem:[%s1 + $0x15c] sm:$0xf]
  %v113 = vld [vmem:[%s1 + $0x160] sm:$0xf]
  %v114 = vld [vmem:[%s1 + $0x164] sm:$0xf]
  %v115 = vld [vmem:[%s1 + $0x168] sm:$0xf]
  %v116 = vld [vmem:[%s1 + $0x16c] sm:$0xf]
  %v117 = vld [vmem:[%s1 + $0x170] sm:$0xf]
  %v118 = vld [vmem:[%s1 + $0x174] sm:$0xf]
  %v119 = vld [vmem:[%s1 + $0x178] sm:$0xf]
  %v120 = vld [vmem:[%s1 + $0x17c] sm:$0xf]
  %v121 = vld [vmem:[%s1 + $0x180] sm:$0xf]
  %v122 = vld [vmem:[%s1 + $0x184] sm:$0xf]
  %v123 = vld [vmem:[%s1 + $0x188] sm:$0xf]
  %v124 = vld [vmem:[%s1 + $0x18c] sm:$0xf]
  %v125 = vld [vmem:[%s1 + $0x190] sm:$0xf]
  %v126 = vld [vmem:[%s1 + $0x194] sm:$0xf]
  %v127 = vld [vmem:[%s1 + $0x198] sm:$0xf]
  %v128 = vld [vmem:[%s1 + $0x19c] sm:$0xf]
  %v129 = vld [vmem:[%s1 + $0x1a0] sm:$0xf]
  %v130 = vld [vmem:[%s1 + $0x1a4] sm:$0xf]
  %v131 = vld [vmem:[%s1 + $0x1a8] sm:$0xf]
  %v132 = vld [vmem:[%s1 + $0x1ac] sm:$0xf]
  %v133 = vld [vmem:[%s1 + $0x1b0] sm:$0xf]
  %v134 = vld [vmem:[%s1 + $0x1b4] sm:$0xf]
  %v135 = vld [vmem:[%s1 + $0x1b8] sm:$0xf]
  %v136 = vld [vmem:[%s1 + $0x1bc] sm:$0xf]
  %v137 = vld [vmem:[%s1 + $0x1c0] sm:$0xf]
  %v138 = vld [vmem:[%s1 + $0x1c4] sm:$0xf]
  %v139 = vld [vmem:[%s1 + $0x1c8] sm:$0xf]
  %v140 = vld [vmem:[%s1 + $0x1cc] sm:$0xf]
  %v141 = vld [vmem:[%s1 + $0x1d0] sm:$0xf]
  %v142 = vld [vmem:[%s1 + $0x1d4] sm:$0xf]
  %v143 = vld [vmem:[%s1 + $0x1d8] sm:$0xf]
  %v144 = vld [vmem:[%s1 + $0x1dc] sm:$0xf]
  %v145 = vld [vmem:[%s1 + $0x1e0] sm:$0xf]
  %v146 = vld [vmem:[%s1 + $0x1e4] sm:$0xf]
  %v147 = vld [vmem:[%s1 + $0x1e8] sm:$0xf]
  %v148 = vld [vmem:[%s1 + $0x1ec] sm:$0xf]
  %v149 = vld [vmem:[%s1 + $0x1f0] sm:$0xf]
  %v150 = vld [vmem:[%s1 + $0x1f4] sm:$0xf]
  %v151 = vld [vmem:[%s1 + $0x1f8] sm:$0xf]
  %v152 = vld [vmem:[%s1 + $0x1fc] sm:$0xf]
  %v161 = vunpack.c.l.b16 %v17
  %v162 = vunpack.c.h.b16 %v17
  %v163 = vunpack.c.l.b16 %v18
  %v164 = vunpack.c.h.b16 %v18
  %v165 = vunpack.c.l.b16 %v19
  %v166 = vunpack.c.h.b16 %v19
  %v167 = vunpack.c.l.b16 %v20
  %v168 = vunpack.c.h.b16 %v20
  %v169 = vunpack.c.l.b16 %v21
  %v170 = vunpack.c.h.b16 %v21
  %v171 = vunpack.c.l.b16 %v22
  %v172 = vunpack.c.h.b16 %v22
  %v173 = vunpack.c.l.b16 %v23
  %v174 = vunpack.c.h.b16 %v23
  %v175 = vunpack.c.l.b16 %v24
  %v176 = vunpack.c.h.b16 %v24
  %v177 = vpack.c.b16 %v169, %v161
  %v178 = vpack.c.b16 %v170, %v162
  %v179 = vpack.c.b16 %v171, %v163
  %v180 = vpack.c.b16 %v172, %v164
  %v181 = vpack.c.b16 %v173, %v165
  %v182 = vpack.c.b16 %v174, %v166
  %v183 = vpack.c.b16 %v175, %v167
  %v184 = vpack.c.b16 %v176, %v168
  %v321 = vunpack.c.l.b16 %v25
  %v322 = vunpack.c.l.b16 %v26
  %v323 = vunpack.c.l.b16 %v27
  %v324 = vunpack.c.l.b16 %v28
  %v325 = vunpack.c.l.b16 %v29
  %v326 = vunpack.c.l.b16 %v30
  %v327 = vunpack.c.l.b16 %v31
  %v328 = vunpack.c.l.b16 %v32
  %v329 = vunpack.c.l.b16 %v33
  %v330 = vunpack.c.l.b16 %v34
  %v331 = vunpack.c.l.b16 %v35
  %v332 = vunpack.c.l.b16 %v36
  %v333 = vunpack.c.l.b16 %v37
  %v334 = vunpack.c.l.b16 %v38
  %v335 = vunpack.c.l.b16 %v39
  %v336 = vunpack.c.l.b16 %v40
  %v337 = vunpack.c.l.b16 %v41
  %v338 = vunpack.c.l.b16 %v42
  %v339 = vunpack.c.l.b16 %v43
  %v340 = vunpack.c.l.b16 %v44
  %v341 = vunpack.c.l.b16 %v45
  %v342 = vunpack.c.l.b16 %v46
  %v343 = vunpack.c.l.b16 %v47
  %v344 = vunpack.c.l.b16 %v48
  %v345 = vunpack.c.l.b16 %v49
  %v346 = vunpack.c.l.b16 %v50
  %v347 = vunpack.c.l.b16 %v51
  %v348 = vunpack.c.l.b16 %v52
  %v349 = vunpack.c.l.b16 %v53
  %v350 = vunpack.c.l.b16 %v54
  %v351 = vunpack.c.l.b16 %v55
  %v352 = vunpack.c.l.b16 %v56
  %v353 = vunpack.c.l.b16 %v57
  %v354 = vunpack.c.l.b16 %v58
  %v355 = vunpack.c.l.b16 %v59
  %v356 = vunpack.c.l.b16 %v60
  %v357 = vunpack.c.l.b16 %v61
  %v358 = vunpack.c.l.b16 %v62
  %v359 = vunpack.c.l.b16 %v63
  %v360 = vunpack.c.l.b16 %v64
  %v361 = vunpack.c.l.b16 %v65
  %v362 = vunpack.c.l.b16 %v66
  %v363 = vunpack.c.l.b16 %v67
  %v364 = vunpack.c.l.b16 %v68
  %v365 = vunpack.c.l.b16 %v69
  %v366 = vunpack.c.l.b16 %v70
  %v367 = vunpack.c.l.b16 %v71
  %v368 = vunpack.c.l.b16 %v72
  %v369 = vunpack.c.l.b16 %v73
  %v370 = vunpack.c.l.b16 %v74
  %v371 = vunpack.c.l.b16 %v75
  %v372 = vunpack.c.l.b16 %v76
  %v373 = vunpack.c.l.b16 %v77
  %v374 = vunpack.c.l.b16 %v78
  %v375 = vunpack.c.l.b16 %v79
  %v376 = vunpack.c.l.b16 %v80
  %v377 = vunpack.c.l.b16 %v81
  %v378 = vunpack.c.l.b16 %v82
  %v379 = vunpack.c.l.b16 %v83
  %v380 = vunpack.c.l.b16 %v84
  %v381 = vunpack.c.l.b16 %v85
  %v382 = vunpack.c.l.b16 %v86
  %v383 = vunpack.c.l.b16 %v87
  %v384 = vunpack.c.l.b16 %v88
  %v385 = vunpack.c.l.b16 %v89
  %v386 = vunpack.c.l.b16 %v90
  %v387 = vunpack.c.l.b16 %v91
  %v388 = vunpack.c.l.b16 %v92
  %v389 = vunpack.c.l.b16 %v93
  %v390 = vunpack.c.l.b16 %v94
  %v391 = vunpack.c.l.b16 %v95
  %v392 = vunpack.c.l.b16 %v96
  %v393 = vunpack.c.l.b16 %v97
  %v394 = vunpack.c.l.b16 %v98
  %v395 = vunpack.c.l.b16 %v99
  %v396 = vunpack.c.l.b16 %v100
  %v397 = vunpack.c.l.b16 %v101
  %v398 = vunpack.c.l.b16 %v102
  %v399 = vunpack.c.l.b16 %v103
  %v400 = vunpack.c.l.b16 %v104
  %v401 = vunpack.c.l.b16 %v105
  %v402 = vunpack.c.l.b16 %v106
  %v403 = vunpack.c.l.b16 %v107
  %v404 = vunpack.c.l.b16 %v108
  %v405 = vunpack.c.l.b16 %v109
  %v406 = vunpack.c.l.b16 %v110
  %v407 = vunpack.c.l.b16 %v111
  %v408 = vunpack.c.l.b16 %v112
  %v409 = vunpack.c.l.b16 %v113
  %v410 = vunpack.c.l.b16 %v114
  %v411 = vunpack.c.l.b16 %v115
  %v412 = vunpack.c.l.b16 %v116
  %v413 = vunpack.c.l.b16 %v117
  %v414 = vunpack.c.l.b16 %v118
  %v415 = vunpack.c.l.b16 %v119
  %v416 = vunpack.c.l.b16 %v120
  %v417 = vunpack.c.l.b16 %v121
  %v418 = vunpack.c.l.b16 %v122
  %v419 = vunpack.c.l.b16 %v123
  %v420 = vunpack.c.l.b16 %v124
  %v421 = vunpack.c.l.b16 %v125
  %v422 = vunpack.c.l.b16 %v126
  %v423 = vunpack.c.l.b16 %v127
  %v424 = vunpack.c.l.b16 %v128
  %v425 = vunpack.c.l.b16 %v129
  %v426 = vunpack.c.l.b16 %v130
  %v427 = vunpack.c.l.b16 %v131
  %v428 = vunpack.c.l.b16 %v132
  %v429 = vunpack.c.l.b16 %v133
  %v430 = vunpack.c.l.b16 %v134
  %v431 = vunpack.c.l.b16 %v135
  %v432 = vunpack.c.l.b16 %v136
  %v433 = vunpack.c.l.b16 %v137
  %v434 = vunpack.c.l.b16 %v138
  %v435 = vunpack.c.l.b16 %v139
  %v436 = vunpack.c.l.b16 %v140
  %v437 = vunpack.c.l.b16 %v141
  %v438 = vunpack.c.l.b16 %v142
  %v439 = vunpack.c.l.b16 %v143
  %v440 = vunpack.c.l.b16 %v144
  %v441 = vunpack.c.l.b16 %v145
  %v442 = vunpack.c.l.b16 %v146
  %v443 = vunpack.c.l.b16 %v147
  %v444 = vunpack.c.l.b16 %v148
  %v445 = vunpack.c.l.b16 %v149
  %v446 = vunpack.c.l.b16 %v150
  %v447 = vunpack.c.l.b16 %v151
  %v448 = vunpack.c.l.b16 %v152
  %v449 = vpack.c.b16 %v322, %v321
  %v450 = vpack.c.b16 %v324, %v323
  %v451 = vpack.c.b16 %v326, %v325
  %v452 = vpack.c.b16 %v328, %v327
  %v453 = vpack.c.b16 %v330, %v329
  %v454 = vpack.c.b16 %v332, %v331
  %v455 = vpack.c.b16 %v334, %v333
  %v456 = vpack.c.b16 %v336, %v335
  %v457 = vpack.c.b16 %v338, %v337
  %v458 = vpack.c.b16 %v340, %v339
  %v459 = vpack.c.b16 %v342, %v341
  %v460 = vpack.c.b16 %v344, %v343
  %v461 = vpack.c.b16 %v346, %v345
  %v462 = vpack.c.b16 %v348, %v347
  %v463 = vpack.c.b16 %v350, %v349
  %v464 = vpack.c.b16 %v352, %v351
  %v465 = vpack.c.b16 %v354, %v353
  %v466 = vpack.c.b16 %v356, %v355
  %v467 = vpack.c.b16 %v358, %v357
  %v468 = vpack.c.b16 %v360, %v359
  %v469 = vpack.c.b16 %v362, %v361
  %v470 = vpack.c.b16 %v364, %v363
  %v471 = vpack.c.b16 %v366, %v365
  %v472 = vpack.c.b16 %v368, %v367
  %v473 = vpack.c.b16 %v370, %v369
  %v474 = vpack.c.b16 %v372, %v371
  %v475 = vpack.c.b16 %v374, %v373
  %v476 = vpack.c.b16 %v376, %v375
  %v477 = vpack.c.b16 %v378, %v377
  %v478 = vpack.c.b16 %v380, %v379
  %v479 = vpack.c.b16 %v382, %v381
  %v480 = vpack.c.b16 %v384, %v383
  %v481 = vpack.c.b16 %v386, %v385
  %v482 = vpack.c.b16 %v388, %v387
  %v483 = vpack.c.b16 %v390, %v389
  %v484 = vpack.c.b16 %v392, %v391
  %v485 = vpack.c.b16 %v394, %v393
  %v486 = vpack.c.b16 %v396, %v395
  %v487 = vpack.c.b16 %v398, %v397
  %v488 = vpack.c.b16 %v400, %v399
  %v489 = vpack.c.b16 %v402, %v401
  %v490 = vpack.c.b16 %v404, %v403
  %v491 = vpack.c.b16 %v406, %v405
  %v492 = vpack.c.b16 %v408, %v407
  %v493 = vpack.c.b16 %v410, %v409
  %v494 = vpack.c.b16 %v412, %v411
  %v495 = vpack.c.b16 %v414, %v413
  %v496 = vpack.c.b16 %v416, %v415
  %v497 = vpack.c.b16 %v418, %v417
  %v498 = vpack.c.b16 %v420, %v419
  %v499 = vpack.c.b16 %v422, %v421
  %v500 = vpack.c.b16 %v424, %v423
  %v501 = vpack.c.b16 %v426, %v425
  %v502 = vpack.c.b16 %v428, %v427
  %v503 = vpack.c.b16 %v430, %v429
  %v504 = vpack.c.b16 %v432, %v431
  %v505 = vpack.c.b16 %v434, %v433
  %v506 = vpack.c.b16 %v436, %v435
  %v507 = vpack.c.b16 %v438, %v437
  %v508 = vpack.c.b16 %v440, %v439
  %v509 = vpack.c.b16 %v442, %v441
  %v510 = vpack.c.b16 %v444, %v443
  %v511 = vpack.c.b16 %v446, %v445
  %v512 = vpack.c.b16 %v448, %v447
  %577 = vmatprep.subr.bf16.mxu0 0
  %578 = vmatpush1.bf16.msra.mxu0 %v449
  %579 = vmatprep.subr.bf16.mxu0 0
  %580 = vmatpush1.bf16.msra.mxu0 %v450
  %581 = vmatprep.subr.bf16.mxu0 0
  %582 = vmatpush1.bf16.msra.mxu0 %v451
  %583 = vmatprep.subr.bf16.mxu0 0
  %584 = vmatpush1.bf16.msra.mxu0 %v452
  %585 = vmatprep.subr.bf16.mxu0 0
  %586 = vmatpush1.bf16.msra.mxu0 %v453
  %587 = vmatprep.subr.bf16.mxu0 0
  %588 = vmatpush1.bf16.msra.mxu0 %v454
  %589 = vmatprep.subr.bf16.mxu0 0
  %590 = vmatpush1.bf16.msra.mxu0 %v455
  %591 = vmatprep.subr.bf16.mxu0 0
  %592 = vmatpush1.bf16.msra.mxu0 %v456
  %593 = vmatprep.subr.bf16.mxu0 0
  %594 = vmatpush1.bf16.msra.mxu0 %v457
  %595 = vmatprep.subr.bf16.mxu0 0
  %596 = vmatpush1.bf16.msra.mxu0 %v458
  %597 = vmatprep.subr.bf16.mxu0 0
  %598 = vmatpush1.bf16.msra.mxu0 %v459
  %599 = vmatprep.subr.bf16.mxu0 0
  %600 = vmatpush1.bf16.msra.mxu0 %v460
  %601 = vmatprep.subr.bf16.mxu0 0
  %602 = vmatpush1.bf16.msra.mxu0 %v461
  %603 = vmatprep.subr.bf16.mxu0 0
  %604 = vmatpush1.bf16.msra.mxu0 %v462
  %605 = vmatprep.subr.bf16.mxu0 0
  %606 = vmatpush1.bf16.msra.mxu0 %v463
  %607 = vmatprep.subr.bf16.mxu0 0
  %608 = vmatpush1.bf16.msra.mxu0 %v464
  %609 = vmatprep.mubr.bf16.mxu0 %v178
  %610 = vmatmul.mubr.bf16.gmra.mrb[0].mxu0 %v177
  %v611 = vpop.f32.mrb[0].mxu0
  %v612 = vadd.f32 0.0, %v611
  %v613 = vpop.f32.mrb[0].mxu0
  %v614 = vpop.f32.mrb[0].mxu0
  %v615 = vadd.f32 0.0, %v614
  %v616 = vpop.f32.mrb[0].mxu0
  %617 = vdwg.mxu0
  %618 = vmatprep.subr.bf16.mxu0 0
  %619 = vmatpush1.bf16.msra.mxu0 %v465
  %620 = vmatprep.subr.bf16.mxu0 0
  %621 = vmatpush1.bf16.msra.mxu0 %v466
  %622 = vmatprep.subr.bf16.mxu0 0
  %623 = vmatpush1.bf16.msra.mxu0 %v467
  %624 = vmatprep.subr.bf16.mxu0 0
  %625 = vmatpush1.bf16.msra.mxu0 %v468
  %626 = vmatprep.subr.bf16.mxu0 0
  %627 = vmatpush1.bf16.msra.mxu0 %v469
  %628 = vmatprep.subr.bf16.mxu0 0
  %629 = vmatpush1.bf16.msra.mxu0 %v470
  %630 = vmatprep.subr.bf16.mxu0 0
  %631 = vmatpush1.bf16.msra.mxu0 %v471
  %632 = vmatprep.subr.bf16.mxu0 0
  %633 = vmatpush1.bf16.msra.mxu0 %v472
  %634 = vmatprep.subr.bf16.mxu0 0
  %635 = vmatpush1.bf16.msra.mxu0 %v473
  %636 = vmatprep.subr.bf16.mxu0 0
  %637 = vmatpush1.bf16.msra.mxu0 %v474
  %638 = vmatprep.subr.bf16.mxu0 0
  %639 = vmatpush1.bf16.msra.mxu0 %v475
  %640 = vmatprep.subr.bf16.mxu0 0
  %641 = vmatpush1.bf16.msra.mxu0 %v476
  %642 = vmatprep.subr.bf16.mxu0 0
  %643 = vmatpush1.bf16.msra.mxu0 %v477
  %644 = vmatprep.subr.bf16.mxu0 0
  %645 = vmatpush1.bf16.msra.mxu0 %v478
  %646 = vmatprep.subr.bf16.mxu0 0
  %647 = vmatpush1.bf16.msra.mxu0 %v479
  %648 = vmatprep.subr.bf16.mxu0 0
  %649 = vmatpush1.bf16.msra.mxu0 %v480
  %650 = vmatprep.mubr.bf16.mxu0 %v180
  %651 = vmatmul.mubr.bf16.gmra.mrb[0].mxu0 %v179
  %v652 = vpop.f32.mrb[0].mxu0
  %v653 = vadd.f32 %v612, %v652
  %v654 = vpop.f32.mrb[0].mxu0
  %v655 = vpop.f32.mrb[0].mxu0
  %v656 = vadd.f32 %v615, %v655
  %v657 = vpop.f32.mrb[0].mxu0
  %658 = vdwg.mxu0
  %659 = vmatprep.subr.bf16.mxu0 0
  %660 = vmatpush1.bf16.msra.mxu0 %v481
  %661 = vmatprep.subr.bf16.mxu0 0
  %662 = vmatpush1.bf16.msra.mxu0 %v482
  %663 = vmatprep.subr.bf16.mxu0 0
  %664 = vmatpush1.bf16.msra.mxu0 %v483
  %665 = vmatprep.subr.bf16.mxu0 0
  %666 = vmatpush1.bf16.msra.mxu0 %v484
  %667 = vmatprep.subr.bf16.mxu0 0
  %668 = vmatpush1.bf16.msra.mxu0 %v485
  %669 = vmatprep.subr.bf16.mxu0 0
  %670 = vmatpush1.bf16.msra.mxu0 %v486
  %671 = vmatprep.subr.bf16.mxu0 0
  %672 = vmatpush1.bf16.msra.mxu0 %v487
  %673 = vmatprep.subr.bf16.mxu0 0
  %674 = vmatpush1.bf16.msra.mxu0 %v488
  %675 = vmatprep.subr.bf16.mxu0 0
  %676 = vmatpush1.bf16.msra.mxu0 %v489
  %677 = vmatprep.subr.bf16.mxu0 0
  %678 = vmatpush1.bf16.msra.mxu0 %v490
  %679 = vmatprep.subr.bf16.mxu0 0
  %680 = vmatpush1.bf16.msra.mxu0 %v491
  %681 = vmatprep.subr.bf16.mxu0 0
  %682 = vmatpush1.bf16.msra.mxu0 %v492
  %683 = vmatprep.subr.bf16.mxu0 0
  %684 = vmatpush1.bf16.msra.mxu0 %v493
  %685 = vmatprep.subr.bf16.mxu0 0
  %686 = vmatpush1.bf16.msra.mxu0 %v494
  %687 = vmatprep.subr.bf16.mxu0 0
  %688 = vmatpush1.bf16.msra.mxu0 %v495
  %689 = vmatprep.subr.bf16.mxu0 0
  %690 = vmatpush1.bf16.msra.mxu0 %v496
  %691 = vmatprep.mubr.bf16.mxu0 %v182
  %692 = vmatmul.mubr.bf16.gmra.mrb[0].mxu0 %v181
  %v693 = vpop.f32.mrb[0].mxu0
  %v694 = vadd.f32 %v653, %v693
  %v695 = vpop.f32.mrb[0].mxu0
  %v696 = vpop.f32.mrb[0].mxu0
  %v697 = vadd.f32 %v656, %v696
  %v698 = vpop.f32.mrb[0].mxu0
  %699 = vdwg.mxu0
  %700 = vmatprep.subr.bf16.mxu0 0
  %701 = vmatpush1.bf16.msra.mxu0 %v497
  %702 = vmatprep.subr.bf16.mxu0 0
  %703 = vmatpush1.bf16.msra.mxu0 %v498
  %704 = vmatprep.subr.bf16.mxu0 0
  %705 = vmatpush1.bf16.msra.mxu0 %v499
  %706 = vmatprep.subr.bf16.mxu0 0
  %707 = vmatpush1.bf16.msra.mxu0 %v500
  %708 = vmatprep.subr.bf16.mxu0 0
  %709 = vmatpush1.bf16.msra.mxu0 %v501
  %710 = vmatprep.subr.bf16.mxu0 0
  %711 = vmatpush1.bf16.msra.mxu0 %v502
  %712 = vmatprep.subr.bf16.mxu0 0
  %713 = vmatpush1.bf16.msra.mxu0 %v503
  %714 = vmatprep.subr.bf16.mxu0 0
  %715 = vmatpush1.bf16.msra.mxu0 %v504
  %716 = vmatprep.subr.bf16.mxu0 0
  %717 = vmatpush1.bf16.msra.mxu0 %v505
  %718 = vmatprep.subr.bf16.mxu0 0
  %719 = vmatpush1.bf16.msra.mxu0 %v506
  %720 = vmatprep.subr.bf16.mxu0 0
  %721 = vmatpush1.bf16.msra.mxu0 %v507
  %722 = vmatprep.subr.bf16.mxu0 0
  %723 = vmatpush1.bf16.msra.mxu0 %v508
  %724 = vmatprep.subr.bf16.mxu0 0
  %725 = vmatpush1.bf16.msra.mxu0 %v509
  %726 = vmatprep.subr.bf16.mxu0 0
  %727 = vmatpush1.bf16.msra.mxu0 %v510
  %728 = vmatprep.subr.bf16.mxu0 0
  %729 = vmatpush1.bf16.msra.mxu0 %v511
  %730 = vmatprep.subr.bf16.mxu0 0
  %731 = vmatpush1.bf16.msra.mxu0 %v512
  %732 = vmatprep.mubr.bf16.mxu0 %v184
  %733 = vmatmul.mubr.bf16.gmra.mrb[0].mxu0 %v183
  %v734 = vpop.f32.mrb[0].mxu0
  %v735 = vadd.f32 %v694, %v734
  %v736 = vpop.f32.mrb[0].mxu0
  %v737 = vpop.f32.mrb[0].mxu0
  %v738 = vadd.f32 %v697, %v737
  %v739 = vpop.f32.mrb[0].mxu0
  %740 = vdwg.mxu0
  %v741 = vld [vmem:[#allocation2] sm:$0x1]
  %v743 = vlaneseq
  %v744 = vshrl.u32 %v743, 7
  %v745 = vsub.s32 0, %v744
  %v746 = vrot.slane %v741, %v745
  %v748 = vadd.f32 %v735, %v746
  %v749 = vadd.f32 %v738, %v746
  %vm750 = vcmask 7168
  %751 = vst.msk [vmem:[%s3] sm:$0xff] %vm750, %v748
  %752 = vst.msk [vmem:[%s3 + $0x8] sm:$0xff] %vm750, %v749
  // Predicated region
  $region14: #{discriminator_forward.15} parent=0 // pred_check
    _
  $region15: #{discriminator_forward.15} parent=0 // pred_check_branch
    %754 = sbr.rel (0) target = $region17
  $region16: #{discriminator_forward.15} parent=0 // pred_region
    _
  $region17: #{discriminator_forward.15} parent=0 // pred_fallthru
    _
  // Predicated region
  $region18: #{discriminator_forward.15} parent=0 // pred_check
    _
  $region19: #{discriminator_forward.15} parent=0 // pred_check_branch
    %756 = sbr.rel (0) target = $region21
  $region20: #{discriminator_forward.15} parent=0 // pred_region
    _
  $region21: #{discriminator_forward.15} parent=0 // pred_fallthru
    _

</llo_original>
